<compile_context>
chip_gen: v7x
topology: tpu7x:2x2x1
jax: 0.10.0
libtpu: 0.0.40
codegen_flags: <defaults>
</compile_context>

<pallas_src>
import functools

import jax
import jax.numpy as jnp
from jax.experimental import pallas as pl
from jax.experimental.pallas import tpu as pltpu

HIDDEN = 256     # BEST_HIDDEN
DEPTH = 5        # BEST_DEPTH
IN_FEATS = 3
OUT_FEATS = 60
OUT_PAD = 128    # lane-dense padded output width (sliced back to 60)
BN_EPS = 1e-5


def _kinetic_kernel(x_ref, w_in_ref, b_in_ref, wa_ref, wb_ref, ba_ref, bb_ref,
                    w_out_ref, b_out_ref, o_ref, *, depth):
    # ---- input layer: Linear(3, H) [+BN folded] -> ReLU, done as VPU FMAs ----
    x = x_ref[...].astype(jnp.float32)               # (TB, 3)
    w_in = w_in_ref[...]                             # (3, H), BN scale pre-folded
    h = (x[:, 0:1] * w_in[0:1, :]
         + x[:, 1:2] * w_in[1:2, :]
         + x[:, 2:3] * w_in[2:3, :]
         + b_in_ref[...])                            # (TB, H)
    h = jnp.maximum(h, 0.0)

    # ---- residual blocks (static unroll, depth=5; see review note re: fori_loop) ----
    for i in range(depth):
        y = jnp.dot(h.astype(jnp.bfloat16), wa_ref[i],       # bf16 MXU, f32 acc
                    preferred_element_type=jnp.float32)
        y = jnp.maximum(y + ba_ref[i], 0.0)                   # ReLU; Dropout(eval)=id
        y = jnp.dot(y.astype(jnp.bfloat16), wb_ref[i],
                    preferred_element_type=jnp.float32)
        h = jnp.maximum(y + bb_ref[i] + h, 0.0)               # skip connection + ReLU

    # ---- output layer: Linear(H, 60) (padded to 128 lanes) ----
    out = jnp.dot(h.astype(jnp.bfloat16), w_out_ref[...],
                  preferred_element_type=jnp.float32)
    o_ref[...] = (out + b_out_ref[...]).astype(o_ref.dtype)


def _round8(n):
    return max(8, ((int(n) + 7) // 8) * 8)


def _pick_tb(batch):
    """Adaptive batch-tile size: big tiles to amortize the ~0.35us/step pipeline
    overhead and deepen MXU M, capped at 512 on v5e, and split so that at least
    two balanced tiles exist when the batch allows (v7x megacore occupancy)."""
    try:
        kind = jax.devices()[0].device_kind.lower()
    except Exception:  # pragma: no cover - no accelerator visible
        kind = ""
    cap = 512 if "v5" in kind else 1024
    if batch <= cap:
        return min(_round8(batch), cap)          # single small tile, no huge padding
    if batch <= 2 * cap:
        return min(_round8(pl.cdiv(batch, 2)), cap)  # two balanced tiles
    return cap


def kinetic_net_pallas(x, params, *, depth=DEPTH, tb=None):
    B = x.shape[0]
    H = params["w_in"].shape[1]
    out_pad = params["w_out"].shape[1]

    if tb is None:
        tb = _pick_tb(B)
    tb = _round8(tb)

    n_tiles = pl.cdiv(B, tb)
    b_pad = n_tiles * tb
    x_p = jnp.pad(x, ((0, b_pad - B), (0, 0))) if b_pad != B else x

    # Advisory cost hint for XLA's scheduler around the custom call.
    flops = 2 * b_pad * (IN_FEATS * H + 2 * depth * H * H + H * out_pad)
    bytes_accessed = (
        b_pad * IN_FEATS * 4 + b_pad * out_pad * 4          # activations in/out
        + IN_FEATS * H * 4 + H * 4                          # input layer (f32)
        + 2 * depth * H * H * 2 + 2 * depth * H * 4         # block weights (bf16) + biases
        + H * out_pad * 2 + out_pad * 4)                    # output layer
    cost = pl.CostEstimate(flops=flops, transcendentals=0,
                           bytes_accessed=bytes_accessed)

    vmem_limit = 64 * 1024 * 1024 if tb > 512 else None
    cparams = pltpu.CompilerParams(dimension_semantics=("parallel",),
                                   vmem_limit_bytes=vmem_limit)

    def call(single_buffer_weights):
        # Weights/biases: constant index maps -> VMEM-resident across grid steps.
        spec_kw = ({"pipeline_mode": pl.Buffered(1)}
                   if single_buffer_weights else {})

        def resident(shape):
            n = len(shape)
            return pl.BlockSpec(shape, lambda *_, _n=n: (0,) * _n, **spec_kw)

        return pl.pallas_call(
            functools.partial(_kinetic_kernel, depth=depth),
            out_shape=jax.ShapeDtypeStruct((b_pad, out_pad), jnp.float32),
            grid=(n_tiles,),
            in_specs=[
                pl.BlockSpec((tb, IN_FEATS), lambda i: (i, 0)),   # x tile (moves)
                resident((IN_FEATS, H)),                          # w_in (f32, BN folded)
                resident((1, H)),                                 # b_in
                resident((depth, H, H)),                          # wa (bf16)
                resident((depth, H, H)),                          # wb (bf16)
                resident((depth, 1, H)),                          # ba
                resident((depth, 1, H)),                          # bb
                resident((H, out_pad)),                           # w_out (bf16, padded)
                resident((1, out_pad)),                           # b_out (padded)
            ],
            out_specs=pl.BlockSpec((tb, out_pad), lambda i: (i, 0)),
            compiler_params=cparams,
            cost_estimate=cost,
        )(x_p, params["w_in"], params["b_in"], params["wa"], params["wb"],
          params["ba"], params["bb"], params["w_out"], params["b_out"])

    try:
        out = call(True)
    except Exception:
        # Fallback: pl.Buffered(1) not accepted on this jax version; default
        # double-buffering only costs ~1.35 MiB extra VMEM (not a constraint).
        out = call(False)

    return out[:B, :OUT_FEATS]


def _fold_linear_bn(w, b, gamma, beta, mean, var):
    """Fold eval-mode BatchNorm1d into the preceding Linear: returns (w_eff, b_eff)."""
    s = gamma / jnp.sqrt(var + BN_EPS)
    w_eff = w * s[None, :]
    b_eff = (b - mean) * s + beta
    return w_eff, b_eff[None, :]


def init_params(key, h=HIDDEN, depth=DEPTH):
    ks = jax.random.split(key, 32)
    ki = iter(range(32))

    def lin(k, fan_in, fan_out):
        bound = 1.0 / jnp.sqrt(fan_in)
        return jax.random.uniform(k, (fan_in, fan_out), jnp.float32, -bound, bound)

    def vec(k, n, lo=-0.5, hi=0.5):
        return jax.random.uniform(k, (n,), jnp.float32, lo, hi)

    # input layer: Linear(3, h) + BN(h), scale folded into weight columns
    w_in = lin(ks[next(ki)], IN_FEATS, h)
    b_in = vec(ks[next(ki)], h)
    g_in = 1.0 + 0.1 * vec(ks[next(ki)], h)
    be_in = 0.1 * vec(ks[next(ki)], h)
    m_in = 0.1 * vec(ks[next(ki)], h)
    v_in = 1.0 + 0.1 * jnp.abs(vec(ks[next(ki)], h))
    w_in_eff, b_in_eff = _fold_linear_bn(w_in, b_in, g_in, be_in, m_in, v_in)

    # residual blocks
    k_blocks = jax.random.split(ks[next(ki)], depth * 12).reshape(depth, 12, 2)
    wa, wb, ba, bb = [], [], [], []
    for d in range(depth):
        kb = k_blocks[d]
        w1 = lin(kb[0], h, h)
        b1 = vec(kb[1], h) / jnp.sqrt(h)
        g1 = 1.0 + 0.1 * vec(kb[2], h)
        be1 = 0.1 * vec(kb[3], h)
        m1 = 0.1 * vec(kb[4], h)
        v1 = 1.0 + 0.1 * jnp.abs(vec(kb[5], h))
        w2 = lin(kb[6], h, h)
        b2 = vec(kb[7], h) / jnp.sqrt(h)
        g2 = 1.0 + 0.1 * vec(kb[8], h)
        be2 = 0.1 * vec(kb[9], h)
        m2 = 0.1 * vec(kb[10], h)
        v2 = 1.0 + 0.1 * jnp.abs(vec(kb[11], h))
        w1e, b1e = _fold_linear_bn(w1, b1, g1, be1, m1, v1)
        w2e, b2e = _fold_linear_bn(w2, b2, g2, be2, m2, v2)
        wa.append(w1e.astype(jnp.bfloat16))
        wb.append(w2e.astype(jnp.bfloat16))
        ba.append(b1e)
        bb.append(b2e)

    # output layer: Linear(h, 60), padded to OUT_PAD lanes for dense stores
    w_out = lin(ks[next(ki)], h, OUT_FEATS)
    b_out = vec(ks[next(ki)], OUT_FEATS)
    w_out_pad = jnp.zeros((h, OUT_PAD), jnp.float32).at[:, :OUT_FEATS].set(w_out)
    b_out_pad = jnp.zeros((1, OUT_PAD), jnp.float32).at[:, :OUT_FEATS].set(b_out)

    return {
        "w_in": w_in_eff,                         # (3, h)  f32
        "b_in": b_in_eff,                         # (1, h)  f32
        "wa": jnp.stack(wa),                      # (depth, h, h) bf16
        "wb": jnp.stack(wb),                      # (depth, h, h) bf16
        "ba": jnp.stack(ba),                      # (depth, 1, h) f32
        "bb": jnp.stack(bb),                      # (depth, 1, h) f32
        "w_out": w_out_pad.astype(jnp.bfloat16),  # (h, OUT_PAD) bf16
        "b_out": b_out_pad,                       # (1, OUT_PAD) f32
    }


def kinetic_net_ref(x, params, *, depth=DEPTH):
    """Pure-JAX reference with the same (bf16-weight, f32-accum) math as the kernel."""
    h = jnp.dot(x, params["w_in"]) + params["b_in"]
    h = jnp.maximum(h, 0.0)
    for i in range(depth):
        y = jnp.dot(h.astype(jnp.bfloat16), params["wa"][i],
                    preferred_element_type=jnp.float32)
        y = jnp.maximum(y + params["ba"][i], 0.0)
        y = jnp.dot(y.astype(jnp.bfloat16), params["wb"][i],
                    preferred_element_type=jnp.float32)
        h = jnp.maximum(y + params["bb"][i] + h, 0.0)
    out = jnp.dot(h.astype(jnp.bfloat16), params["w_out"],
                  preferred_element_type=jnp.float32) + params["b_out"]
    return out[:, :OUT_FEATS]


if __name__ == "__main__":
    key = jax.random.PRNGKey(0)
    k_x, k_x2, k_p = jax.random.split(key, 3)
    params = init_params(k_p)

    # Small-shape test (single tile, tb auto-sized to the batch).
    B = 8
    x = jax.random.normal(k_x, (B, IN_FEATS), jnp.float32)
    out = jax.block_until_ready(kinetic_net_pallas(x, params))
    ref = kinetic_net_ref(x, params)
    assert out.shape == (B, OUT_FEATS), out.shape
    assert jnp.allclose(out, ref, atol=1e-2, rtol=1e-2), \
        float(jnp.max(jnp.abs(out - ref)))

    # Multi-tile test (3 grid steps, exercises the pipelined batch grid + padding).
    B2 = 40
    x2 = jax.random.normal(k_x2, (B2, IN_FEATS), jnp.float32)
    out2 = jax.block_until_ready(kinetic_net_pallas(x2, params, tb=16))
    ref2 = kinetic_net_ref(x2, params)
    assert out2.shape == (B2, OUT_FEATS), out2.shape
    assert jnp.allclose(out2, ref2, atol=1e-2, rtol=1e-2), \
        float(jnp.max(jnp.abs(out2 - ref2)))

    print("KERNEL_OK")
</pallas_src>

<mosaic_0001>
module attributes {stable_mosaic.version = 11 : i64} {
  func.func @_kinetic_kernel(%arg0: i32, %arg1: memref<8x3xf32, #tpu.memory_space<vmem>>, %arg2: memref<3x256xf32, #tpu.memory_space<vmem>>, %arg3: memref<1x256xf32, #tpu.memory_space<vmem>>, %arg4: memref<5x256x256xbf16, #tpu.memory_space<vmem>>, %arg5: memref<5x256x256xbf16, #tpu.memory_space<vmem>>, %arg6: memref<5x1x256xf32, #tpu.memory_space<vmem>>, %arg7: memref<5x1x256xf32, #tpu.memory_space<vmem>>, %arg8: memref<256x128xbf16, #tpu.memory_space<vmem>>, %arg9: memref<1x128xf32, #tpu.memory_space<vmem>>, %arg10: memref<8x128xf32, #tpu.memory_space<vmem>>) attributes {dimension_semantics = [#tpu.dimension_semantics<parallel>], iteration_bounds = array<i64: 1>, scalar_prefetch = 0 : i64, scratch_operands = 0 : i64, tpu.core_type = #tpu.core_type<tc>, window_params = [{transform_indices = @transform_0, window_bounds = array<i64: 8, 3>}, {pipeline_mode = #tpu.pipeline_mode<synchronous>, transform_indices = @transform_1, window_bounds = array<i64: 3, 256>}, {pipeline_mode = #tpu.pipeline_mode<synchronous>, transform_indices = @transform_2, window_bounds = array<i64: 1, 256>}, {pipeline_mode = #tpu.pipeline_mode<synchronous>, transform_indices = @transform_3, window_bounds = array<i64: 5, 256, 256>}, {pipeline_mode = #tpu.pipeline_mode<synchronous>, transform_indices = @transform_4, window_bounds = array<i64: 5, 256, 256>}, {pipeline_mode = #tpu.pipeline_mode<synchronous>, transform_indices = @transform_5, window_bounds = array<i64: 5, 1, 256>}, {pipeline_mode = #tpu.pipeline_mode<synchronous>, transform_indices = @transform_6, window_bounds = array<i64: 5, 1, 256>}, {pipeline_mode = #tpu.pipeline_mode<synchronous>, transform_indices = @transform_7, window_bounds = array<i64: 256, 128>}, {pipeline_mode = #tpu.pipeline_mode<synchronous>, transform_indices = @transform_8, window_bounds = array<i64: 1, 128>}, {transform_indices = @transform_9, window_bounds = array<i64: 8, 128>}]} {
    %c0 = arith.constant 0 : index
    %c0_0 = arith.constant 0 : index
    %0 = vector.load %arg1[%c0, %c0_0] : memref<8x3xf32, #tpu.memory_space<vmem>>, vector<8x3xf32>
    %c0_1 = arith.constant 0 : index
    %c0_2 = arith.constant 0 : index
    %1 = vector.load %arg2[%c0_1, %c0_2] : memref<3x256xf32, #tpu.memory_space<vmem>>, vector<3x256xf32>
    %2 = vector.extract_strided_slice %0 {offsets = [0, 0], sizes = [8, 1], strides = [1, 1]} : vector<8x3xf32> to vector<8x1xf32>
    %3 = vector.extract_strided_slice %1 {offsets = [0, 0], sizes = [1, 256], strides = [1, 1]} : vector<3x256xf32> to vector<1x256xf32>
    %4 = vector.broadcast %2 : vector<8x1xf32> to vector<8x256xf32>
    %5 = vector.broadcast %3 : vector<1x256xf32> to vector<8x256xf32>
    %6 = arith.mulf %4, %5 : vector<8x256xf32>
    %7 = vector.extract_strided_slice %0 {offsets = [0, 1], sizes = [8, 1], strides = [1, 1]} : vector<8x3xf32> to vector<8x1xf32>
    %8 = vector.extract_strided_slice %1 {offsets = [1, 0], sizes = [1, 256], strides = [1, 1]} : vector<3x256xf32> to vector<1x256xf32>
    %9 = vector.broadcast %7 : vector<8x1xf32> to vector<8x256xf32>
    %10 = vector.broadcast %8 : vector<1x256xf32> to vector<8x256xf32>
    %11 = arith.mulf %9, %10 : vector<8x256xf32>
    %12 = arith.addf %6, %11 : vector<8x256xf32>
    %13 = vector.extract_strided_slice %0 {offsets = [0, 2], sizes = [8, 1], strides = [1, 1]} : vector<8x3xf32> to vector<8x1xf32>
    %14 = vector.extract_strided_slice %1 {offsets = [2, 0], sizes = [1, 256], strides = [1, 1]} : vector<3x256xf32> to vector<1x256xf32>
    %15 = vector.broadcast %13 : vector<8x1xf32> to vector<8x256xf32>
    %16 = vector.broadcast %14 : vector<1x256xf32> to vector<8x256xf32>
    %17 = arith.mulf %15, %16 : vector<8x256xf32>
    %18 = arith.addf %12, %17 : vector<8x256xf32>
    %c0_3 = arith.constant 0 : index
    %c0_4 = arith.constant 0 : index
    %19 = vector.load %arg3[%c0_3, %c0_4] : memref<1x256xf32, #tpu.memory_space<vmem>>, vector<1x256xf32>
    %20 = vector.broadcast %19 : vector<1x256xf32> to vector<8x256xf32>
    %21 = arith.addf %18, %20 : vector<8x256xf32>
    %cst = arith.constant 0.000000e+00 : f32
    %22 = vector.broadcast %cst : f32 to vector<8x256xf32>
    %23 = arith.maximumf %21, %22 : vector<8x256xf32>
    %24 = arith.truncf %23 : vector<8x256xf32> to vector<8x256xbf16>
    %c0_5 = arith.constant 0 : index
    %c0_6 = arith.constant 0 : index
    %c0_7 = arith.constant 0 : index
    %25 = vector.load %arg4[%c0_5, %c0_6, %c0_7] : memref<5x256x256xbf16, #tpu.memory_space<vmem>>, vector<1x256x256xbf16>
    %26 = vector.shape_cast %25 : vector<1x256x256xbf16> to vector<256x256xbf16>
    %cst_8 = arith.constant dense<0.000000e+00> : vector<8x256xf32>
    %27 = tpu.matmul %24, %26, %cst_8 {dimension_numbers = #tpu.dot_dimension_numbers<[1], [0], [0], [1], [0, 0, 1, 1], [], []>} : vector<8x256xbf16>, vector<256x256xbf16>, vector<8x256xf32> -> vector<8x256xf32>
    %c0_9 = arith.constant 0 : index
    %c0_10 = arith.constant 0 : index
    %c0_11 = arith.constant 0 : index
    %28 = vector.load %arg6[%c0_9, %c0_10, %c0_11] : memref<5x1x256xf32, #tpu.memory_space<vmem>>, vector<1x1x256xf32>
    %29 = vector.shape_cast %28 : vector<1x1x256xf32> to vector<1x256xf32>
    %30 = vector.broadcast %29 : vector<1x256xf32> to vector<8x256xf32>
    %31 = arith.addf %27, %30 : vector<8x256xf32>
    %cst_12 = arith.constant 0.000000e+00 : f32
    %32 = vector.broadcast %cst_12 : f32 to vector<8x256xf32>
    %33 = arith.maximumf %31, %32 : vector<8x256xf32>
    %34 = arith.truncf %33 : vector<8x256xf32> to vector<8x256xbf16>
    %c0_13 = arith.constant 0 : index
    %c0_14 = arith.constant 0 : index
    %c0_15 = arith.constant 0 : index
    %35 = vector.load %arg5[%c0_13, %c0_14, %c0_15] : memref<5x256x256xbf16, #tpu.memory_space<vmem>>, vector<1x256x256xbf16>
    %36 = vector.shape_cast %35 : vector<1x256x256xbf16> to vector<256x256xbf16>
    %cst_16 = arith.constant dense<0.000000e+00> : vector<8x256xf32>
    %37 = tpu.matmul %34, %36, %cst_16 {dimension_numbers = #tpu.dot_dimension_numbers<[1], [0], [0], [1], [0, 0, 1, 1], [], []>} : vector<8x256xbf16>, vector<256x256xbf16>, vector<8x256xf32> -> vector<8x256xf32>
    %c0_17 = arith.constant 0 : index
    %c0_18 = arith.constant 0 : index
    %c0_19 = arith.constant 0 : index
    %38 = vector.load %arg7[%c0_17, %c0_18, %c0_19] : memref<5x1x256xf32, #tpu.memory_space<vmem>>, vector<1x1x256xf32>
    %39 = vector.shape_cast %38 : vector<1x1x256xf32> to vector<1x256xf32>
    %40 = vector.broadcast %39 : vector<1x256xf32> to vector<8x256xf32>
    %41 = arith.addf %37, %40 : vector<8x256xf32>
    %42 = arith.addf %41, %23 : vector<8x256xf32>
    %cst_20 = arith.constant 0.000000e+00 : f32
    %43 = vector.broadcast %cst_20 : f32 to vector<8x256xf32>
    %44 = arith.maximumf %42, %43 : vector<8x256xf32>
    %45 = arith.truncf %44 : vector<8x256xf32> to vector<8x256xbf16>
    %c1 = arith.constant 1 : index
    %c0_21 = arith.constant 0 : index
    %c0_22 = arith.constant 0 : index
    %46 = vector.load %arg4[%c1, %c0_21, %c0_22] : memref<5x256x256xbf16, #tpu.memory_space<vmem>>, vector<1x256x256xbf16>
    %47 = vector.shape_cast %46 : vector<1x256x256xbf16> to vector<256x256xbf16>
    %cst_23 = arith.constant dense<0.000000e+00> : vector<8x256xf32>
    %48 = tpu.matmul %45, %47, %cst_23 {dimension_numbers = #tpu.dot_dimension_numbers<[1], [0], [0], [1], [0, 0, 1, 1], [], []>} : vector<8x256xbf16>, vector<256x256xbf16>, vector<8x256xf32> -> vector<8x256xf32>
    %c1_24 = arith.constant 1 : index
    %c0_25 = arith.constant 0 : index
    %c0_26 = arith.constant 0 : index
    %49 = vector.load %arg6[%c1_24, %c0_25, %c0_26] : memref<5x1x256xf32, #tpu.memory_space<vmem>>, vector<1x1x256xf32>
    %50 = vector.shape_cast %49 : vector<1x1x256xf32> to vector<1x256xf32>
    %51 = vector.broadcast %50 : vector<1x256xf32> to vector<8x256xf32>
    %52 = arith.addf %48, %51 : vector<8x256xf32>
    %cst_27 = arith.constant 0.000000e+00 : f32
    %53 = vector.broadcast %cst_27 : f32 to vector<8x256xf32>
    %54 = arith.maximumf %52, %53 : vector<8x256xf32>
    %55 = arith.truncf %54 : vector<8x256xf32> to vector<8x256xbf16>
    %c1_28 = arith.constant 1 : index
    %c0_29 = arith.constant 0 : index
    %c0_30 = arith.constant 0 : index
    %56 = vector.load %arg5[%c1_28, %c0_29, %c0_30] : memref<5x256x256xbf16, #tpu.memory_space<vmem>>, vector<1x256x256xbf16>
    %57 = vector.shape_cast %56 : vector<1x256x256xbf16> to vector<256x256xbf16>
    %cst_31 = arith.constant dense<0.000000e+00> : vector<8x256xf32>
    %58 = tpu.matmul %55, %57, %cst_31 {dimension_numbers = #tpu.dot_dimension_numbers<[1], [0], [0], [1], [0, 0, 1, 1], [], []>} : vector<8x256xbf16>, vector<256x256xbf16>, vector<8x256xf32> -> vector<8x256xf32>
    %c1_32 = arith.constant 1 : index
    %c0_33 = arith.constant 0 : index
    %c0_34 = arith.constant 0 : index
    %59 = vector.load %arg7[%c1_32, %c0_33, %c0_34] : memref<5x1x256xf32, #tpu.memory_space<vmem>>, vector<1x1x256xf32>
    %60 = vector.shape_cast %59 : vector<1x1x256xf32> to vector<1x256xf32>
    %61 = vector.broadcast %60 : vector<1x256xf32> to vector<8x256xf32>
    %62 = arith.addf %58, %61 : vector<8x256xf32>
    %63 = arith.addf %62, %44 : vector<8x256xf32>
    %cst_35 = arith.constant 0.000000e+00 : f32
    %64 = vector.broadcast %cst_35 : f32 to vector<8x256xf32>
    %65 = arith.maximumf %63, %64 : vector<8x256xf32>
    %66 = arith.truncf %65 : vector<8x256xf32> to vector<8x256xbf16>
    %c2 = arith.constant 2 : index
    %c0_36 = arith.constant 0 : index
    %c0_37 = arith.constant 0 : index
    %67 = vector.load %arg4[%c2, %c0_36, %c0_37] : memref<5x256x256xbf16, #tpu.memory_space<vmem>>, vector<1x256x256xbf16>
    %68 = vector.shape_cast %67 : vector<1x256x256xbf16> to vector<256x256xbf16>
    %cst_38 = arith.constant dense<0.000000e+00> : vector<8x256xf32>
    %69 = tpu.matmul %66, %68, %cst_38 {dimension_numbers = #tpu.dot_dimension_numbers<[1], [0], [0], [1], [0, 0, 1, 1], [], []>} : vector<8x256xbf16>, vector<256x256xbf16>, vector<8x256xf32> -> vector<8x256xf32>
    %c2_39 = arith.constant 2 : index
    %c0_40 = arith.constant 0 : index
    %c0_41 = arith.constant 0 : index
    %70 = vector.load %arg6[%c2_39, %c0_40, %c0_41] : memref<5x1x256xf32, #tpu.memory_space<vmem>>, vector<1x1x256xf32>
    %71 = vector.shape_cast %70 : vector<1x1x256xf32> to vector<1x256xf32>
    %72 = vector.broadcast %71 : vector<1x256xf32> to vector<8x256xf32>
    %73 = arith.addf %69, %72 : vector<8x256xf32>
    %cst_42 = arith.constant 0.000000e+00 : f32
    %74 = vector.broadcast %cst_42 : f32 to vector<8x256xf32>
    %75 = arith.maximumf %73, %74 : vector<8x256xf32>
    %76 = arith.truncf %75 : vector<8x256xf32> to vector<8x256xbf16>
    %c2_43 = arith.constant 2 : index
    %c0_44 = arith.constant 0 : index
    %c0_45 = arith.constant 0 : index
    %77 = vector.load %arg5[%c2_43, %c0_44, %c0_45] : memref<5x256x256xbf16, #tpu.memory_space<vmem>>, vector<1x256x256xbf16>
    %78 = vector.shape_cast %77 : vector<1x256x256xbf16> to vector<256x256xbf16>
    %cst_46 = arith.constant dense<0.000000e+00> : vector<8x256xf32>
    %79 = tpu.matmul %76, %78, %cst_46 {dimension_numbers = #tpu.dot_dimension_numbers<[1], [0], [0], [1], [0, 0, 1, 1], [], []>} : vector<8x256xbf16>, vector<256x256xbf16>, vector<8x256xf32> -> vector<8x256xf32>
    %c2_47 = arith.constant 2 : index
    %c0_48 = arith.constant 0 : index
    %c0_49 = arith.constant 0 : index
    %80 = vector.load %arg7[%c2_47, %c0_48, %c0_49] : memref<5x1x256xf32, #tpu.memory_space<vmem>>, vector<1x1x256xf32>
    %81 = vector.shape_cast %80 : vector<1x1x256xf32> to vector<1x256xf32>
    %82 = vector.broadcast %81 : vector<1x256xf32> to vector<8x256xf32>
    %83 = arith.addf %79, %82 : vector<8x256xf32>
    %84 = arith.addf %83, %65 : vector<8x256xf32>
    %cst_50 = arith.constant 0.000000e+00 : f32
    %85 = vector.broadcast %cst_50 : f32 to vector<8x256xf32>
    %86 = arith.maximumf %84, %85 : vector<8x256xf32>
    %87 = arith.truncf %86 : vector<8x256xf32> to vector<8x256xbf16>
    %c3 = arith.constant 3 : index
    %c0_51 = arith.constant 0 : index
    %c0_52 = arith.constant 0 : index
    %88 = vector.load %arg4[%c3, %c0_51, %c0_52] : memref<5x256x256xbf16, #tpu.memory_space<vmem>>, vector<1x256x256xbf16>
    %89 = vector.shape_cast %88 : vector<1x256x256xbf16> to vector<256x256xbf16>
    %cst_53 = arith.constant dense<0.000000e+00> : vector<8x256xf32>
    %90 = tpu.matmul %87, %89, %cst_53 {dimension_numbers = #tpu.dot_dimension_numbers<[1], [0], [0], [1], [0, 0, 1, 1], [], []>} : vector<8x256xbf16>, vector<256x256xbf16>, vector<8x256xf32> -> vector<8x256xf32>
    %c3_54 = arith.constant 3 : index
    %c0_55 = arith.constant 0 : index
    %c0_56 = arith.constant 0 : index
    %91 = vector.load %arg6[%c3_54, %c0_55, %c0_56] : memref<5x1x256xf32, #tpu.memory_space<vmem>>, vector<1x1x256xf32>
    %92 = vector.shape_cast %91 : vector<1x1x256xf32> to vector<1x256xf32>
    %93 = vector.broadcast %92 : vector<1x256xf32> to vector<8x256xf32>
    %94 = arith.addf %90, %93 : vector<8x256xf32>
    %cst_57 = arith.constant 0.000000e+00 : f32
    %95 = vector.broadcast %cst_57 : f32 to vector<8x256xf32>
    %96 = arith.maximumf %94, %95 : vector<8x256xf32>
    %97 = arith.truncf %96 : vector<8x256xf32> to vector<8x256xbf16>
    %c3_58 = arith.constant 3 : index
    %c0_59 = arith.constant 0 : index
    %c0_60 = arith.constant 0 : index
    %98 = vector.load %arg5[%c3_58, %c0_59, %c0_60] : memref<5x256x256xbf16, #tpu.memory_space<vmem>>, vector<1x256x256xbf16>
    %99 = vector.shape_cast %98 : vector<1x256x256xbf16> to vector<256x256xbf16>
    %cst_61 = arith.constant dense<0.000000e+00> : vector<8x256xf32>
    %100 = tpu.matmul %97, %99, %cst_61 {dimension_numbers = #tpu.dot_dimension_numbers<[1], [0], [0], [1], [0, 0, 1, 1], [], []>} : vector<8x256xbf16>, vector<256x256xbf16>, vector<8x256xf32> -> vector<8x256xf32>
    %c3_62 = arith.constant 3 : index
    %c0_63 = arith.constant 0 : index
    %c0_64 = arith.constant 0 : index
    %101 = vector.load %arg7[%c3_62, %c0_63, %c0_64] : memref<5x1x256xf32, #tpu.memory_space<vmem>>, vector<1x1x256xf32>
    %102 = vector.shape_cast %101 : vector<1x1x256xf32> to vector<1x256xf32>
    %103 = vector.broadcast %102 : vector<1x256xf32> to vector<8x256xf32>
    %104 = arith.addf %100, %103 : vector<8x256xf32>
    %105 = arith.addf %104, %86 : vector<8x256xf32>
    %cst_65 = arith.constant 0.000000e+00 : f32
    %106 = vector.broadcast %cst_65 : f32 to vector<8x256xf32>
    %107 = arith.maximumf %105, %106 : vector<8x256xf32>
    %108 = arith.truncf %107 : vector<8x256xf32> to vector<8x256xbf16>
    %c4 = arith.constant 4 : index
    %c0_66 = arith.constant 0 : index
    %c0_67 = arith.constant 0 : index
    %109 = vector.load %arg4[%c4, %c0_66, %c0_67] : memref<5x256x256xbf16, #tpu.memory_space<vmem>>, vector<1x256x256xbf16>
    %110 = vector.shape_cast %109 : vector<1x256x256xbf16> to vector<256x256xbf16>
    %cst_68 = arith.constant dense<0.000000e+00> : vector<8x256xf32>
    %111 = tpu.matmul %108, %110, %cst_68 {dimension_numbers = #tpu.dot_dimension_numbers<[1], [0], [0], [1], [0, 0, 1, 1], [], []>} : vector<8x256xbf16>, vector<256x256xbf16>, vector<8x256xf32> -> vector<8x256xf32>
    %c4_69 = arith.constant 4 : index
    %c0_70 = arith.constant 0 : index
    %c0_71 = arith.constant 0 : index
    %112 = vector.load %arg6[%c4_69, %c0_70, %c0_71] : memref<5x1x256xf32, #tpu.memory_space<vmem>>, vector<1x1x256xf32>
    %113 = vector.shape_cast %112 : vector<1x1x256xf32> to vector<1x256xf32>
    %114 = vector.broadcast %113 : vector<1x256xf32> to vector<8x256xf32>
    %115 = arith.addf %111, %114 : vector<8x256xf32>
    %cst_72 = arith.constant 0.000000e+00 : f32
    %116 = vector.broadcast %cst_72 : f32 to vector<8x256xf32>
    %117 = arith.maximumf %115, %116 : vector<8x256xf32>
    %118 = arith.truncf %117 : vector<8x256xf32> to vector<8x256xbf16>
    %c4_73 = arith.constant 4 : index
    %c0_74 = arith.constant 0 : index
    %c0_75 = arith.constant 0 : index
    %119 = vector.load %arg5[%c4_73, %c0_74, %c0_75] : memref<5x256x256xbf16, #tpu.memory_space<vmem>>, vector<1x256x256xbf16>
    %120 = vector.shape_cast %119 : vector<1x256x256xbf16> to vector<256x256xbf16>
    %cst_76 = arith.constant dense<0.000000e+00> : vector<8x256xf32>
    %121 = tpu.matmul %118, %120, %cst_76 {dimension_numbers = #tpu.dot_dimension_numbers<[1], [0], [0], [1], [0, 0, 1, 1], [], []>} : vector<8x256xbf16>, vector<256x256xbf16>, vector<8x256xf32> -> vector<8x256xf32>
    %c4_77 = arith.constant 4 : index
    %c0_78 = arith.constant 0 : index
    %c0_79 = arith.constant 0 : index
    %122 = vector.load %arg7[%c4_77, %c0_78, %c0_79] : memref<5x1x256xf32, #tpu.memory_space<vmem>>, vector<1x1x256xf32>
    %123 = vector.shape_cast %122 : vector<1x1x256xf32> to vector<1x256xf32>
    %124 = vector.broadcast %123 : vector<1x256xf32> to vector<8x256xf32>
    %125 = arith.addf %121, %124 : vector<8x256xf32>
    %126 = arith.addf %125, %107 : vector<8x256xf32>
    %cst_80 = arith.constant 0.000000e+00 : f32
    %127 = vector.broadcast %cst_80 : f32 to vector<8x256xf32>
    %128 = arith.maximumf %126, %127 : vector<8x256xf32>
    %129 = arith.truncf %128 : vector<8x256xf32> to vector<8x256xbf16>
    %c0_81 = arith.constant 0 : index
    %c0_82 = arith.constant 0 : index
    %130 = vector.load %arg8[%c0_81, %c0_82] : memref<256x128xbf16, #tpu.memory_space<vmem>>, vector<256x128xbf16>
    %cst_83 = arith.constant dense<0.000000e+00> : vector<8x128xf32>
    %131 = tpu.matmul %129, %130, %cst_83 {dimension_numbers = #tpu.dot_dimension_numbers<[1], [0], [0], [1], [0, 0, 1, 1], [], []>} : vector<8x256xbf16>, vector<256x128xbf16>, vector<8x128xf32> -> vector<8x128xf32>
    %c0_84 = arith.constant 0 : index
    %c0_85 = arith.constant 0 : index
    %132 = vector.load %arg9[%c0_84, %c0_85] : memref<1x128xf32, #tpu.memory_space<vmem>>, vector<1x128xf32>
    %133 = vector.broadcast %132 : vector<1x128xf32> to vector<8x128xf32>
    %134 = arith.addf %131, %133 : vector<8x128xf32>
    %c0_86 = arith.constant 0 : index
    %c0_87 = arith.constant 0 : index
    %135 = vector.load %arg10[%c0_86, %c0_87] : memref<8x128xf32, #tpu.memory_space<vmem>>, vector<8x128xf32>
    tpu.vector_store %arg10[%c0_86, %c0_87], %134 {strides = array<i32>} : memref<8x128xf32, #tpu.memory_space<vmem>>, vector<8x128xf32>,
    return
  }
  func.func @transform_0(%arg0: i32) -> (i32, i32) {
    %c0_i32 = arith.constant 0 : i32
    %c0_i32_0 = arith.constant 0 : i32
    return %arg0, %c0_i32 : i32, i32
  }
  func.func @transform_1(%arg0: i32) -> (i32, i32) {
    %c0_i32 = arith.constant 0 : i32
    %c0_i32_0 = arith.constant 0 : i32
    %c0_i32_1 = arith.constant 0 : i32
    return %c0_i32, %c0_i32_0 : i32, i32
  }
  func.func @transform_2(%arg0: i32) -> (i32, i32) {
    %c0_i32 = arith.constant 0 : i32
    %c0_i32_0 = arith.constant 0 : i32
    %c0_i32_1 = arith.constant 0 : i32
    return %c0_i32, %c0_i32_0 : i32, i32
  }
  func.func @transform_3(%arg0: i32) -> (i32, i32, i32) {
    %c0_i32 = arith.constant 0 : i32
    %c0_i32_0 = arith.constant 0 : i32
    %c0_i32_1 = arith.constant 0 : i32
    %c0_i32_2 = arith.constant 0 : i32
    return %c0_i32, %c0_i32_0, %c0_i32_1 : i32, i32, i32
  }
  func.func @transform_4(%arg0: i32) -> (i32, i32, i32) {
    %c0_i32 = arith.constant 0 : i32
    %c0_i32_0 = arith.constant 0 : i32
    %c0_i32_1 = arith.constant 0 : i32
    %c0_i32_2 = arith.constant 0 : i32
    return %c0_i32, %c0_i32_0, %c0_i32_1 : i32, i32, i32
  }
  func.func @transform_5(%arg0: i32) -> (i32, i32, i32) {
    %c0_i32 = arith.constant 0 : i32
    %c0_i32_0 = arith.constant 0 : i32
    %c0_i32_1 = arith.constant 0 : i32
    %c0_i32_2 = arith.constant 0 : i32
    return %c0_i32, %c0_i32_0, %c0_i32_1 : i32, i32, i32
  }
  func.func @transform_6(%arg0: i32) -> (i32, i32, i32) {
    %c0_i32 = arith.constant 0 : i32
    %c0_i32_0 = arith.constant 0 : i32
    %c0_i32_1 = arith.constant 0 : i32
    %c0_i32_2 = arith.constant 0 : i32
    return %c0_i32, %c0_i32_0, %c0_i32_1 : i32, i32, i32
  }
  func.func @transform_7(%arg0: i32) -> (i32, i32) {
    %c0_i32 = arith.constant 0 : i32
    %c0_i32_0 = arith.constant 0 : i32
    %c0_i32_1 = arith.constant 0 : i32
    return %c0_i32, %c0_i32_0 : i32, i32
  }
  func.func @transform_8(%arg0: i32) -> (i32, i32) {
    %c0_i32 = arith.constant 0 : i32
    %c0_i32_0 = arith.constant 0 : i32
    %c0_i32_1 = arith.constant 0 : i32
    return %c0_i32, %c0_i32_0 : i32, i32
  }
  func.func @transform_9(%arg0: i32) -> (i32, i32) {
    %c0_i32 = arith.constant 0 : i32
    %c0_i32_0 = arith.constant 0 : i32
    return %arg0, %c0_i32 : i32, i32
  }
}

module attributes {stable_mosaic.version = 11 : i64} {
  func.func @_kinetic_kernel(%arg0: i32, %arg1: memref<8x3xf32, #tpu.memory_space<vmem>>, %arg2: memref<3x256xf32, #tpu.memory_space<vmem>>, %arg3: memref<1x256xf32, #tpu.memory_space<vmem>>, %arg4: memref<5x256x256xbf16, #tpu.memory_space<vmem>>, %arg5: memref<5x256x256xbf16, #tpu.memory_space<vmem>>, %arg6: memref<5x1x256xf32, #tpu.memory_space<vmem>>, %arg7: memref<5x1x256xf32, #tpu.memory_space<vmem>>, %arg8: memref<256x128xbf16, #tpu.memory_space<vmem>>, %arg9: memref<1x128xf32, #tpu.memory_space<vmem>>, %arg10: memref<8x128xf32, #tpu.memory_space<vmem>>) attributes {dimension_semantics = [#tpu.dimension_semantics<parallel>], iteration_bounds = array<i64: 1>, scalar_prefetch = 0 : i64, scratch_operands = 0 : i64, tpu.core_type = #tpu.core_type<tc>, window_params = [{transform_indices = @transform_0, window_bounds = array<i64: 8, 3>}, {pipeline_mode = #tpu.pipeline_mode<synchronous>, transform_indices = @transform_1, window_bounds = array<i64: 3, 256>}, {pipeline_mode = #tpu.pipeline_mode<synchronous>, transform_indices = @transform_2, window_bounds = array<i64: 1, 256>}, {pipeline_mode = #tpu.pipeline_mode<synchronous>, transform_indices = @transform_3, window_bounds = array<i64: 5, 256, 256>}, {pipeline_mode = #tpu.pipeline_mode<synchronous>, transform_indices = @transform_4, window_bounds = array<i64: 5, 256, 256>}, {pipeline_mode = #tpu.pipeline_mode<synchronous>, transform_indices = @transform_5, window_bounds = array<i64: 5, 1, 256>}, {pipeline_mode = #tpu.pipeline_mode<synchronous>, transform_indices = @transform_6, window_bounds = array<i64: 5, 1, 256>}, {pipeline_mode = #tpu.pipeline_mode<synchronous>, transform_indices = @transform_7, window_bounds = array<i64: 256, 128>}, {pipeline_mode = #tpu.pipeline_mode<synchronous>, transform_indices = @transform_8, window_bounds = array<i64: 1, 128>}, {transform_indices = @transform_9, window_bounds = array<i64: 8, 128>}]} {
    %c0 = arith.constant 0 : index
    %c0_0 = arith.constant 0 : index
    %0 = vector.load %arg1[%c0, %c0_0] : memref<8x3xf32, #tpu.memory_space<vmem>>, vector<8x3xf32>
    %c0_1 = arith.constant 0 : index
    %c0_2 = arith.constant 0 : index
    %1 = vector.load %arg2[%c0_1, %c0_2] : memref<3x256xf32, #tpu.memory_space<vmem>>, vector<3x256xf32>
    %2 = vector.extract_strided_slice %0 {offsets = [0, 0], sizes = [8, 1], strides = [1, 1]} : vector<8x3xf32> to vector<8x1xf32>
    %3 = vector.extract_strided_slice %1 {offsets = [0, 0], sizes = [1, 256], strides = [1, 1]} : vector<3x256xf32> to vector<1x256xf32>
    %4 = vector.broadcast %2 : vector<8x1xf32> to vector<8x256xf32>
    %5 = vector.broadcast %3 : vector<1x256xf32> to vector<8x256xf32>
    %6 = arith.mulf %4, %5 : vector<8x256xf32>
    %7 = vector.extract_strided_slice %0 {offsets = [0, 1], sizes = [8, 1], strides = [1, 1]} : vector<8x3xf32> to vector<8x1xf32>
    %8 = vector.extract_strided_slice %1 {offsets = [1, 0], sizes = [1, 256], strides = [1, 1]} : vector<3x256xf32> to vector<1x256xf32>
    %9 = vector.broadcast %7 : vector<8x1xf32> to vector<8x256xf32>
    %10 = vector.broadcast %8 : vector<1x256xf32> to vector<8x256xf32>
    %11 = arith.mulf %9, %10 : vector<8x256xf32>
    %12 = arith.addf %6, %11 : vector<8x256xf32>
    %13 = vector.extract_strided_slice %0 {offsets = [0, 2], sizes = [8, 1], strides = [1, 1]} : vector<8x3xf32> to vector<8x1xf32>
    %14 = vector.extract_strided_slice %1 {offsets = [2, 0], sizes = [1, 256], strides = [1, 1]} : vector<3x256xf32> to vector<1x256xf32>
    %15 = vector.broadcast %13 : vector<8x1xf32> to vector<8x256xf32>
    %16 = vector.broadcast %14 : vector<1x256xf32> to vector<8x256xf32>
    %17 = arith.mulf %15, %16 : vector<8x256xf32>
    %18 = arith.addf %12, %17 : vector<8x256xf32>
    %c0_3 = arith.constant 0 : index
    %c0_4 = arith.constant 0 : index
    %19 = vector.load %arg3[%c0_3, %c0_4] : memref<1x256xf32, #tpu.memory_space<vmem>>, vector<1x256xf32>
    %20 = vector.broadcast %19 : vector<1x256xf32> to vector<8x256xf32>
    %21 = arith.addf %18, %20 : vector<8x256xf32>
    %cst = arith.constant 0.000000e+00 : f32
    %22 = vector.broadcast %cst : f32 to vector<8x256xf32>
    %23 = arith.maximumf %21, %22 : vector<8x256xf32>
    %24 = arith.truncf %23 : vector<8x256xf32> to vector<8x256xbf16>
    %c0_5 = arith.constant 0 : index
    %c0_6 = arith.constant 0 : index
    %c0_7 = arith.constant 0 : index
    %25 = vector.load %arg4[%c0_5, %c0_6, %c0_7] : memref<5x256x256xbf16, #tpu.memory_space<vmem>>, vector<1x256x256xbf16>
    %26 = vector.shape_cast %25 : vector<1x256x256xbf16> to vector<256x256xbf16>
    %cst_8 = arith.constant dense<0.000000e+00> : vector<8x256xf32>
    %27 = tpu.matmul %24, %26, %cst_8 {dimension_numbers = #tpu.dot_dimension_numbers<[1], [0], [0], [1], [0, 0, 1, 1], [], []>} : vector<8x256xbf16>, vector<256x256xbf16>, vector<8x256xf32> -> vector<8x256xf32>
    %c0_9 = arith.constant 0 : index
    %c0_10 = arith.constant 0 : index
    %c0_11 = arith.constant 0 : index
    %28 = vector.load %arg6[%c0_9, %c0_10, %c0_11] : memref<5x1x256xf32, #tpu.memory_space<vmem>>, vector<1x1x256xf32>
    %29 = vector.shape_cast %28 : vector<1x1x256xf32> to vector<1x256xf32>
    %30 = vector.broadcast %29 : vector<1x256xf32> to vector<8x256xf32>
    %31 = arith.addf %27, %30 : vector<8x256xf32>
    %cst_12 = arith.constant 0.000000e+00 : f32
    %32 = vector.broadcast %cst_12 : f32 to vector<8x256xf32>
    %33 = arith.maximumf %31, %32 : vector<8x256xf32>
    %34 = arith.truncf %33 : vector<8x256xf32> to vector<8x256xbf16>
    %c0_13 = arith.constant 0 : index
    %c0_14 = arith.constant 0 : index
    %c0_15 = arith.constant 0 : index
    %35 = vector.load %arg5[%c0_13, %c0_14, %c0_15] : memref<5x256x256xbf16, #tpu.memory_space<vmem>>, vector<1x256x256xbf16>
    %36 = vector.shape_cast %35 : vector<1x256x256xbf16> to vector<256x256xbf16>
    %cst_16 = arith.constant dense<0.000000e+00> : vector<8x256xf32>
    %37 = tpu.matmul %34, %36, %cst_16 {dimension_numbers = #tpu.dot_dimension_numbers<[1], [0], [0], [1], [0, 0, 1, 1], [], []>} : vector<8x256xbf16>, vector<256x256xbf16>, vector<8x256xf32> -> vector<8x256xf32>
    %c0_17 = arith.constant 0 : index
    %c0_18 = arith.constant 0 : index
    %c0_19 = arith.constant 0 : index
    %38 = vector.load %arg7[%c0_17, %c0_18, %c0_19] : memref<5x1x256xf32, #tpu.memory_space<vmem>>, vector<1x1x256xf32>
    %39 = vector.shape_cast %38 : vector<1x1x256xf32> to vector<1x256xf32>
    %40 = vector.broadcast %39 : vector<1x256xf32> to vector<8x256xf32>
    %41 = arith.addf %37, %40 : vector<8x256xf32>
    %42 = arith.addf %41, %23 : vector<8x256xf32>
    %cst_20 = arith.constant 0.000000e+00 : f32
    %43 = vector.broadcast %cst_20 : f32 to vector<8x256xf32>
    %44 = arith.maximumf %42, %43 : vector<8x256xf32>
    %45 = arith.truncf %44 : vector<8x256xf32> to vector<8x256xbf16>
    %c1 = arith.constant 1 : index
    %c0_21 = arith.constant 0 : index
    %c0_22 = arith.constant 0 : index
    %46 = vector.load %arg4[%c1, %c0_21, %c0_22] : memref<5x256x256xbf16, #tpu.memory_space<vmem>>, vector<1x256x256xbf16>
    %47 = vector.shape_cast %46 : vector<1x256x256xbf16> to vector<256x256xbf16>
    %cst_23 = arith.constant dense<0.000000e+00> : vector<8x256xf32>
    %48 = tpu.matmul %45, %47, %cst_23 {dimension_numbers = #tpu.dot_dimension_numbers<[1], [0], [0], [1], [0, 0, 1, 1], [], []>} : vector<8x256xbf16>, vector<256x256xbf16>, vector<8x256xf32> -> vector<8x256xf32>
    %c1_24 = arith.constant 1 : index
    %c0_25 = arith.constant 0 : index
    %c0_26 = arith.constant 0 : index
    %49 = vector.load %arg6[%c1_24, %c0_25, %c0_26] : memref<5x1x256xf32, #tpu.memory_space<vmem>>, vector<1x1x256xf32>
    %50 = vector.shape_cast %49 : vector<1x1x256xf32> to vector<1x256xf32>
    %51 = vector.broadcast %50 : vector<1x256xf32> to vector<8x256xf32>
    %52 = arith.addf %48, %51 : vector<8x256xf32>
    %cst_27 = arith.constant 0.000000e+00 : f32
    %53 = vector.broadcast %cst_27 : f32 to vector<8x256xf32>
    %54 = arith.maximumf %52, %53 : vector<8x256xf32>
    %55 = arith.truncf %54 : vector<8x256xf32> to vector<8x256xbf16>
    %c1_28 = arith.constant 1 : index
    %c0_29 = arith.constant 0 : index
    %c0_30 = arith.constant 0 : index
    %56 = vector.load %arg5[%c1_28, %c0_29, %c0_30] : memref<5x256x256xbf16, #tpu.memory_space<vmem>>, vector<1x256x256xbf16>
    %57 = vector.shape_cast %56 : vector<1x256x256xbf16> to vector<256x256xbf16>
    %cst_31 = arith.constant dense<0.000000e+00> : vector<8x256xf32>
    %58 = tpu.matmul %55, %57, %cst_31 {dimension_numbers = #tpu.dot_dimension_numbers<[1], [0], [0], [1], [0, 0, 1, 1], [], []>} : vector<8x256xbf16>, vector<256x256xbf16>, vector<8x256xf32> -> vector<8x256xf32>
    %c1_32 = arith.constant 1 : index
    %c0_33 = arith.constant 0 : index
    %c0_34 = arith.constant 0 : index
    %59 = vector.load %arg7[%c1_32, %c0_33, %c0_34] : memref<5x1x256xf32, #tpu.memory_space<vmem>>, vector<1x1x256xf32>
    %60 = vector.shape_cast %59 : vector<1x1x256xf32> to vector<1x256xf32>
    %61 = vector.broadcast %60 : vector<1x256xf32> to vector<8x256xf32>
    %62 = arith.addf %58, %61 : vector<8x256xf32>
    %63 = arith.addf %62, %44 : vector<8x256xf32>
    %cst_35 = arith.constant 0.000000e+00 : f32
    %64 = vector.broadcast %cst_35 : f32 to vector<8x256xf32>
    %65 = arith.maximumf %63, %64 : vector<8x256xf32>
    %66 = arith.truncf %65 : vector<8x256xf32> to vector<8x256xbf16>
    %c2 = arith.constant 2 : index
    %c0_36 = arith.constant 0 : index
    %c0_37 = arith.constant 0 : index
    %67 = vector.load %arg4[%c2, %c0_36, %c0_37] : memref<5x256x256xbf16, #tpu.memory_space<vmem>>, vector<1x256x256xbf16>
    %68 = vector.shape_cast %67 : vector<1x256x256xbf16> to vector<256x256xbf16>
    %cst_38 = arith.constant dense<0.000000e+00> : vector<8x256xf32>
    %69 = tpu.matmul %66, %68, %cst_38 {dimension_numbers = #tpu.dot_dimension_numbers<[1], [0], [0], [1], [0, 0, 1, 1], [], []>} : vector<8x256xbf16>, vector<256x256xbf16>, vector<8x256xf32> -> vector<8x256xf32>
    %c2_39 = arith.constant 2 : index
    %c0_40 = arith.constant 0 : index
    %c0_41 = arith.constant 0 : index
    %70 = vector.load %arg6[%c2_39, %c0_40, %c0_41] : memref<5x1x256xf32, #tpu.memory_space<vmem>>, vector<1x1x256xf32>
    %71 = vector.shape_cast %70 : vector<1x1x256xf32> to vector<1x256xf32>
    %72 = vector.broadcast %71 : vector<1x256xf32> to vector<8x256xf32>
    %73 = arith.addf %69, %72 : vector<8x256xf32>
    %cst_42 = arith.constant 0.000000e+00 : f32
    %74 = vector.broadcast %cst_42 : f32 to vector<8x256xf32>
    %75 = arith.maximumf %73, %74 : vector<8x256xf32>
    %76 = arith.truncf %75 : vector<8x256xf32> to vector<8x256xbf16>
    %c2_43 = arith.constant 2 : index
    %c0_44 = arith.constant 0 : index
    %c0_45 = arith.constant 0 : index
    %77 = vector.load %arg5[%c2_43, %c0_44, %c0_45] : memref<5x256x256xbf16, #tpu.memory_space<vmem>>, vector<1x256x256xbf16>
    %78 = vector.shape_cast %77 : vector<1x256x256xbf16> to vector<256x256xbf16>
    %cst_46 = arith.constant dense<0.000000e+00> : vector<8x256xf32>
    %79 = tpu.matmul %76, %78, %cst_46 {dimension_numbers = #tpu.dot_dimension_numbers<[1], [0], [0], [1], [0, 0, 1, 1], [], []>} : vector<8x256xbf16>, vector<256x256xbf16>, vector<8x256xf32> -> vector<8x256xf32>
    %c2_47 = arith.constant 2 : index
    %c0_48 = arith.constant 0 : index
    %c0_49 = arith.constant 0 : index
    %80 = vector.load %arg7[%c2_47, %c0_48, %c0_49] : memref<5x1x256xf32, #tpu.memory_space<vmem>>, vector<1x1x256xf32>
    %81 = vector.shape_cast %80 : vector<1x1x256xf32> to vector<1x256xf32>
    %82 = vector.broadcast %81 : vector<1x256xf32> to vector<8x256xf32>
    %83 = arith.addf %79, %82 : vector<8x256xf32>
    %84 = arith.addf %83, %65 : vector<8x256xf32>
    %cst_50 = arith.constant 0.000000e+00 : f32
    %85 = vector.broadcast %cst_50 : f32 to vector<8x256xf32>
    %86 = arith.maximumf %84, %85 : vector<8x256xf32>
    %87 = arith.truncf %86 : vector<8x256xf32> to vector<8x256xbf16>
    %c3 = arith.constant 3 : index
    %c0_51 = arith.constant 0 : index
    %c0_52 = arith.constant 0 : index
    %88 = vector.load %arg4[%c3, %c0_51, %c0_52] : memref<5x256x256xbf16, #tpu.memory_space<vmem>>, vector<1x256x256xbf16>
    %89 = vector.shape_cast %88 : vector<1x256x256xbf16> to vector<256x256xbf16>
    %cst_53 = arith.constant dense<0.000000e+00> : vector<8x256xf32>
    %90 = tpu.matmul %87, %89, %cst_53 {dimension_numbers = #tpu.dot_dimension_numbers<[1], [0], [0], [1], [0, 0, 1, 1], [], []>} : vector<8x256xbf16>, vector<256x256xbf16>, vector<8x256xf32> -> vector<8x256xf32>
    %c3_54 = arith.constant 3 : index
    %c0_55 = arith.constant 0 : index
    %c0_56 = arith.constant 0 : index
    %91 = vector.load %arg6[%c3_54, %c0_55, %c0_56] : memref<5x1x256xf32, #tpu.memory_space<vmem>>, vector<1x1x256xf32>
    %92 = vector.shape_cast %91 : vector<1x1x256xf32> to vector<1x256xf32>
    %93 = vector.broadcast %92 : vector<1x256xf32> to vector<8x256xf32>
    %94 = arith.addf %90, %93 : vector<8x256xf32>
    %cst_57 = arith.constant 0.000000e+00 : f32
    %95 = vector.broadcast %cst_57 : f32 to vector<8x256xf32>
    %96 = arith.maximumf %94, %95 : vector<8x256xf32>
    %97 = arith.truncf %96 : vector<8x256xf32> to vector<8x256xbf16>
    %c3_58 = arith.constant 3 : index
    %c0_59 = arith.constant 0 : index
    %c0_60 = arith.constant 0 : index
    %98 = vector.load %arg5[%c3_58, %c0_59, %c0_60] : memref<5x256x256xbf16, #tpu.memory_space<vmem>>, vector<1x256x256xbf16>
    %99 = vector.shape_cast %98 : vector<1x256x256xbf16> to vector<256x256xbf16>
    %cst_61 = arith.constant dense<0.000000e+00> : vector<8x256xf32>
    %100 = tpu.matmul %97, %99, %cst_61 {dimension_numbers = #tpu.dot_dimension_numbers<[1], [0], [0], [1], [0, 0, 1, 1], [], []>} : vector<8x256xbf16>, vector<256x256xbf16>, vector<8x256xf32> -> vector<8x256xf32>
    %c3_62 = arith.constant 3 : index
    %c0_63 = arith.constant 0 : index
    %c0_64 = arith.constant 0 : index
    %101 = vector.load %arg7[%c3_62, %c0_63, %c0_64] : memref<5x1x256xf32, #tpu.memory_space<vmem>>, vector<1x1x256xf32>
    %102 = vector.shape_cast %101 : vector<1x1x256xf32> to vector<1x256xf32>
    %103 = vector.broadcast %102 : vector<1x256xf32> to vector<8x256xf32>
    %104 = arith.addf %100, %103 : vector<8x256xf32>
    %105 = arith.addf %104, %86 : vector<8x256xf32>
    %cst_65 = arith.constant 0.000000e+00 : f32
    %106 = vector.broadcast %cst_65 : f32 to vector<8x256xf32>
    %107 = arith.maximumf %105, %106 : vector<8x256xf32>
    %108 = arith.truncf %107 : vector<8x256xf32> to vector<8x256xbf16>
    %c4 = arith.constant 4 : index
    %c0_66 = arith.constant 0 : index
    %c0_67 = arith.constant 0 : index
    %109 = vector.load %arg4[%c4, %c0_66, %c0_67] : memref<5x256x256xbf16, #tpu.memory_space<vmem>>, vector<1x256x256xbf16>
    %110 = vector.shape_cast %109 : vector<1x256x256xbf16> to vector<256x256xbf16>
    %cst_68 = arith.constant dense<0.000000e+00> : vector<8x256xf32>
    %111 = tpu.matmul %108, %110, %cst_68 {dimension_numbers = #tpu.dot_dimension_numbers<[1], [0], [0], [1], [0, 0, 1, 1], [], []>} : vector<8x256xbf16>, vector<256x256xbf16>, vector<8x256xf32> -> vector<8x256xf32>
    %c4_69 = arith.constant 4 : index
    %c0_70 = arith.constant 0 : index
    %c0_71 = arith.constant 0 : index
    %112 = vector.load %arg6[%c4_69, %c0_70, %c0_71] : memref<5x1x256xf32, #tpu.memory_space<vmem>>, vector<1x1x256xf32>
    %113 = vector.shape_cast %112 : vector<1x1x256xf32> to vector<1x256xf32>
    %114 = vector.broadcast %113 : vector<1x256xf32> to vector<8x256xf32>
    %115 = arith.addf %111, %114 : vector<8x256xf32>
    %cst_72 = arith.constant 0.000000e+00 : f32
    %116 = vector.broadcast %cst_72 : f32 to vector<8x256xf32>
    %117 = arith.maximumf %115, %116 : vector<8x256xf32>
    %118 = arith.truncf %117 : vector<8x256xf32> to vector<8x256xbf16>
    %c4_73 = arith.constant 4 : index
    %c0_74 = arith.constant 0 : index
    %c0_75 = arith.constant 0 : index
    %119 = vector.load %arg5[%c4_73, %c0_74, %c0_75] : memref<5x256x256xbf16, #tpu.memory_space<vmem>>, vector<1x256x256xbf16>
    %120 = vector.shape_cast %119 : vector<1x256x256xbf16> to vector<256x256xbf16>
    %cst_76 = arith.constant dense<0.000000e+00> : vector<8x256xf32>
    %121 = tpu.matmul %118, %120, %cst_76 {dimension_numbers = #tpu.dot_dimension_numbers<[1], [0], [0], [1], [0, 0, 1, 1], [], []>} : vector<8x256xbf16>, vector<256x256xbf16>, vector<8x256xf32> -> vector<8x256xf32>
    %c4_77 = arith.constant 4 : index
    %c0_78 = arith.constant 0 : index
    %c0_79 = arith.constant 0 : index
    %122 = vector.load %arg7[%c4_77, %c0_78, %c0_79] : memref<5x1x256xf32, #tpu.memory_space<vmem>>, vector<1x1x256xf32>
    %123 = vector.shape_cast %122 : vector<1x1x256xf32> to vector<1x256xf32>
    %124 = vector.broadcast %123 : vector<1x256xf32> to vector<8x256xf32>
    %125 = arith.addf %121, %124 : vector<8x256xf32>
    %126 = arith.addf %125, %107 : vector<8x256xf32>
    %cst_80 = arith.constant 0.000000e+00 : f32
    %127 = vector.broadcast %cst_80 : f32 to vector<8x256xf32>
    %128 = arith.maximumf %126, %127 : vector<8x256xf32>
    %129 = arith.truncf %128 : vector<8x256xf32> to vector<8x256xbf16>
    %c0_81 = arith.constant 0 : index
    %c0_82 = arith.constant 0 : index
    %130 = vector.load %arg8[%c0_81, %c0_82] : memref<256x128xbf16, #tpu.memory_space<vmem>>, vector<256x128xbf16>
    %cst_83 = arith.constant dense<0.000000e+00> : vector<8x128xf32>
    %131 = tpu.matmul %129, %130, %cst_83 {dimension_numbers = #tpu.dot_dimension_numbers<[1], [0], [0], [1], [0, 0, 1, 1], [], []>} : vector<8x256xbf16>, vector<256x128xbf16>, vector<8x128xf32> -> vector<8x128xf32>
    %c0_84 = arith.constant 0 : index
    %c0_85 = arith.constant 0 : index
    %132 = vector.load %arg9[%c0_84, %c0_85] : memref<1x128xf32, #tpu.memory_space<vmem>>, vector<1x128xf32>
    %133 = vector.broadcast %132 : vector<1x128xf32> to vector<8x128xf32>
    %134 = arith.addf %131, %133 : vector<8x128xf32>
    %c0_86 = arith.constant 0 : index
    %c0_87 = arith.constant 0 : index
    %135 = vector.load %arg10[%c0_86, %c0_87] : memref<8x128xf32, #tpu.memory_space<vmem>>, vector<8x128xf32>
    tpu.vector_store %arg10[%c0_86, %c0_87], %134 {strides = array<i32>} : memref<8x128xf32, #tpu.memory_space<vmem>>, vector<8x128xf32>,
    return
  }
  func.func @transform_0(%arg0: i32) -> (i32, i32) {
    %c0_i32 = arith.constant 0 : i32
    %c0_i32_0 = arith.constant 0 : i32
    return %arg0, %c0_i32 : i32, i32
  }
  func.func @transform_1(%arg0: i32) -> (i32, i32) {
    %c0_i32 = arith.constant 0 : i32
    %c0_i32_0 = arith.constant 0 : i32
    %c0_i32_1 = arith.constant 0 : i32
    return %c0_i32, %c0_i32_0 : i32, i32
  }
  func.func @transform_2(%arg0: i32) -> (i32, i32) {
    %c0_i32 = arith.constant 0 : i32
    %c0_i32_0 = arith.constant 0 : i32
    %c0_i32_1 = arith.constant 0 : i32
    return %c0_i32, %c0_i32_0 : i32, i32
  }
  func.func @transform_3(%arg0: i32) -> (i32, i32, i32) {
    %c0_i32 = arith.constant 0 : i32
    %c0_i32_0 = arith.constant 0 : i32
    %c0_i32_1 = arith.constant 0 : i32
    %c0_i32_2 = arith.constant 0 : i32
    return %c0_i32, %c0_i32_0, %c0_i32_1 : i32, i32, i32
  }
  func.func @transform_4(%arg0: i32) -> (i32, i32, i32) {
    %c0_i32 = arith.constant 0 : i32
    %c0_i32_0 = arith.constant 0 : i32
    %c0_i32_1 = arith.constant 0 : i32
    %c0_i32_2 = arith.constant 0 : i32
    return %c0_i32, %c0_i32_0, %c0_i32_1 : i32, i32, i32
  }
  func.func @transform_5(%arg0: i32) -> (i32, i32, i32) {
    %c0_i32 = arith.constant 0 : i32
    %c0_i32_0 = arith.constant 0 : i32
    %c0_i32_1 = arith.constant 0 : i32
    %c0_i32_2 = arith.constant 0 : i32
    return %c0_i32, %c0_i32_0, %c0_i32_1 : i32, i32, i32
  }
  func.func @transform_6(%arg0: i32) -> (i32, i32, i32) {
    %c0_i32 = arith.constant 0 : i32
    %c0_i32_0 = arith.constant 0 : i32
    %c0_i32_1 = arith.constant 0 : i32
    %c0_i32_2 = arith.constant 0 : i32
    return %c0_i32, %c0_i32_0, %c0_i32_1 : i32, i32, i32
  }
  func.func @transform_7(%arg0: i32) -> (i32, i32) {
    %c0_i32 = arith.constant 0 : i32
    %c0_i32_0 = arith.constant 0 : i32
    %c0_i32_1 = arith.constant 0 : i32
    return %c0_i32, %c0_i32_0 : i32, i32
  }
  func.func @transform_8(%arg0: i32) -> (i32, i32) {
    %c0_i32 = arith.constant 0 : i32
    %c0_i32_0 = arith.constant 0 : i32
    %c0_i32_1 = arith.constant 0 : i32
    return %c0_i32, %c0_i32_0 : i32, i32
  }
  func.func @transform_9(%arg0: i32) -> (i32, i32) {
    %c0_i32 = arith.constant 0 : i32
    %c0_i32_0 = arith.constant 0 : i32
    return %arg0, %c0_i32 : i32, i32
  }
}

</mosaic_0001>

<llo_original>
// kernel: tpu_custom_call.1
$region0: #{tpu_custom_call.1}
  #allocation0 [shape = 'u32[]', space=smem, size = 0x4, offset = 0x4, fixed_abs, tag = 'smem constant byte address 0x4 - core index']
  #allocation1 [shape = 'u32[144,128]{1,0:T(1,128)}', space=vmem, size = 0x12000, scoped, tag = 'internal scratch']
  %s0 = inlined_call_operand.vmem [shape: f32[8,3], index: 0, kind: input, shape index: {}]
  %s1 = inlined_call_operand.hbm [shape: f32[3,256], index: 1, kind: input, shape index: {}]
  %s2 = inlined_call_operand.vmem [shape: f32[1,256], index: 2, kind: input, shape index: {}]
  %s3 = inlined_call_operand.hbm [shape: bf16[5,256,256], index: 3, kind: input, shape index: {}]
  %s4 = inlined_call_operand.hbm [shape: bf16[5,256,256], index: 4, kind: input, shape index: {}]
  %s5 = inlined_call_operand.vmem [shape: f32[5,1,256], index: 5, kind: input, shape index: {}]
  %s6 = inlined_call_operand.vmem [shape: f32[5,1,256], index: 6, kind: input, shape index: {}]
  %s7 = inlined_call_operand.hbm [shape: bf16[256,128], index: 7, kind: input, shape index: {}]
  %s8 = inlined_call_operand.vmem [shape: f32[1,128], index: 8, kind: input, shape index: {}]
  %s9 = inlined_call_operand.hbm [shape: f32[8,128], index: 9, kind: output, shape index: {}]
  %s10 = sld [smem:[#allocation0]]
  $region62: #{tpu_custom_call.1} parent=0
    _
  %s12 = ssub.s32 1, %s10
  %s13 = scalar_select 0, %s12, %s10
  $region1: #{tpu_custom_call.1} parent=0
    #allocation2 [shape = 'u8[4096]{0}', space=vmem, size = 0x1000, scoped, tag = 'input window, operand 1, single buffered']
    #allocation3 [shape = 's32[1]{0}', space=sflag, size = 0x4, scoped, tag = 'scoped memory for tpu_custom_call.1']
    #allocation4 [shape = 's32[1]{0}', space=sflag, size = 0x4, scoped, tag = 'scoped memory for tpu_custom_call.1']
    #allocation5 [shape = 'u8[655360]{0}', space=vmem, size = 0xa0000, scoped, tag = 'input window, operand 3, single buffered']
    #allocation6 [shape = 's32[1]{0}', space=sflag, size = 0x4, scoped, tag = 'scoped memory for tpu_custom_call.1']
    #allocation7 [shape = 'u8[655360]{0}', space=vmem, size = 0xa0000, scoped, tag = 'input window, operand 4, single buffered']
    #allocation8 [shape = 'u8[65536]{0}', space=vmem, size = 0x10000, scoped, tag = 'input window, operand 7, single buffered']
    #allocation9 [shape = 's32[1]{0}', space=sflag, size = 0x4, scoped, tag = 'scoped memory for tpu_custom_call.1']
    #allocation10 [shape = 'u8[4096]{0}', space=vmem, size = 0x1000, scoped, tag = 'output window, operand 0, single buffered']
    %14 = vsyncpa [#allocation3], 0
    %15 = vsyncpa [#allocation6], 0
    %16 = vsyncpa [#allocation9], 0
    %17 = vsyncpa [#allocation4], 0
    // Predicated region
    $region2: #{tpu_custom_call.1} parent=1 // pred_check
      _
    $region3: #{tpu_custom_call.1} parent=1 // pred_check_branch
      %19 = sbr.rel (0) target = $region5
    $region4: #{tpu_custom_call.1} parent=1 // pred_region
      _
    $region5: #{tpu_custom_call.1} parent=1 // pred_fallthru
      _
    // Predicated region
    $region6: #{tpu_custom_call.1} parent=1 // pred_check
      _
    $region7: #{tpu_custom_call.1} parent=1 // pred_check_branch
      %21 = sbr.rel (0) target = $region9
    $region8: #{tpu_custom_call.1} parent=1 // pred_region
      %s23 = ssub.s32 128, 128
      %24 = vsyncadd [#allocation3], %s23
      %s26 = sshll.u32 [#allocation2], 4
      %s27 = int_to_ptr.vmem [resolvable:$true] %s26
      %29 = dma.hbm_to_vmem [thread:$0]  %s1, 128, %s27, [#allocation3]
    $region9: #{tpu_custom_call.1} parent=1 // pred_fallthru
      _
    // Predicated region
    $region10: #{tpu_custom_call.1} parent=1 // pred_check
      _
    $region11: #{tpu_custom_call.1} parent=1 // pred_check_branch
      %31 = sbr.rel (0) target = $region13
    $region12: #{tpu_custom_call.1} parent=1 // pred_region
      _
    $region13: #{tpu_custom_call.1} parent=1 // pred_fallthru
      _
    // Predicated region
    $region14: #{tpu_custom_call.1} parent=1 // pred_check
      _
    $region15: #{tpu_custom_call.1} parent=1 // pred_check_branch
      %33 = sbr.rel (0) target = $region17
    $region16: #{tpu_custom_call.1} parent=1 // pred_region
      %s35 = ssub.s32 20480, 20480
      %36 = vsyncadd [#allocation6], %s35
      %s37 = sshll.u32 [#allocation5], 4
      %s38 = int_to_ptr.vmem [resolvable:$true] %s37
      %43 = dma.hbm_to_vmem [thread:$0]  %s3, 20480, %s38, [#allocation6], 128, 128, 8
    $region17: #{tpu_custom_call.1} parent=1 // pred_fallthru
      _
    // Predicated region
    $region18: #{tpu_custom_call.1} parent=1 // pred_check
      _
    $region19: #{tpu_custom_call.1} parent=1 // pred_check_branch
      %45 = sbr.rel (0) target = $region21
    $region20: #{tpu_custom_call.1} parent=1 // pred_region
      %s47 = ssub.s32 20480, 20480
      %48 = vsyncadd [#allocation6], %s47
      %s49 = sshll.u32 [#allocation7], 4
      %s50 = int_to_ptr.vmem [resolvable:$true] %s49
      %55 = dma.hbm_to_vmem [thread:$0]  %s4, 20480, %s50, [#allocation6], 128, 128, 8
    $region21: #{tpu_custom_call.1} parent=1 // pred_fallthru
      _
    // Predicated region
    $region22: #{tpu_custom_call.1} parent=1 // pred_check
      _
    $region23: #{tpu_custom_call.1} parent=1 // pred_check_branch
      %57 = sbr.rel (0) target = $region25
    $region24: #{tpu_custom_call.1} parent=1 // pred_region
      _
    $region25: #{tpu_custom_call.1} parent=1 // pred_fallthru
      _
    // Predicated region
    $region26: #{tpu_custom_call.1} parent=1 // pred_check
      _
    $region27: #{tpu_custom_call.1} parent=1 // pred_check_branch
      %59 = sbr.rel (0) target = $region29
    $region28: #{tpu_custom_call.1} parent=1 // pred_region
      _
    $region29: #{tpu_custom_call.1} parent=1 // pred_fallthru
      _
    // Predicated region
    $region30: #{tpu_custom_call.1} parent=1 // pred_check
      _
    $region31: #{tpu_custom_call.1} parent=1 // pred_check_branch
      %61 = sbr.rel (0) target = $region33
    $region32: #{tpu_custom_call.1} parent=1 // pred_region
      %s63 = ssub.s32 2048, 2048
      %64 = vsyncadd [#allocation9], %s63
      %s65 = sshll.u32 [#allocation8], 4
      %s66 = int_to_ptr.vmem [resolvable:$true] %s65
      %71 = dma.hbm_to_vmem [thread:$0]  %s7, 2048, %s66, [#allocation9], 64, 64, 4
    $region33: #{tpu_custom_call.1} parent=1 // pred_fallthru
      _
    // Predicated region
    $region34: #{tpu_custom_call.1} parent=1 // pred_check
      _
    $region35: #{tpu_custom_call.1} parent=1 // pred_check_branch
      %73 = sbr.rel (0) target = $region37
    $region36: #{tpu_custom_call.1} parent=1 // pred_region
      _
    $region37: #{tpu_custom_call.1} parent=1 // pred_fallthru
      _
    // Predicated region
    $region38: #{tpu_custom_call.1} parent=1 // pred_check
      _
    $region39: #{tpu_custom_call.1} parent=1 // pred_check_branch
      %75 = sbr.rel (0) target = $region41
    $region40: #{tpu_custom_call.1} parent=1 // pred_region
      %76 = dma.done [#allocation3], 128
    $region41: #{tpu_custom_call.1} parent=1 // pred_fallthru
      _
    // Predicated region
    $region42: #{tpu_custom_call.1} parent=1 // pred_check
      _
    $region43: #{tpu_custom_call.1} parent=1 // pred_check_branch
      %78 = sbr.rel (0) target = $region45
    $region44: #{tpu_custom_call.1} parent=1 // pred_region
      %79 = dma.done [#allocation6], 20480
    $region45: #{tpu_custom_call.1} parent=1 // pred_fallthru
      _
    // Predicated region
    $region46: #{tpu_custom_call.1} parent=1 // pred_check
      _
    $region47: #{tpu_custom_call.1} parent=1 // pred_check_branch
      %81 = sbr.rel (0) target = $region49
    $region48: #{tpu_custom_call.1} parent=1 // pred_region
      %82 = dma.done [#allocation6], 20480
    $region49: #{tpu_custom_call.1} parent=1 // pred_fallthru
      _
    // Predicated region
    $region50: #{tpu_custom_call.1} parent=1 // pred_check
      _
    $region51: #{tpu_custom_call.1} parent=1 // pred_check_branch
      %84 = sbr.rel (0) target = $region53
    $region52: #{tpu_custom_call.1} parent=1 // pred_region
      %85 = dma.done [#allocation9], 2048
    $region53: #{tpu_custom_call.1} parent=1 // pred_fallthru
      _
    %v87 = vld [vmem:[%s0] sm:$0xff]
    %v88 = vld [vmem:[#allocation2] sm:$0x77]
    %90 = vset.pattern.permute.xlu0 0
    %91 = vperm.xlu0 %90, %v87
    %v92 = vpop.permute.xlu0 %91
    %v95 = vlaneseq
    %v96 = vshrl.u32 %v95, 7
    %v97 = vsub.s32 0, %v96
    %v98 = vrot.slane %v88, %v97
    %v99 = vlaneseq
    %v100 = vshrl.u32 %v99, 7
    %v101 = vsub.s32 4, %v100
    %v102 = vrot.slane %v88, %v101
    %v105 = vlaneseq
    %v106 = vshrl.u32 %v105, 7
    %v107 = vsub.s32 0, %v106
    %v108 = vrot.slane %v98, %v107
    %v109 = vlaneseq
    %v110 = vshrl.u32 %v109, 7
    %v111 = vsub.s32 0, %v110
    %v112 = vrot.slane %v102, %v111
    %v113 = vmul.f32 %v92, %v108
    %v114 = vmul.f32 %v92, %v112
    %115 = vset.pattern.permute.xlu0 1
    %116 = vperm.xlu0 %115, %v87
    %v117 = vpop.permute.xlu0 %116
    %v119 = vlaneseq
    %v120 = vshrl.u32 %v119, 7
    %v121 = vsub.s32 1, %v120
    %v122 = vrot.slane %v88, %v121
    %v123 = vlaneseq
    %v124 = vshrl.u32 %v123, 7
    %v125 = vsub.s32 5, %v124
    %v126 = vrot.slane %v88, %v125
    %v129 = vlaneseq
    %v130 = vshrl.u32 %v129, 7
    %v131 = vsub.s32 1, %v130
    %v132 = vrot.slane %v122, %v131
    %v133 = vlaneseq
    %v134 = vshrl.u32 %v133, 7
    %v135 = vsub.s32 1, %v134
    %v136 = vrot.slane %v126, %v135
    %v137 = vmul.f32 %v117, %v132
    %v138 = vmul.f32 %v117, %v136
    %v139 = vadd.f32 %v113, %v137
    %v140 = vadd.f32 %v114, %v138
    %141 = vset.pattern.permute.xlu0 2
    %142 = vperm.xlu0 %141, %v87
    %v143 = vpop.permute.xlu0 %142
    %v145 = vlaneseq
    %v146 = vshrl.u32 %v145, 7
    %v147 = vsub.s32 2, %v146
    %v148 = vrot.slane %v88, %v147
    %v149 = vlaneseq
    %v150 = vshrl.u32 %v149, 7
    %v151 = vsub.s32 6, %v150
    %v152 = vrot.slane %v88, %v151
    %v155 = vlaneseq
    %v156 = vshrl.u32 %v155, 7
    %v157 = vsub.s32 2, %v156
    %v158 = vrot.slane %v148, %v157
    %v159 = vlaneseq
    %v160 = vshrl.u32 %v159, 7
    %v161 = vsub.s32 2, %v160
    %v162 = vrot.slane %v152, %v161
    %v163 = vmul.f32 %v143, %v158
    %v164 = vmul.f32 %v143, %v162
    %v165 = vadd.f32 %v139, %v163
    %v166 = vadd.f32 %v140, %v164
    %v167 = vld [vmem:[%s2] sm:$0x3]
    %v169 = vlaneseq
    %v170 = vshrl.u32 %v169, 7
    %v171 = vsub.s32 0, %v170
    %v172 = vrot.slane %v167, %v171
    %v173 = vlaneseq
    %v174 = vshrl.u32 %v173, 7
    %v175 = vsub.s32 1, %v174
    %v176 = vrot.slane %v167, %v175
    %v179 = vadd.f32 %v165, %v172
    %v180 = vadd.f32 %v166, %v176
    %v181 = vmax.f32 %v179, 0.0
    %v182 = vmax.f32 %v180, 0.0
    %v183 = vpack.c.bf16 %v181, %v181
    %v184 = vpack.c.bf16 %v182, %v182
    %v185 = vld [vmem:[#allocation5] sm:$0xff]
    %v186 = vld [vmem:[#allocation5 + $0x8] sm:$0xff]
    %v187 = vld [vmem:[#allocation5 + $0x10] sm:$0xff]
    %v188 = vld [vmem:[#allocation5 + $0x18] sm:$0xff]
    %v189 = vld [vmem:[#allocation5 + $0x20] sm:$0xff]
    %v190 = vld [vmem:[#allocation5 + $0x28] sm:$0xff]
    %v191 = vld [vmem:[#allocation5 + $0x30] sm:$0xff]
    %v192 = vld [vmem:[#allocation5 + $0x38] sm:$0xff]
    %v193 = vld [vmem:[#allocation5 + $0x40] sm:$0xff]
    %v194 = vld [vmem:[#allocation5 + $0x48] sm:$0xff]
    %v195 = vld [vmem:[#allocation5 + $0x50] sm:$0xff]
    %v196 = vld [vmem:[#allocation5 + $0x58] sm:$0xff]
    %v197 = vld [vmem:[#allocation5 + $0x60] sm:$0xff]
    %v198 = vld [vmem:[#allocation5 + $0x68] sm:$0xff]
    %v199 = vld [vmem:[#allocation5 + $0x70] sm:$0xff]
    %v200 = vld [vmem:[#allocation5 + $0x78] sm:$0xff]
    %v201 = vld [vmem:[#allocation5 + $0x80] sm:$0xff]
    %v202 = vld [vmem:[#allocation5 + $0x88] sm:$0xff]
    %v203 = vld [vmem:[#allocation5 + $0x90] sm:$0xff]
    %v204 = vld [vmem:[#allocation5 + $0x98] sm:$0xff]
    %v205 = vld [vmem:[#allocation5 + $0xa0] sm:$0xff]
    %v206 = vld [vmem:[#allocation5 + $0xa8] sm:$0xff]
    %v207 = vld [vmem:[#allocation5 + $0xb0] sm:$0xff]
    %v208 = vld [vmem:[#allocation5 + $0xb8] sm:$0xff]
    %v209 = vld [vmem:[#allocation5 + $0xc0] sm:$0xff]
    %v210 = vld [vmem:[#allocation5 + $0xc8] sm:$0xff]
    %v211 = vld [vmem:[#allocation5 + $0xd0] sm:$0xff]
    %v212 = vld [vmem:[#allocation5 + $0xd8] sm:$0xff]
    %v213 = vld [vmem:[#allocation5 + $0xe0] sm:$0xff]
    %v214 = vld [vmem:[#allocation5 + $0xe8] sm:$0xff]
    %v215 = vld [vmem:[#allocation5 + $0xf0] sm:$0xff]
    %v216 = vld [vmem:[#allocation5 + $0xf8] sm:$0xff]
    %v217 = vld [vmem:[%s5] sm:$0x3]
    %v219 = vlaneseq
    %v220 = vshrl.u32 %v219, 7
    %v221 = vsub.s32 0, %v220
    %v222 = vrot.slane %v217, %v221
    %v223 = vlaneseq
    %v224 = vshrl.u32 %v223, 7
    %v225 = vsub.s32 1, %v224
    %v226 = vrot.slane %v217, %v225
    %v261 = vunpack.c.l.b16 %v185
    %v262 = vunpack.c.h.b16 %v185
    %v263 = vunpack.c.l.b16 %v186
    %v264 = vunpack.c.h.b16 %v186
    %v265 = vunpack.c.l.b16 %v187
    %v266 = vunpack.c.h.b16 %v187
    %v267 = vunpack.c.l.b16 %v188
    %v268 = vunpack.c.h.b16 %v188
    %v269 = vunpack.c.l.b16 %v189
    %v270 = vunpack.c.h.b16 %v189
    %v271 = vunpack.c.l.b16 %v190
    %v272 = vunpack.c.h.b16 %v190
    %v273 = vunpack.c.l.b16 %v191
    %v274 = vunpack.c.h.b16 %v191
    %v275 = vunpack.c.l.b16 %v192
    %v276 = vunpack.c.h.b16 %v192
    %v277 = vunpack.c.l.b16 %v193
    %v278 = vunpack.c.h.b16 %v193
    %v279 = vunpack.c.l.b16 %v194
    %v280 = vunpack.c.h.b16 %v194
    %v281 = vunpack.c.l.b16 %v195
    %v282 = vunpack.c.h.b16 %v195
    %v283 = vunpack.c.l.b16 %v196
    %v284 = vunpack.c.h.b16 %v196
    %v285 = vunpack.c.l.b16 %v197
    %v286 = vunpack.c.h.b16 %v197
    %v287 = vunpack.c.l.b16 %v198
    %v288 = vunpack.c.h.b16 %v198
    %v289 = vunpack.c.l.b16 %v199
    %v290 = vunpack.c.h.b16 %v199
    %v291 = vunpack.c.l.b16 %v200
    %v292 = vunpack.c.h.b16 %v200
    %v293 = vunpack.c.l.b16 %v201
    %v294 = vunpack.c.h.b16 %v201
    %v295 = vunpack.c.l.b16 %v202
    %v296 = vunpack.c.h.b16 %v202
    %v297 = vunpack.c.l.b16 %v203
    %v298 = vunpack.c.h.b16 %v203
    %v299 = vunpack.c.l.b16 %v204
    %v300 = vunpack.c.h.b16 %v204
    %v301 = vunpack.c.l.b16 %v205
    %v302 = vunpack.c.h.b16 %v205
    %v303 = vunpack.c.l.b16 %v206
    %v304 = vunpack.c.h.b16 %v206
    %v305 = vunpack.c.l.b16 %v207
    %v306 = vunpack.c.h.b16 %v207
    %v307 = vunpack.c.l.b16 %v208
    %v308 = vunpack.c.h.b16 %v208
    %v309 = vunpack.c.l.b16 %v209
    %v310 = vunpack.c.h.b16 %v209
    %v311 = vunpack.c.l.b16 %v210
    %v312 = vunpack.c.h.b16 %v210
    %v313 = vunpack.c.l.b16 %v211
    %v314 = vunpack.c.h.b16 %v211
    %v315 = vunpack.c.l.b16 %v212
    %v316 = vunpack.c.h.b16 %v212
    %v317 = vunpack.c.l.b16 %v213
    %v318 = vunpack.c.h.b16 %v213
    %v319 = vunpack.c.l.b16 %v214
    %v320 = vunpack.c.h.b16 %v214
    %v321 = vunpack.c.l.b16 %v215
    %v322 = vunpack.c.h.b16 %v215
    %v323 = vunpack.c.l.b16 %v216
    %v324 = vunpack.c.h.b16 %v216
    %v325 = vpack.c.b16 %v263, %v261
    %v326 = vpack.c.b16 %v264, %v262
    %v327 = vpack.c.b16 %v267, %v265
    %v328 = vpack.c.b16 %v268, %v266
    %v329 = vpack.c.b16 %v271, %v269
    %v330 = vpack.c.b16 %v272, %v270
    %v331 = vpack.c.b16 %v275, %v273
    %v332 = vpack.c.b16 %v276, %v274
    %v333 = vpack.c.b16 %v279, %v277
    %v334 = vpack.c.b16 %v280, %v278
    %v335 = vpack.c.b16 %v283, %v281
    %v336 = vpack.c.b16 %v284, %v282
    %v337 = vpack.c.b16 %v287, %v285
    %v338 = vpack.c.b16 %v288, %v286
    %v339 = vpack.c.b16 %v291, %v289
    %v340 = vpack.c.b16 %v292, %v290
    %v341 = vpack.c.b16 %v295, %v293
    %v342 = vpack.c.b16 %v296, %v294
    %v343 = vpack.c.b16 %v299, %v297
    %v344 = vpack.c.b16 %v300, %v298
    %v345 = vpack.c.b16 %v303, %v301
    %v346 = vpack.c.b16 %v304, %v302
    %v347 = vpack.c.b16 %v307, %v305
    %v348 = vpack.c.b16 %v308, %v306
    %v349 = vpack.c.b16 %v311, %v309
    %v350 = vpack.c.b16 %v312, %v310
    %v351 = vpack.c.b16 %v315, %v313
    %v352 = vpack.c.b16 %v316, %v314
    %v353 = vpack.c.b16 %v319, %v317
    %v354 = vpack.c.b16 %v320, %v318
    %v355 = vpack.c.b16 %v323, %v321
    %v356 = vpack.c.b16 %v324, %v322
    %389 = vmatprep.subr.bf16.mxu0 %v326
    %390 = vmatpush1.bf16.msra.mxu0 %v325
    %391 = vmatprep.subr.bf16.mxu0 %v328
    %392 = vmatpush1.bf16.msra.mxu0 %v327
    %393 = vmatprep.subr.bf16.mxu0 %v330
    %394 = vmatpush1.bf16.msra.mxu0 %v329
    %395 = vmatprep.subr.bf16.mxu0 %v332
    %396 = vmatpush1.bf16.msra.mxu0 %v331
    %397 = vmatprep.subr.bf16.mxu0 %v334
    %398 = vmatpush1.bf16.msra.mxu0 %v333
    %399 = vmatprep.subr.bf16.mxu0 %v336
    %400 = vmatpush1.bf16.msra.mxu0 %v335
    %401 = vmatprep.subr.bf16.mxu0 %v338
    %402 = vmatpush1.bf16.msra.mxu0 %v337
    %403 = vmatprep.subr.bf16.mxu0 %v340
    %404 = vmatpush1.bf16.msra.mxu0 %v339
    %405 = vmatprep.subr.bf16.mxu0 %v342
    %406 = vmatpush1.bf16.msra.mxu0 %v341
    %407 = vmatprep.subr.bf16.mxu0 %v344
    %408 = vmatpush1.bf16.msra.mxu0 %v343
    %409 = vmatprep.subr.bf16.mxu0 %v346
    %410 = vmatpush1.bf16.msra.mxu0 %v345
    %411 = vmatprep.subr.bf16.mxu0 %v348
    %412 = vmatpush1.bf16.msra.mxu0 %v347
    %413 = vmatprep.subr.bf16.mxu0 %v350
    %414 = vmatpush1.bf16.msra.mxu0 %v349
    %415 = vmatprep.subr.bf16.mxu0 %v352
    %416 = vmatpush1.bf16.msra.mxu0 %v351
    %417 = vmatprep.subr.bf16.mxu0 %v354
    %418 = vmatpush1.bf16.msra.mxu0 %v353
    %419 = vmatprep.subr.bf16.mxu0 %v356
    %420 = vmatpush1.bf16.msra.mxu0 %v355
    %421 = vmatprep.mubr.bf16.mxu0 %v184
    %422 = vmatmul.mubr.bf16.gmra.mrb[0].mxu0 %v183
    %v423 = vpop.f32.mrb[0].mxu0
    %v424 = vadd.f32 %v222, %v423
    %v425 = vpop.f32.mrb[0].mxu0
    %v426 = vadd.f32 %v226, %v425
    %v427 = vpop.f32.mrb[0].mxu0
    %v428 = vpop.f32.mrb[0].mxu0
    %429 = vdwg.mxu0
    %v430 = vmax.f32 %v424, 0.0
    %v431 = vmax.f32 %v426, 0.0
    %v432 = vpack.c.bf16 %v430, %v430
    %v433 = vpack.c.bf16 %v431, %v431
    %v434 = vld [vmem:[#allocation7] sm:$0xff]
    %v435 = vld [vmem:[#allocation7 + $0x8] sm:$0xff]
    %v436 = vld [vmem:[#allocation7 + $0x10] sm:$0xff]
    %v437 = vld [vmem:[#allocation7 + $0x18] sm:$0xff]
    %v438 = vld [vmem:[#allocation7 + $0x20] sm:$0xff]
    %v439 = vld [vmem:[#allocation7 + $0x28] sm:$0xff]
    %v440 = vld [vmem:[#allocation7 + $0x30] sm:$0xff]
    %v441 = vld [vmem:[#allocation7 + $0x38] sm:$0xff]
    %v442 = vld [vmem:[#allocation7 + $0x40] sm:$0xff]
    %v443 = vld [vmem:[#allocation7 + $0x48] sm:$0xff]
    %v444 = vld [vmem:[#allocation7 + $0x50] sm:$0xff]
    %v445 = vld [vmem:[#allocation7 + $0x58] sm:$0xff]
    %v446 = vld [vmem:[#allocation7 + $0x60] sm:$0xff]
    %v447 = vld [vmem:[#allocation7 + $0x68] sm:$0xff]
    %v448 = vld [vmem:[#allocation7 + $0x70] sm:$0xff]
    %v449 = vld [vmem:[#allocation7 + $0x78] sm:$0xff]
    %v450 = vld [vmem:[#allocation7 + $0x80] sm:$0xff]
    %v451 = vld [vmem:[#allocation7 + $0x88] sm:$0xff]
    %v452 = vld [vmem:[#allocation7 + $0x90] sm:$0xff]
    %v453 = vld [vmem:[#allocation7 + $0x98] sm:$0xff]
    %v454 = vld [vmem:[#allocation7 + $0xa0] sm:$0xff]
    %v455 = vld [vmem:[#allocation7 + $0xa8] sm:$0xff]
    %v456 = vld [vmem:[#allocation7 + $0xb0] sm:$0xff]
    %v457 = vld [vmem:[#allocation7 + $0xb8] sm:$0xff]
    %v458 = vld [vmem:[#allocation7 + $0xc0] sm:$0xff]
    %v459 = vld [vmem:[#allocation7 + $0xc8] sm:$0xff]
    %v460 = vld [vmem:[#allocation7 + $0xd0] sm:$0xff]
    %v461 = vld [vmem:[#allocation7 + $0xd8] sm:$0xff]
    %v462 = vld [vmem:[#allocation7 + $0xe0] sm:$0xff]
    %v463 = vld [vmem:[#allocation7 + $0xe8] sm:$0xff]
    %v464 = vld [vmem:[#allocation7 + $0xf0] sm:$0xff]
    %v465 = vld [vmem:[#allocation7 + $0xf8] sm:$0xff]
    %v466 = vld [vmem:[%s6] sm:$0x3]
    %v468 = vlaneseq
    %v469 = vshrl.u32 %v468, 7
    %v470 = vsub.s32 0, %v469
    %v471 = vrot.slane %v466, %v470
    %v472 = vlaneseq
    %v473 = vshrl.u32 %v472, 7
    %v474 = vsub.s32 1, %v473
    %v475 = vrot.slane %v466, %v474
    %v510 = vunpack.c.l.b16 %v434
    %v511 = vunpack.c.h.b16 %v434
    %v512 = vunpack.c.l.b16 %v435
    %v513 = vunpack.c.h.b16 %v435
    %v514 = vunpack.c.l.b16 %v436
    %v515 = vunpack.c.h.b16 %v436
    %v516 = vunpack.c.l.b16 %v437
    %v517 = vunpack.c.h.b16 %v437
    %v518 = vunpack.c.l.b16 %v438
    %v519 = vunpack.c.h.b16 %v438
    %v520 = vunpack.c.l.b16 %v439
    %v521 = vunpack.c.h.b16 %v439
    %v522 = vunpack.c.l.b16 %v440
    %v523 = vunpack.c.h.b16 %v440
    %v524 = vunpack.c.l.b16 %v441
    %v525 = vunpack.c.h.b16 %v441
    %v526 = vunpack.c.l.b16 %v442
    %v527 = vunpack.c.h.b16 %v442
    %v528 = vunpack.c.l.b16 %v443
    %v529 = vunpack.c.h.b16 %v443
    %v530 = vunpack.c.l.b16 %v444
    %v531 = vunpack.c.h.b16 %v444
    %v532 = vunpack.c.l.b16 %v445
    %v533 = vunpack.c.h.b16 %v445
    %v534 = vunpack.c.l.b16 %v446
    %v535 = vunpack.c.h.b16 %v446
    %v536 = vunpack.c.l.b16 %v447
    %v537 = vunpack.c.h.b16 %v447
    %v538 = vunpack.c.l.b16 %v448
    %v539 = vunpack.c.h.b16 %v448
    %v540 = vunpack.c.l.b16 %v449
    %v541 = vunpack.c.h.b16 %v449
    %v542 = vunpack.c.l.b16 %v450
    %v543 = vunpack.c.h.b16 %v450
    %v544 = vunpack.c.l.b16 %v451
    %v545 = vunpack.c.h.b16 %v451
    %v546 = vunpack.c.l.b16 %v452
    %v547 = vunpack.c.h.b16 %v452
    %v548 = vunpack.c.l.b16 %v453
    %v549 = vunpack.c.h.b16 %v453
    %v550 = vunpack.c.l.b16 %v454
    %v551 = vunpack.c.h.b16 %v454
    %v552 = vunpack.c.l.b16 %v455
    %v553 = vunpack.c.h.b16 %v455
    %v554 = vunpack.c.l.b16 %v456
    %v555 = vunpack.c.h.b16 %v456
    %v556 = vunpack.c.l.b16 %v457
    %v557 = vunpack.c.h.b16 %v457
    %v558 = vunpack.c.l.b16 %v458
    %v559 = vunpack.c.h.b16 %v458
    %v560 = vunpack.c.l.b16 %v459
    %v561 = vunpack.c.h.b16 %v459
    %v562 = vunpack.c.l.b16 %v460
    %v563 = vunpack.c.h.b16 %v460
    %v564 = vunpack.c.l.b16 %v461
    %v565 = vunpack.c.h.b16 %v461
    %v566 = vunpack.c.l.b16 %v462
    %v567 = vunpack.c.h.b16 %v462
    %v568 = vunpack.c.l.b16 %v463
    %v569 = vunpack.c.h.b16 %v463
    %v570 = vunpack.c.l.b16 %v464
    %v571 = vunpack.c.h.b16 %v464
    %v572 = vunpack.c.l.b16 %v465
    %v573 = vunpack.c.h.b16 %v465
    %v574 = vpack.c.b16 %v512, %v510
    %v575 = vpack.c.b16 %v513, %v511
    %v576 = vpack.c.b16 %v516, %v514
    %v577 = vpack.c.b16 %v517, %v515
    %v578 = vpack.c.b16 %v520, %v518
    %v579 = vpack.c.b16 %v521, %v519
    %v580 = vpack.c.b16 %v524, %v522
    %v581 = vpack.c.b16 %v525, %v523
    %v582 = vpack.c.b16 %v528, %v526
    %v583 = vpack.c.b16 %v529, %v527
    %v584 = vpack.c.b16 %v532, %v530
    %v585 = vpack.c.b16 %v533, %v531
    %v586 = vpack.c.b16 %v536, %v534
    %v587 = vpack.c.b16 %v537, %v535
    %v588 = vpack.c.b16 %v540, %v538
    %v589 = vpack.c.b16 %v541, %v539
    %v590 = vpack.c.b16 %v544, %v542
    %v591 = vpack.c.b16 %v545, %v543
    %v592 = vpack.c.b16 %v548, %v546
    %v593 = vpack.c.b16 %v549, %v547
    %v594 = vpack.c.b16 %v552, %v550
    %v595 = vpack.c.b16 %v553, %v551
    %v596 = vpack.c.b16 %v556, %v554
    %v597 = vpack.c.b16 %v557, %v555
    %v598 = vpack.c.b16 %v560, %v558
    %v599 = vpack.c.b16 %v561, %v559
    %v600 = vpack.c.b16 %v564, %v562
    %v601 = vpack.c.b16 %v565, %v563
    %v602 = vpack.c.b16 %v568, %v566
    %v603 = vpack.c.b16 %v569, %v567
    %v604 = vpack.c.b16 %v572, %v570
    %v605 = vpack.c.b16 %v573, %v571
    %638 = vmatprep.subr.bf16.mxu0 %v575
    %639 = vmatpush1.bf16.msra.mxu0 %v574
    %640 = vmatprep.subr.bf16.mxu0 %v577
    %641 = vmatpush1.bf16.msra.mxu0 %v576
    %642 = vmatprep.subr.bf16.mxu0 %v579
    %643 = vmatpush1.bf16.msra.mxu0 %v578
    %644 = vmatprep.subr.bf16.mxu0 %v581
    %645 = vmatpush1.bf16.msra.mxu0 %v580
    %646 = vmatprep.subr.bf16.mxu0 %v583
    %647 = vmatpush1.bf16.msra.mxu0 %v582
    %648 = vmatprep.subr.bf16.mxu0 %v585
    %649 = vmatpush1.bf16.msra.mxu0 %v584
    %650 = vmatprep.subr.bf16.mxu0 %v587
    %651 = vmatpush1.bf16.msra.mxu0 %v586
    %652 = vmatprep.subr.bf16.mxu0 %v589
    %653 = vmatpush1.bf16.msra.mxu0 %v588
    %654 = vmatprep.subr.bf16.mxu0 %v591
    %655 = vmatpush1.bf16.msra.mxu0 %v590
    %656 = vmatprep.subr.bf16.mxu0 %v593
    %657 = vmatpush1.bf16.msra.mxu0 %v592
    %658 = vmatprep.subr.bf16.mxu0 %v595
    %659 = vmatpush1.bf16.msra.mxu0 %v594
    %660 = vmatprep.subr.bf16.mxu0 %v597
    %661 = vmatpush1.bf16.msra.mxu0 %v596
    %662 = vmatprep.subr.bf16.mxu0 %v599
    %663 = vmatpush1.bf16.msra.mxu0 %v598
    %664 = vmatprep.subr.bf16.mxu0 %v601
    %665 = vmatpush1.bf16.msra.mxu0 %v600
    %666 = vmatprep.subr.bf16.mxu0 %v603
    %667 = vmatpush1.bf16.msra.mxu0 %v602
    %668 = vmatprep.subr.bf16.mxu0 %v605
    %669 = vmatpush1.bf16.msra.mxu0 %v604
    %670 = vmatprep.mubr.bf16.mxu0 %v433
    %671 = vmatmul.mubr.bf16.gmra.mrb[0].mxu0 %v432
    %v672 = vpop.f32.mrb[0].mxu0
    %v673 = vadd.f32 %v471, %v672
    %v674 = vpop.f32.mrb[0].mxu0
    %v675 = vadd.f32 %v475, %v674
    %v676 = vpop.f32.mrb[0].mxu0
    %v677 = vpop.f32.mrb[0].mxu0
    %678 = vdwg.mxu0
    %v679 = vadd.f32 %v673, %v181
    %v680 = vadd.f32 %v675, %v182
    %v681 = vmax.f32 %v679, 0.0
    %v682 = vmax.f32 %v680, 0.0
    %v683 = vpack.c.bf16 %v681, %v681
    %v684 = vpack.c.bf16 %v682, %v682
    %s685 = scalar_lea.vmem [#allocation5], 256
    %v686 = vld [vmem:[%s685] sm:$0xff]
    %v687 = vld [vmem:[%s685 + $0x8] sm:$0xff]
    %v688 = vld [vmem:[%s685 + $0x10] sm:$0xff]
    %v689 = vld [vmem:[%s685 + $0x18] sm:$0xff]
    %v690 = vld [vmem:[%s685 + $0x20] sm:$0xff]
    %v691 = vld [vmem:[%s685 + $0x28] sm:$0xff]
    %v692 = vld [vmem:[%s685 + $0x30] sm:$0xff]
    %v693 = vld [vmem:[%s685 + $0x38] sm:$0xff]
    %v694 = vld [vmem:[%s685 + $0x40] sm:$0xff]
    %v695 = vld [vmem:[%s685 + $0x48] sm:$0xff]
    %v696 = vld [vmem:[%s685 + $0x50] sm:$0xff]
    %v697 = vld [vmem:[%s685 + $0x58] sm:$0xff]
    %v698 = vld [vmem:[%s685 + $0x60] sm:$0xff]
    %v699 = vld [vmem:[%s685 + $0x68] sm:$0xff]
    %v700 = vld [vmem:[%s685 + $0x70] sm:$0xff]
    %v701 = vld [vmem:[%s685 + $0x78] sm:$0xff]
    %v702 = vld [vmem:[%s685 + $0x80] sm:$0xff]
    %v703 = vld [vmem:[%s685 + $0x88] sm:$0xff]
    %v704 = vld [vmem:[%s685 + $0x90] sm:$0xff]
    %v705 = vld [vmem:[%s685 + $0x98] sm:$0xff]
    %v706 = vld [vmem:[%s685 + $0xa0] sm:$0xff]
    %v707 = vld [vmem:[%s685 + $0xa8] sm:$0xff]
    %v708 = vld [vmem:[%s685 + $0xb0] sm:$0xff]
    %v709 = vld [vmem:[%s685 + $0xb8] sm:$0xff]
    %v710 = vld [vmem:[%s685 + $0xc0] sm:$0xff]
    %v711 = vld [vmem:[%s685 + $0xc8] sm:$0xff]
    %v712 = vld [vmem:[%s685 + $0xd0] sm:$0xff]
    %v713 = vld [vmem:[%s685 + $0xd8] sm:$0xff]
    %v714 = vld [vmem:[%s685 + $0xe0] sm:$0xff]
    %v715 = vld [vmem:[%s685 + $0xe8] sm:$0xff]
    %v716 = vld [vmem:[%s685 + $0xf0] sm:$0xff]
    %v717 = vld [vmem:[%s685 + $0xf8] sm:$0xff]
    %s718 = scalar_lea.vmem %s5, 2
    %v719 = vld [vmem:[%s718] sm:$0x3]
    %v721 = vlaneseq
    %v722 = vshrl.u32 %v721, 7
    %v723 = vsub.s32 0, %v722
    %v724 = vrot.slane %v719, %v723
    %v725 = vlaneseq
    %v726 = vshrl.u32 %v725, 7
    %v727 = vsub.s32 1, %v726
    %v728 = vrot.slane %v719, %v727
    %v763 = vunpack.c.l.b16 %v686
    %v764 = vunpack.c.h.b16 %v686
    %v765 = vunpack.c.l.b16 %v687
    %v766 = vunpack.c.h.b16 %v687
    %v767 = vunpack.c.l.b16 %v688
    %v768 = vunpack.c.h.b16 %v688
    %v769 = vunpack.c.l.b16 %v689
    %v770 = vunpack.c.h.b16 %v689
    %v771 = vunpack.c.l.b16 %v690
    %v772 = vunpack.c.h.b16 %v690
    %v773 = vunpack.c.l.b16 %v691
    %v774 = vunpack.c.h.b16 %v691
    %v775 = vunpack.c.l.b16 %v692
    %v776 = vunpack.c.h.b16 %v692
    %v777 = vunpack.c.l.b16 %v693
    %v778 = vunpack.c.h.b16 %v693
    %v779 = vunpack.c.l.b16 %v694
    %v780 = vunpack.c.h.b16 %v694
    %v781 = vunpack.c.l.b16 %v695
    %v782 = vunpack.c.h.b16 %v695
    %v783 = vunpack.c.l.b16 %v696
    %v784 = vunpack.c.h.b16 %v696
    %v785 = vunpack.c.l.b16 %v697
    %v786 = vunpack.c.h.b16 %v697
    %v787 = vunpack.c.l.b16 %v698
    %v788 = vunpack.c.h.b16 %v698
    %v789 = vunpack.c.l.b16 %v699
    %v790 = vunpack.c.h.b16 %v699
    %v791 = vunpack.c.l.b16 %v700
    %v792 = vunpack.c.h.b16 %v700
    %v793 = vunpack.c.l.b16 %v701
    %v794 = vunpack.c.h.b16 %v701
    %v795 = vunpack.c.l.b16 %v702
    %v796 = vunpack.c.h.b16 %v702
    %v797 = vunpack.c.l.b16 %v703
    %v798 = vunpack.c.h.b16 %v703
    %v799 = vunpack.c.l.b16 %v704
    %v800 = vunpack.c.h.b16 %v704
    %v801 = vunpack.c.l.b16 %v705
    %v802 = vunpack.c.h.b16 %v705
    %v803 = vunpack.c.l.b16 %v706
    %v804 = vunpack.c.h.b16 %v706
    %v805 = vunpack.c.l.b16 %v707
    %v806 = vunpack.c.h.b16 %v707
    %v807 = vunpack.c.l.b16 %v708
    %v808 = vunpack.c.h.b16 %v708
    %v809 = vunpack.c.l.b16 %v709
    %v810 = vunpack.c.h.b16 %v709
    %v811 = vunpack.c.l.b16 %v710
    %v812 = vunpack.c.h.b16 %v710
    %v813 = vunpack.c.l.b16 %v711
    %v814 = vunpack.c.h.b16 %v711
    %v815 = vunpack.c.l.b16 %v712
    %v816 = vunpack.c.h.b16 %v712
    %v817 = vunpack.c.l.b16 %v713
    %v818 = vunpack.c.h.b16 %v713
    %v819 = vunpack.c.l.b16 %v714
    %v820 = vunpack.c.h.b16 %v714
    %v821 = vunpack.c.l.b16 %v715
    %v822 = vunpack.c.h.b16 %v715
    %v823 = vunpack.c.l.b16 %v716
    %v824 = vunpack.c.h.b16 %v716
    %v825 = vunpack.c.l.b16 %v717
    %v826 = vunpack.c.h.b16 %v717
    %v827 = vpack.c.b16 %v765, %v763
    %v828 = vpack.c.b16 %v766, %v764
    %v829 = vpack.c.b16 %v769, %v767
    %v830 = vpack.c.b16 %v770, %v768
    %v831 = vpack.c.b16 %v773, %v771
    %v832 = vpack.c.b16 %v774, %v772
    %v833 = vpack.c.b16 %v777, %v775
    %v834 = vpack.c.b16 %v778, %v776
    %v835 = vpack.c.b16 %v781, %v779
    %v836 = vpack.c.b16 %v782, %v780
    %v837 = vpack.c.b16 %v785, %v783
    %v838 = vpack.c.b16 %v786, %v784
    %v839 = vpack.c.b16 %v789, %v787
    %v840 = vpack.c.b16 %v790, %v788
    %v841 = vpack.c.b16 %v793, %v791
    %v842 = vpack.c.b16 %v794, %v792
    %v843 = vpack.c.b16 %v797, %v795
    %v844 = vpack.c.b16 %v798, %v796
    %v845 = vpack.c.b16 %v801, %v799
    %v846 = vpack.c.b16 %v802, %v800
    %v847 = vpack.c.b16 %v805, %v803
    %v848 = vpack.c.b16 %v806, %v804
    %v849 = vpack.c.b16 %v809, %v807
    %v850 = vpack.c.b16 %v810, %v808
    %v851 = vpack.c.b16 %v813, %v811
    %v852 = vpack.c.b16 %v814, %v812
    %v853 = vpack.c.b16 %v817, %v815
    %v854 = vpack.c.b16 %v818, %v816
    %v855 = vpack.c.b16 %v821, %v819
    %v856 = vpack.c.b16 %v822, %v820
    %v857 = vpack.c.b16 %v825, %v823
    %v858 = vpack.c.b16 %v826, %v824
    %891 = vmatprep.subr.bf16.mxu0 %v828
    %892 = vmatpush1.bf16.msra.mxu0 %v827
    %893 = vmatprep.subr.bf16.mxu0 %v830
    %894 = vmatpush1.bf16.msra.mxu0 %v829
    %895 = vmatprep.subr.bf16.mxu0 %v832
    %896 = vmatpush1.bf16.msra.mxu0 %v831
    %897 = vmatprep.subr.bf16.mxu0 %v834
    %898 = vmatpush1.bf16.msra.mxu0 %v833
    %899 = vmatprep.subr.bf16.mxu0 %v836
    %900 = vmatpush1.bf16.msra.mxu0 %v835
    %901 = vmatprep.subr.bf16.mxu0 %v838
    %902 = vmatpush1.bf16.msra.mxu0 %v837
    %903 = vmatprep.subr.bf16.mxu0 %v840
    %904 = vmatpush1.bf16.msra.mxu0 %v839
    %905 = vmatprep.subr.bf16.mxu0 %v842
    %906 = vmatpush1.bf16.msra.mxu0 %v841
    %907 = vmatprep.subr.bf16.mxu0 %v844
    %908 = vmatpush1.bf16.msra.mxu0 %v843
    %909 = vmatprep.subr.bf16.mxu0 %v846
    %910 = vmatpush1.bf16.msra.mxu0 %v845
    %911 = vmatprep.subr.bf16.mxu0 %v848
    %912 = vmatpush1.bf16.msra.mxu0 %v847
    %913 = vmatprep.subr.bf16.mxu0 %v850
    %914 = vmatpush1.bf16.msra.mxu0 %v849
    %915 = vmatprep.subr.bf16.mxu0 %v852
    %916 = vmatpush1.bf16.msra.mxu0 %v851
    %917 = vmatprep.subr.bf16.mxu0 %v854
    %918 = vmatpush1.bf16.msra.mxu0 %v853
    %919 = vmatprep.subr.bf16.mxu0 %v856
    %920 = vmatpush1.bf16.msra.mxu0 %v855
    %921 = vmatprep.subr.bf16.mxu0 %v858
    %922 = vmatpush1.bf16.msra.mxu0 %v857
    %923 = vmatprep.mubr.bf16.mxu0 %v684
    %924 = vmatmul.mubr.bf16.gmra.mrb[0].mxu0 %v683
    %v925 = vpop.f32.mrb[0].mxu0
    %v926 = vadd.f32 %v724, %v925
    %v927 = vpop.f32.mrb[0].mxu0
    %v928 = vadd.f32 %v728, %v927
    %v929 = vpop.f32.mrb[0].mxu0
    %v930 = vpop.f32.mrb[0].mxu0
    %931 = vdwg.mxu0
    %v932 = vmax.f32 %v926, 0.0
    %v933 = vmax.f32 %v928, 0.0
    %v934 = vpack.c.bf16 %v932, %v932
    %v935 = vpack.c.bf16 %v933, %v933
    %s936 = scalar_lea.vmem [#allocation7], 256
    %v937 = vld [vmem:[%s936] sm:$0xff]
    %v938 = vld [vmem:[%s936 + $0x8] sm:$0xff]
    %v939 = vld [vmem:[%s936 + $0x10] sm:$0xff]
    %v940 = vld [vmem:[%s936 + $0x18] sm:$0xff]
    %v941 = vld [vmem:[%s936 + $0x20] sm:$0xff]
    %v942 = vld [vmem:[%s936 + $0x28] sm:$0xff]
    %v943 = vld [vmem:[%s936 + $0x30] sm:$0xff]
    %v944 = vld [vmem:[%s936 + $0x38] sm:$0xff]
    %v945 = vld [vmem:[%s936 + $0x40] sm:$0xff]
    %v946 = vld [vmem:[%s936 + $0x48] sm:$0xff]
    %v947 = vld [vmem:[%s936 + $0x50] sm:$0xff]
    %v948 = vld [vmem:[%s936 + $0x58] sm:$0xff]
    %v949 = vld [vmem:[%s936 + $0x60] sm:$0xff]
    %v950 = vld [vmem:[%s936 + $0x68] sm:$0xff]
    %v951 = vld [vmem:[%s936 + $0x70] sm:$0xff]
    %v952 = vld [vmem:[%s936 + $0x78] sm:$0xff]
    %v953 = vld [vmem:[%s936 + $0x80] sm:$0xff]
    %v954 = vld [vmem:[%s936 + $0x88] sm:$0xff]
    %v955 = vld [vmem:[%s936 + $0x90] sm:$0xff]
    %v956 = vld [vmem:[%s936 + $0x98] sm:$0xff]
    %v957 = vld [vmem:[%s936 + $0xa0] sm:$0xff]
    %v958 = vld [vmem:[%s936 + $0xa8] sm:$0xff]
    %v959 = vld [vmem:[%s936 + $0xb0] sm:$0xff]
    %v960 = vld [vmem:[%s936 + $0xb8] sm:$0xff]
    %v961 = vld [vmem:[%s936 + $0xc0] sm:$0xff]
    %v962 = vld [vmem:[%s936 + $0xc8] sm:$0xff]
    %v963 = vld [vmem:[%s936 + $0xd0] sm:$0xff]
    %v964 = vld [vmem:[%s936 + $0xd8] sm:$0xff]
    %v965 = vld [vmem:[%s936 + $0xe0] sm:$0xff]
    %v966 = vld [vmem:[%s936 + $0xe8] sm:$0xff]
    %v967 = vld [vmem:[%s936 + $0xf0] sm:$0xff]
    %v968 = vld [vmem:[%s936 + $0xf8] sm:$0xff]
    %s969 = scalar_lea.vmem %s6, 2
    %v970 = vld [vmem:[%s969] sm:$0x3]
    %v972 = vlaneseq
    %v973 = vshrl.u32 %v972, 7
    %v974 = vsub.s32 0, %v973
    %v975 = vrot.slane %v970, %v974
    %v976 = vlaneseq
    %v977 = vshrl.u32 %v976, 7
    %v978 = vsub.s32 1, %v977
    %v979 = vrot.slane %v970, %v978
    %v1014 = vunpack.c.l.b16 %v937
    %v1015 = vunpack.c.h.b16 %v937
    %v1016 = vunpack.c.l.b16 %v938
    %v1017 = vunpack.c.h.b16 %v938
    %v1018 = vunpack.c.l.b16 %v939
    %v1019 = vunpack.c.h.b16 %v939
    %v1020 = vunpack.c.l.b16 %v940
    %v1021 = vunpack.c.h.b16 %v940
    %v1022 = vunpack.c.l.b16 %v941
    %v1023 = vunpack.c.h.b16 %v941
    %v1024 = vunpack.c.l.b16 %v942
    %v1025 = vunpack.c.h.b16 %v942
    %v1026 = vunpack.c.l.b16 %v943
    %v1027 = vunpack.c.h.b16 %v943
    %v1028 = vunpack.c.l.b16 %v944
    %v1029 = vunpack.c.h.b16 %v944
    %v1030 = vunpack.c.l.b16 %v945
    %v1031 = vunpack.c.h.b16 %v945
    %v1032 = vunpack.c.l.b16 %v946
    %v1033 = vunpack.c.h.b16 %v946
    %v1034 = vunpack.c.l.b16 %v947
    %v1035 = vunpack.c.h.b16 %v947
    %v1036 = vunpack.c.l.b16 %v948
    %v1037 = vunpack.c.h.b16 %v948
    %v1038 = vunpack.c.l.b16 %v949
    %v1039 = vunpack.c.h.b16 %v949
    %v1040 = vunpack.c.l.b16 %v950
    %v1041 = vunpack.c.h.b16 %v950
    %v1042 = vunpack.c.l.b16 %v951
    %v1043 = vunpack.c.h.b16 %v951
    %v1044 = vunpack.c.l.b16 %v952
    %v1045 = vunpack.c.h.b16 %v952
    %v1046 = vunpack.c.l.b16 %v953
    %v1047 = vunpack.c.h.b16 %v953
    %v1048 = vunpack.c.l.b16 %v954
    %v1049 = vunpack.c.h.b16 %v954
    %v1050 = vunpack.c.l.b16 %v955
    %v1051 = vunpack.c.h.b16 %v955
    %v1052 = vunpack.c.l.b16 %v956
    %v1053 = vunpack.c.h.b16 %v956
    %v1054 = vunpack.c.l.b16 %v957
    %v1055 = vunpack.c.h.b16 %v957
    %v1056 = vunpack.c.l.b16 %v958
    %v1057 = vunpack.c.h.b16 %v958
    %v1058 = vunpack.c.l.b16 %v959
    %v1059 = vunpack.c.h.b16 %v959
    %v1060 = vunpack.c.l.b16 %v960
    %v1061 = vunpack.c.h.b16 %v960
    %v1062 = vunpack.c.l.b16 %v961
    %v1063 = vunpack.c.h.b16 %v961
    %v1064 = vunpack.c.l.b16 %v962
    %v1065 = vunpack.c.h.b16 %v962
    %v1066 = vunpack.c.l.b16 %v963
    %v1067 = vunpack.c.h.b16 %v963
    %v1068 = vunpack.c.l.b16 %v964
    %v1069 = vunpack.c.h.b16 %v964
    %v1070 = vunpack.c.l.b16 %v965
    %v1071 = vunpack.c.h.b16 %v965
    %v1072 = vunpack.c.l.b16 %v966
    %v1073 = vunpack.c.h.b16 %v966
    %v1074 = vunpack.c.l.b16 %v967
    %v1075 = vunpack.c.h.b16 %v967
    %v1076 = vunpack.c.l.b16 %v968
    %v1077 = vunpack.c.h.b16 %v968
    %v1078 = vpack.c.b16 %v1016, %v1014
    %v1079 = vpack.c.b16 %v1017, %v1015
    %v1080 = vpack.c.b16 %v1020, %v1018
    %v1081 = vpack.c.b16 %v1021, %v1019
    %v1082 = vpack.c.b16 %v1024, %v1022
    %v1083 = vpack.c.b16 %v1025, %v1023
    %v1084 = vpack.c.b16 %v1028, %v1026
    %v1085 = vpack.c.b16 %v1029, %v1027
    %v1086 = vpack.c.b16 %v1032, %v1030
    %v1087 = vpack.c.b16 %v1033, %v1031
    %v1088 = vpack.c.b16 %v1036, %v1034
    %v1089 = vpack.c.b16 %v1037, %v1035
    %v1090 = vpack.c.b16 %v1040, %v1038
    %v1091 = vpack.c.b16 %v1041, %v1039
    %v1092 = vpack.c.b16 %v1044, %v1042
    %v1093 = vpack.c.b16 %v1045, %v1043
    %v1094 = vpack.c.b16 %v1048, %v1046
    %v1095 = vpack.c.b16 %v1049, %v1047
    %v1096 = vpack.c.b16 %v1052, %v1050
    %v1097 = vpack.c.b16 %v1053, %v1051
    %v1098 = vpack.c.b16 %v1056, %v1054
    %v1099 = vpack.c.b16 %v1057, %v1055
    %v1100 = vpack.c.b16 %v1060, %v1058
    %v1101 = vpack.c.b16 %v1061, %v1059
    %v1102 = vpack.c.b16 %v1064, %v1062
    %v1103 = vpack.c.b16 %v1065, %v1063
    %v1104 = vpack.c.b16 %v1068, %v1066
    %v1105 = vpack.c.b16 %v1069, %v1067
    %v1106 = vpack.c.b16 %v1072, %v1070
    %v1107 = vpack.c.b16 %v1073, %v1071
    %v1108 = vpack.c.b16 %v1076, %v1074
    %v1109 = vpack.c.b16 %v1077, %v1075
    %1142 = vmatprep.subr.bf16.mxu0 %v1079
    %1143 = vmatpush1.bf16.msra.mxu0 %v1078
    %1144 = vmatprep.subr.bf16.mxu0 %v1081
    %1145 = vmatpush1.bf16.msra.mxu0 %v1080
    %1146 = vmatprep.subr.bf16.mxu0 %v1083
    %1147 = vmatpush1.bf16.msra.mxu0 %v1082
    %1148 = vmatprep.subr.bf16.mxu0 %v1085
    %1149 = vmatpush1.bf16.msra.mxu0 %v1084
    %1150 = vmatprep.subr.bf16.mxu0 %v1087
    %1151 = vmatpush1.bf16.msra.mxu0 %v1086
    %1152 = vmatprep.subr.bf16.mxu0 %v1089
    %1153 = vmatpush1.bf16.msra.mxu0 %v1088
    %1154 = vmatprep.subr.bf16.mxu0 %v1091
    %1155 = vmatpush1.bf16.msra.mxu0 %v1090
    %1156 = vmatprep.subr.bf16.mxu0 %v1093
    %1157 = vmatpush1.bf16.msra.mxu0 %v1092
    %1158 = vmatprep.subr.bf16.mxu0 %v1095
    %1159 = vmatpush1.bf16.msra.mxu0 %v1094
    %1160 = vmatprep.subr.bf16.mxu0 %v1097
    %1161 = vmatpush1.bf16.msra.mxu0 %v1096
    %1162 = vmatprep.subr.bf16.mxu0 %v1099
    %1163 = vmatpush1.bf16.msra.mxu0 %v1098
    %1164 = vmatprep.subr.bf16.mxu0 %v1101
    %1165 = vmatpush1.bf16.msra.mxu0 %v1100
    %1166 = vmatprep.subr.bf16.mxu0 %v1103
    %1167 = vmatpush1.bf16.msra.mxu0 %v1102
    %1168 = vmatprep.subr.bf16.mxu0 %v1105
    %1169 = vmatpush1.bf16.msra.mxu0 %v1104
    %1170 = vmatprep.subr.bf16.mxu0 %v1107
    %1171 = vmatpush1.bf16.msra.mxu0 %v1106
    %1172 = vmatprep.subr.bf16.mxu0 %v1109
    %1173 = vmatpush1.bf16.msra.mxu0 %v1108
    %1174 = vmatprep.mubr.bf16.mxu0 %v935
    %1175 = vmatmul.mubr.bf16.gmra.mrb[0].mxu0 %v934
    %v1176 = vpop.f32.mrb[0].mxu0
    %v1177 = vadd.f32 %v975, %v1176
    %v1178 = vpop.f32.mrb[0].mxu0
    %v1179 = vadd.f32 %v979, %v1178
    %v1180 = vpop.f32.mrb[0].mxu0
    %v1181 = vpop.f32.mrb[0].mxu0
    %1182 = vdwg.mxu0
    %v1183 = vadd.f32 %v1177, %v681
    %v1184 = vadd.f32 %v1179, %v682
    %v1185 = vmax.f32 %v1183, 0.0
    %v1186 = vmax.f32 %v1184, 0.0
    %v1187 = vpack.c.bf16 %v1185, %v1185
    %v1188 = vpack.c.bf16 %v1186, %v1186
    %s1189 = scalar_lea.vmem [#allocation5], 512
    %v1190 = vld [vmem:[%s1189] sm:$0xff]
    %v1191 = vld [vmem:[%s1189 + $0x8] sm:$0xff]
    %v1192 = vld [vmem:[%s1189 + $0x10] sm:$0xff]
    %v1193 = vld [vmem:[%s1189 + $0x18] sm:$0xff]
    %v1194 = vld [vmem:[%s1189 + $0x20] sm:$0xff]
    %v1195 = vld [vmem:[%s1189 + $0x28] sm:$0xff]
    %v1196 = vld [vmem:[%s1189 + $0x30] sm:$0xff]
    %v1197 = vld [vmem:[%s1189 + $0x38] sm:$0xff]
    %v1198 = vld [vmem:[%s1189 + $0x40] sm:$0xff]
    %v1199 = vld [vmem:[%s1189 + $0x48] sm:$0xff]
    %v1200 = vld [vmem:[%s1189 + $0x50] sm:$0xff]
    %v1201 = vld [vmem:[%s1189 + $0x58] sm:$0xff]
    %v1202 = vld [vmem:[%s1189 + $0x60] sm:$0xff]
    %v1203 = vld [vmem:[%s1189 + $0x68] sm:$0xff]
    %v1204 = vld [vmem:[%s1189 + $0x70] sm:$0xff]
    %v1205 = vld [vmem:[%s1189 + $0x78] sm:$0xff]
    %v1206 = vld [vmem:[%s1189 + $0x80] sm:$0xff]
    %v1207 = vld [vmem:[%s1189 + $0x88] sm:$0xff]
    %v1208 = vld [vmem:[%s1189 + $0x90] sm:$0xff]
    %v1209 = vld [vmem:[%s1189 + $0x98] sm:$0xff]
    %v1210 = vld [vmem:[%s1189 + $0xa0] sm:$0xff]
    %v1211 = vld [vmem:[%s1189 + $0xa8] sm:$0xff]
    %v1212 = vld [vmem:[%s1189 + $0xb0] sm:$0xff]
    %v1213 = vld [vmem:[%s1189 + $0xb8] sm:$0xff]
    %v1214 = vld [vmem:[%s1189 + $0xc0] sm:$0xff]
    %v1215 = vld [vmem:[%s1189 + $0xc8] sm:$0xff]
    %v1216 = vld [vmem:[%s1189 + $0xd0] sm:$0xff]
    %v1217 = vld [vmem:[%s1189 + $0xd8] sm:$0xff]
    %v1218 = vld [vmem:[%s1189 + $0xe0] sm:$0xff]
    %v1219 = vld [vmem:[%s1189 + $0xe8] sm:$0xff]
    %v1220 = vld [vmem:[%s1189 + $0xf0] sm:$0xff]
    %v1221 = vld [vmem:[%s1189 + $0xf8] sm:$0xff]
    %s1222 = scalar_lea.vmem %s5, 4
    %v1223 = vld [vmem:[%s1222] sm:$0x3]
    %v1225 = vlaneseq
    %v1226 = vshrl.u32 %v1225, 7
    %v1227 = vsub.s32 0, %v1226
    %v1228 = vrot.slane %v1223, %v1227
    %v1229 = vlaneseq
    %v1230 = vshrl.u32 %v1229, 7
    %v1231 = vsub.s32 1, %v1230
    %v1232 = vrot.slane %v1223, %v1231
    %v1267 = vunpack.c.l.b16 %v1190
    %v1268 = vunpack.c.h.b16 %v1190
    %v1269 = vunpack.c.l.b16 %v1191
    %v1270 = vunpack.c.h.b16 %v1191
    %v1271 = vunpack.c.l.b16 %v1192
    %v1272 = vunpack.c.h.b16 %v1192
    %v1273 = vunpack.c.l.b16 %v1193
    %v1274 = vunpack.c.h.b16 %v1193
    %v1275 = vunpack.c.l.b16 %v1194
    %v1276 = vunpack.c.h.b16 %v1194
    %v1277 = vunpack.c.l.b16 %v1195
    %v1278 = vunpack.c.h.b16 %v1195
    %v1279 = vunpack.c.l.b16 %v1196
    %v1280 = vunpack.c.h.b16 %v1196
    %v1281 = vunpack.c.l.b16 %v1197
    %v1282 = vunpack.c.h.b16 %v1197
    %v1283 = vunpack.c.l.b16 %v1198
    %v1284 = vunpack.c.h.b16 %v1198
    %v1285 = vunpack.c.l.b16 %v1199
    %v1286 = vunpack.c.h.b16 %v1199
    %v1287 = vunpack.c.l.b16 %v1200
    %v1288 = vunpack.c.h.b16 %v1200
    %v1289 = vunpack.c.l.b16 %v1201
    %v1290 = vunpack.c.h.b16 %v1201
    %v1291 = vunpack.c.l.b16 %v1202
    %v1292 = vunpack.c.h.b16 %v1202
    %v1293 = vunpack.c.l.b16 %v1203
    %v1294 = vunpack.c.h.b16 %v1203
    %v1295 = vunpack.c.l.b16 %v1204
    %v1296 = vunpack.c.h.b16 %v1204
    %v1297 = vunpack.c.l.b16 %v1205
    %v1298 = vunpack.c.h.b16 %v1205
    %v1299 = vunpack.c.l.b16 %v1206
    %v1300 = vunpack.c.h.b16 %v1206
    %v1301 = vunpack.c.l.b16 %v1207
    %v1302 = vunpack.c.h.b16 %v1207
    %v1303 = vunpack.c.l.b16 %v1208
    %v1304 = vunpack.c.h.b16 %v1208
    %v1305 = vunpack.c.l.b16 %v1209
    %v1306 = vunpack.c.h.b16 %v1209
    %v1307 = vunpack.c.l.b16 %v1210
    %v1308 = vunpack.c.h.b16 %v1210
    %v1309 = vunpack.c.l.b16 %v1211
    %v1310 = vunpack.c.h.b16 %v1211
    %v1311 = vunpack.c.l.b16 %v1212
    %v1312 = vunpack.c.h.b16 %v1212
    %v1313 = vunpack.c.l.b16 %v1213
    %v1314 = vunpack.c.h.b16 %v1213
    %v1315 = vunpack.c.l.b16 %v1214
    %v1316 = vunpack.c.h.b16 %v1214
    %v1317 = vunpack.c.l.b16 %v1215
    %v1318 = vunpack.c.h.b16 %v1215
    %v1319 = vunpack.c.l.b16 %v1216
    %v1320 = vunpack.c.h.b16 %v1216
    %v1321 = vunpack.c.l.b16 %v1217
    %v1322 = vunpack.c.h.b16 %v1217
    %v1323 = vunpack.c.l.b16 %v1218
    %v1324 = vunpack.c.h.b16 %v1218
    %v1325 = vunpack.c.l.b16 %v1219
    %v1326 = vunpack.c.h.b16 %v1219
    %v1327 = vunpack.c.l.b16 %v1220
    %v1328 = vunpack.c.h.b16 %v1220
    %v1329 = vunpack.c.l.b16 %v1221
    %v1330 = vunpack.c.h.b16 %v1221
    %v1331 = vpack.c.b16 %v1269, %v1267
    %v1332 = vpack.c.b16 %v1270, %v1268
    %v1333 = vpack.c.b16 %v1273, %v1271
    %v1334 = vpack.c.b16 %v1274, %v1272
    %v1335 = vpack.c.b16 %v1277, %v1275
    %v1336 = vpack.c.b16 %v1278, %v1276
    %v1337 = vpack.c.b16 %v1281, %v1279
    %v1338 = vpack.c.b16 %v1282, %v1280
    %v1339 = vpack.c.b16 %v1285, %v1283
    %v1340 = vpack.c.b16 %v1286, %v1284
    %v1341 = vpack.c.b16 %v1289, %v1287
    %v1342 = vpack.c.b16 %v1290, %v1288
    %v1343 = vpack.c.b16 %v1293, %v1291
    %v1344 = vpack.c.b16 %v1294, %v1292
    %v1345 = vpack.c.b16 %v1297, %v1295
    %v1346 = vpack.c.b16 %v1298, %v1296
    %v1347 = vpack.c.b16 %v1301, %v1299
    %v1348 = vpack.c.b16 %v1302, %v1300
    %v1349 = vpack.c.b16 %v1305, %v1303
    %v1350 = vpack.c.b16 %v1306, %v1304
    %v1351 = vpack.c.b16 %v1309, %v1307
    %v1352 = vpack.c.b16 %v1310, %v1308
    %v1353 = vpack.c.b16 %v1313, %v1311
    %v1354 = vpack.c.b16 %v1314, %v1312
    %v1355 = vpack.c.b16 %v1317, %v1315
    %v1356 = vpack.c.b16 %v1318, %v1316
    %v1357 = vpack.c.b16 %v1321, %v1319
    %v1358 = vpack.c.b16 %v1322, %v1320
    %v1359 = vpack.c.b16 %v1325, %v1323
    %v1360 = vpack.c.b16 %v1326, %v1324
    %v1361 = vpack.c.b16 %v1329, %v1327
    %v1362 = vpack.c.b16 %v1330, %v1328
    %1395 = vmatprep.subr.bf16.mxu0 %v1332
    %1396 = vmatpush1.bf16.msra.mxu0 %v1331
    %1397 = vmatprep.subr.bf16.mxu0 %v1334
    %1398 = vmatpush1.bf16.msra.mxu0 %v1333
    %1399 = vmatprep.subr.bf16.mxu0 %v1336
    %1400 = vmatpush1.bf16.msra.mxu0 %v1335
    %1401 = vmatprep.subr.bf16.mxu0 %v1338
    %1402 = vmatpush1.bf16.msra.mxu0 %v1337
    %1403 = vmatprep.subr.bf16.mxu0 %v1340
    %1404 = vmatpush1.bf16.msra.mxu0 %v1339
    %1405 = vmatprep.subr.bf16.mxu0 %v1342
    %1406 = vmatpush1.bf16.msra.mxu0 %v1341
    %1407 = vmatprep.subr.bf16.mxu0 %v1344
    %1408 = vmatpush1.bf16.msra.mxu0 %v1343
    %1409 = vmatprep.subr.bf16.mxu0 %v1346
    %1410 = vmatpush1.bf16.msra.mxu0 %v1345
    %1411 = vmatprep.subr.bf16.mxu0 %v1348
    %1412 = vmatpush1.bf16.msra.mxu0 %v1347
    %1413 = vmatprep.subr.bf16.mxu0 %v1350
    %1414 = vmatpush1.bf16.msra.mxu0 %v1349
    %1415 = vmatprep.subr.bf16.mxu0 %v1352
    %1416 = vmatpush1.bf16.msra.mxu0 %v1351
    %1417 = vmatprep.subr.bf16.mxu0 %v1354
    %1418 = vmatpush1.bf16.msra.mxu0 %v1353
    %1419 = vmatprep.subr.bf16.mxu0 %v1356
    %1420 = vmatpush1.bf16.msra.mxu0 %v1355
    %1421 = vmatprep.subr.bf16.mxu0 %v1358
    %1422 = vmatpush1.bf16.msra.mxu0 %v1357
    %1423 = vmatprep.subr.bf16.mxu0 %v1360
    %1424 = vmatpush1.bf16.msra.mxu0 %v1359
    %1425 = vmatprep.subr.bf16.mxu0 %v1362
    %1426 = vmatpush1.bf16.msra.mxu0 %v1361
    %1427 = vmatprep.mubr.bf16.mxu0 %v1188
    %1428 = vmatmul.mubr.bf16.gmra.mrb[0].mxu0 %v1187
    %v1429 = vpop.f32.mrb[0].mxu0
    %v1430 = vadd.f32 %v1228, %v1429
    %v1431 = vpop.f32.mrb[0].mxu0
    %v1432 = vadd.f32 %v1232, %v1431
    %v1433 = vpop.f32.mrb[0].mxu0
    %v1434 = vpop.f32.mrb[0].mxu0
    %1435 = vdwg.mxu0
    %v1436 = vmax.f32 %v1430, 0.0
    %v1437 = vmax.f32 %v1432, 0.0
    %v1438 = vpack.c.bf16 %v1436, %v1436
    %v1439 = vpack.c.bf16 %v1437, %v1437
    %s1440 = scalar_lea.vmem [#allocation7], 512
    %v1441 = vld [vmem:[%s1440] sm:$0xff]
    %v1442 = vld [vmem:[%s1440 + $0x8] sm:$0xff]
    %v1443 = vld [vmem:[%s1440 + $0x10] sm:$0xff]
    %v1444 = vld [vmem:[%s1440 + $0x18] sm:$0xff]
    %v1445 = vld [vmem:[%s1440 + $0x20] sm:$0xff]
    %v1446 = vld [vmem:[%s1440 + $0x28] sm:$0xff]
    %v1447 = vld [vmem:[%s1440 + $0x30] sm:$0xff]
    %v1448 = vld [vmem:[%s1440 + $0x38] sm:$0xff]
    %v1449 = vld [vmem:[%s1440 + $0x40] sm:$0xff]
    %v1450 = vld [vmem:[%s1440 + $0x48] sm:$0xff]
    %v1451 = vld [vmem:[%s1440 + $0x50] sm:$0xff]
    %v1452 = vld [vmem:[%s1440 + $0x58] sm:$0xff]
    %v1453 = vld [vmem:[%s1440 + $0x60] sm:$0xff]
    %v1454 = vld [vmem:[%s1440 + $0x68] sm:$0xff]
    %v1455 = vld [vmem:[%s1440 + $0x70] sm:$0xff]
    %v1456 = vld [vmem:[%s1440 + $0x78] sm:$0xff]
    %v1457 = vld [vmem:[%s1440 + $0x80] sm:$0xff]
    %v1458 = vld [vmem:[%s1440 + $0x88] sm:$0xff]
    %v1459 = vld [vmem:[%s1440 + $0x90] sm:$0xff]
    %v1460 = vld [vmem:[%s1440 + $0x98] sm:$0xff]
    %v1461 = vld [vmem:[%s1440 + $0xa0] sm:$0xff]
    %v1462 = vld [vmem:[%s1440 + $0xa8] sm:$0xff]
    %v1463 = vld [vmem:[%s1440 + $0xb0] sm:$0xff]
    %v1464 = vld [vmem:[%s1440 + $0xb8] sm:$0xff]
    %v1465 = vld [vmem:[%s1440 + $0xc0] sm:$0xff]
    %v1466 = vld [vmem:[%s1440 + $0xc8] sm:$0xff]
    %v1467 = vld [vmem:[%s1440 + $0xd0] sm:$0xff]
    %v1468 = vld [vmem:[%s1440 + $0xd8] sm:$0xff]
    %v1469 = vld [vmem:[%s1440 + $0xe0] sm:$0xff]
    %v1470 = vld [vmem:[%s1440 + $0xe8] sm:$0xff]
    %v1471 = vld [vmem:[%s1440 + $0xf0] sm:$0xff]
    %v1472 = vld [vmem:[%s1440 + $0xf8] sm:$0xff]
    %s1473 = scalar_lea.vmem %s6, 4
    %v1474 = vld [vmem:[%s1473] sm:$0x3]
    %v1476 = vlaneseq
    %v1477 = vshrl.u32 %v1476, 7
    %v1478 = vsub.s32 0, %v1477
    %v1479 = vrot.slane %v1474, %v1478
    %v1480 = vlaneseq
    %v1481 = vshrl.u32 %v1480, 7
    %v1482 = vsub.s32 1, %v1481
    %v1483 = vrot.slane %v1474, %v1482
    %v1518 = vunpack.c.l.b16 %v1441
    %v1519 = vunpack.c.h.b16 %v1441
    %v1520 = vunpack.c.l.b16 %v1442
    %v1521 = vunpack.c.h.b16 %v1442
    %v1522 = vunpack.c.l.b16 %v1443
    %v1523 = vunpack.c.h.b16 %v1443
    %v1524 = vunpack.c.l.b16 %v1444
    %v1525 = vunpack.c.h.b16 %v1444
    %v1526 = vunpack.c.l.b16 %v1445
    %v1527 = vunpack.c.h.b16 %v1445
    %v1528 = vunpack.c.l.b16 %v1446
    %v1529 = vunpack.c.h.b16 %v1446
    %v1530 = vunpack.c.l.b16 %v1447
    %v1531 = vunpack.c.h.b16 %v1447
    %v1532 = vunpack.c.l.b16 %v1448
    %v1533 = vunpack.c.h.b16 %v1448
    %v1534 = vunpack.c.l.b16 %v1449
    %v1535 = vunpack.c.h.b16 %v1449
    %v1536 = vunpack.c.l.b16 %v1450
    %v1537 = vunpack.c.h.b16 %v1450
    %v1538 = vunpack.c.l.b16 %v1451
    %v1539 = vunpack.c.h.b16 %v1451
    %v1540 = vunpack.c.l.b16 %v1452
    %v1541 = vunpack.c.h.b16 %v1452
    %v1542 = vunpack.c.l.b16 %v1453
    %v1543 = vunpack.c.h.b16 %v1453
    %v1544 = vunpack.c.l.b16 %v1454
    %v1545 = vunpack.c.h.b16 %v1454
    %v1546 = vunpack.c.l.b16 %v1455
    %v1547 = vunpack.c.h.b16 %v1455
    %v1548 = vunpack.c.l.b16 %v1456
    %v1549 = vunpack.c.h.b16 %v1456
    %v1550 = vunpack.c.l.b16 %v1457
    %v1551 = vunpack.c.h.b16 %v1457
    %v1552 = vunpack.c.l.b16 %v1458
    %v1553 = vunpack.c.h.b16 %v1458
    %v1554 = vunpack.c.l.b16 %v1459
    %v1555 = vunpack.c.h.b16 %v1459
    %v1556 = vunpack.c.l.b16 %v1460
    %v1557 = vunpack.c.h.b16 %v1460
    %v1558 = vunpack.c.l.b16 %v1461
    %v1559 = vunpack.c.h.b16 %v1461
    %v1560 = vunpack.c.l.b16 %v1462
    %v1561 = vunpack.c.h.b16 %v1462
    %v1562 = vunpack.c.l.b16 %v1463
    %v1563 = vunpack.c.h.b16 %v1463
    %v1564 = vunpack.c.l.b16 %v1464
    %v1565 = vunpack.c.h.b16 %v1464
    %v1566 = vunpack.c.l.b16 %v1465
    %v1567 = vunpack.c.h.b16 %v1465
    %v1568 = vunpack.c.l.b16 %v1466
    %v1569 = vunpack.c.h.b16 %v1466
    %v1570 = vunpack.c.l.b16 %v1467
    %v1571 = vunpack.c.h.b16 %v1467
    %v1572 = vunpack.c.l.b16 %v1468
    %v1573 = vunpack.c.h.b16 %v1468
    %v1574 = vunpack.c.l.b16 %v1469
    %v1575 = vunpack.c.h.b16 %v1469
    %v1576 = vunpack.c.l.b16 %v1470
    %v1577 = vunpack.c.h.b16 %v1470
    %v1578 = vunpack.c.l.b16 %v1471
    %v1579 = vunpack.c.h.b16 %v1471
    %v1580 = vunpack.c.l.b16 %v1472
    %v1581 = vunpack.c.h.b16 %v1472
    %v1582 = vpack.c.b16 %v1520, %v1518
    %v1583 = vpack.c.b16 %v1521, %v1519
    %v1584 = vpack.c.b16 %v1524, %v1522
    %v1585 = vpack.c.b16 %v1525, %v1523
    %v1586 = vpack.c.b16 %v1528, %v1526
    %v1587 = vpack.c.b16 %v1529, %v1527
    %v1588 = vpack.c.b16 %v1532, %v1530
    %v1589 = vpack.c.b16 %v1533, %v1531
    %v1590 = vpack.c.b16 %v1536, %v1534
    %v1591 = vpack.c.b16 %v1537, %v1535
    %v1592 = vpack.c.b16 %v1540, %v1538
    %v1593 = vpack.c.b16 %v1541, %v1539
    %v1594 = vpack.c.b16 %v1544, %v1542
    %v1595 = vpack.c.b16 %v1545, %v1543
    %v1596 = vpack.c.b16 %v1548, %v1546
    %v1597 = vpack.c.b16 %v1549, %v1547
    %v1598 = vpack.c.b16 %v1552, %v1550
    %v1599 = vpack.c.b16 %v1553, %v1551
    %v1600 = vpack.c.b16 %v1556, %v1554
    %v1601 = vpack.c.b16 %v1557, %v1555
    %v1602 = vpack.c.b16 %v1560, %v1558
    %v1603 = vpack.c.b16 %v1561, %v1559
    %v1604 = vpack.c.b16 %v1564, %v1562
    %v1605 = vpack.c.b16 %v1565, %v1563
    %v1606 = vpack.c.b16 %v1568, %v1566
    %v1607 = vpack.c.b16 %v1569, %v1567
    %v1608 = vpack.c.b16 %v1572, %v1570
    %v1609 = vpack.c.b16 %v1573, %v1571
    %v1610 = vpack.c.b16 %v1576, %v1574
    %v1611 = vpack.c.b16 %v1577, %v1575
    %v1612 = vpack.c.b16 %v1580, %v1578
    %v1613 = vpack.c.b16 %v1581, %v1579
    %1646 = vmatprep.subr.bf16.mxu0 %v1583
    %1647 = vmatpush1.bf16.msra.mxu0 %v1582
    %1648 = vmatprep.subr.bf16.mxu0 %v1585
    %1649 = vmatpush1.bf16.msra.mxu0 %v1584
    %1650 = vmatprep.subr.bf16.mxu0 %v1587
    %1651 = vmatpush1.bf16.msra.mxu0 %v1586
    %1652 = vmatprep.subr.bf16.mxu0 %v1589
    %1653 = vmatpush1.bf16.msra.mxu0 %v1588
    %1654 = vmatprep.subr.bf16.mxu0 %v1591
    %1655 = vmatpush1.bf16.msra.mxu0 %v1590
    %1656 = vmatprep.subr.bf16.mxu0 %v1593
    %1657 = vmatpush1.bf16.msra.mxu0 %v1592
    %1658 = vmatprep.subr.bf16.mxu0 %v1595
    %1659 = vmatpush1.bf16.msra.mxu0 %v1594
    %1660 = vmatprep.subr.bf16.mxu0 %v1597
    %1661 = vmatpush1.bf16.msra.mxu0 %v1596
    %1662 = vmatprep.subr.bf16.mxu0 %v1599
    %1663 = vmatpush1.bf16.msra.mxu0 %v1598
    %1664 = vmatprep.subr.bf16.mxu0 %v1601
    %1665 = vmatpush1.bf16.msra.mxu0 %v1600
    %1666 = vmatprep.subr.bf16.mxu0 %v1603
    %1667 = vmatpush1.bf16.msra.mxu0 %v1602
    %1668 = vmatprep.subr.bf16.mxu0 %v1605
    %1669 = vmatpush1.bf16.msra.mxu0 %v1604
    %1670 = vmatprep.subr.bf16.mxu0 %v1607
    %1671 = vmatpush1.bf16.msra.mxu0 %v1606
    %1672 = vmatprep.subr.bf16.mxu0 %v1609
    %1673 = vmatpush1.bf16.msra.mxu0 %v1608
    %1674 = vmatprep.subr.bf16.mxu0 %v1611
    %1675 = vmatpush1.bf16.msra.mxu0 %v1610
    %1676 = vmatprep.subr.bf16.mxu0 %v1613
    %1677 = vmatpush1.bf16.msra.mxu0 %v1612
    %1678 = vmatprep.mubr.bf16.mxu0 %v1439
    %1679 = vmatmul.mubr.bf16.gmra.mrb[0].mxu0 %v1438
    %v1680 = vpop.f32.mrb[0].mxu0
    %v1681 = vadd.f32 %v1479, %v1680
    %v1682 = vpop.f32.mrb[0].mxu0
    %v1683 = vadd.f32 %v1483, %v1682
    %v1684 = vpop.f32.mrb[0].mxu0
    %v1685 = vpop.f32.mrb[0].mxu0
    %1686 = vdwg.mxu0
    %v1687 = vadd.f32 %v1681, %v1185
    %v1688 = vadd.f32 %v1683, %v1186
    %v1689 = vmax.f32 %v1687, 0.0
    %v1690 = vmax.f32 %v1688, 0.0
    %v1691 = vpack.c.bf16 %v1689, %v1689
    %v1692 = vpack.c.bf16 %v1690, %v1690
    %s1693 = scalar_lea.vmem [#allocation5], 768
    %v1694 = vld [vmem:[%s1693] sm:$0xff]
    %v1695 = vld [vmem:[%s1693 + $0x8] sm:$0xff]
    %v1696 = vld [vmem:[%s1693 + $0x10] sm:$0xff]
    %v1697 = vld [vmem:[%s1693 + $0x18] sm:$0xff]
    %v1698 = vld [vmem:[%s1693 + $0x20] sm:$0xff]
    %v1699 = vld [vmem:[%s1693 + $0x28] sm:$0xff]
    %v1700 = vld [vmem:[%s1693 + $0x30] sm:$0xff]
    %v1701 = vld [vmem:[%s1693 + $0x38] sm:$0xff]
    %v1702 = vld [vmem:[%s1693 + $0x40] sm:$0xff]
    %v1703 = vld [vmem:[%s1693 + $0x48] sm:$0xff]
    %v1704 = vld [vmem:[%s1693 + $0x50] sm:$0xff]
    %v1705 = vld [vmem:[%s1693 + $0x58] sm:$0xff]
    %v1706 = vld [vmem:[%s1693 + $0x60] sm:$0xff]
    %v1707 = vld [vmem:[%s1693 + $0x68] sm:$0xff]
    %v1708 = vld [vmem:[%s1693 + $0x70] sm:$0xff]
    %v1709 = vld [vmem:[%s1693 + $0x78] sm:$0xff]
    %v1710 = vld [vmem:[%s1693 + $0x80] sm:$0xff]
    %v1711 = vld [vmem:[%s1693 + $0x88] sm:$0xff]
    %v1712 = vld [vmem:[%s1693 + $0x90] sm:$0xff]
    %v1713 = vld [vmem:[%s1693 + $0x98] sm:$0xff]
    %v1714 = vld [vmem:[%s1693 + $0xa0] sm:$0xff]
    %v1715 = vld [vmem:[%s1693 + $0xa8] sm:$0xff]
    %v1716 = vld [vmem:[%s1693 + $0xb0] sm:$0xff]
    %v1717 = vld [vmem:[%s1693 + $0xb8] sm:$0xff]
    %v1718 = vld [vmem:[%s1693 + $0xc0] sm:$0xff]
    %v1719 = vld [vmem:[%s1693 + $0xc8] sm:$0xff]
    %v1720 = vld [vmem:[%s1693 + $0xd0] sm:$0xff]
    %v1721 = vld [vmem:[%s1693 + $0xd8] sm:$0xff]
    %v1722 = vld [vmem:[%s1693 + $0xe0] sm:$0xff]
    %v1723 = vld [vmem:[%s1693 + $0xe8] sm:$0xff]
    %v1724 = vld [vmem:[%s1693 + $0xf0] sm:$0xff]
    %v1725 = vld [vmem:[%s1693 + $0xf8] sm:$0xff]
    %s1726 = scalar_lea.vmem %s5, 6
    %v1727 = vld [vmem:[%s1726] sm:$0x3]
    %v1729 = vlaneseq
    %v1730 = vshrl.u32 %v1729, 7
    %v1731 = vsub.s32 0, %v1730
    %v1732 = vrot.slane %v1727, %v1731
    %v1733 = vlaneseq
    %v1734 = vshrl.u32 %v1733, 7
    %v1735 = vsub.s32 1, %v1734
    %v1736 = vrot.slane %v1727, %v1735
    %v1771 = vunpack.c.l.b16 %v1694
    %v1772 = vunpack.c.h.b16 %v1694
    %v1773 = vunpack.c.l.b16 %v1695
    %v1774 = vunpack.c.h.b16 %v1695
    %v1775 = vunpack.c.l.b16 %v1696
    %v1776 = vunpack.c.h.b16 %v1696
    %v1777 = vunpack.c.l.b16 %v1697
    %v1778 = vunpack.c.h.b16 %v1697
    %v1779 = vunpack.c.l.b16 %v1698
    %v1780 = vunpack.c.h.b16 %v1698
    %v1781 = vunpack.c.l.b16 %v1699
    %v1782 = vunpack.c.h.b16 %v1699
    %v1783 = vunpack.c.l.b16 %v1700
    %v1784 = vunpack.c.h.b16 %v1700
    %v1785 = vunpack.c.l.b16 %v1701
    %v1786 = vunpack.c.h.b16 %v1701
    %v1787 = vunpack.c.l.b16 %v1702
    %v1788 = vunpack.c.h.b16 %v1702
    %v1789 = vunpack.c.l.b16 %v1703
    %v1790 = vunpack.c.h.b16 %v1703
    %v1791 = vunpack.c.l.b16 %v1704
    %v1792 = vunpack.c.h.b16 %v1704
    %v1793 = vunpack.c.l.b16 %v1705
    %v1794 = vunpack.c.h.b16 %v1705
    %v1795 = vunpack.c.l.b16 %v1706
    %v1796 = vunpack.c.h.b16 %v1706
    %v1797 = vunpack.c.l.b16 %v1707
    %v1798 = vunpack.c.h.b16 %v1707
    %v1799 = vunpack.c.l.b16 %v1708
    %v1800 = vunpack.c.h.b16 %v1708
    %v1801 = vunpack.c.l.b16 %v1709
    %v1802 = vunpack.c.h.b16 %v1709
    %v1803 = vunpack.c.l.b16 %v1710
    %v1804 = vunpack.c.h.b16 %v1710
    %v1805 = vunpack.c.l.b16 %v1711
    %v1806 = vunpack.c.h.b16 %v1711
    %v1807 = vunpack.c.l.b16 %v1712
    %v1808 = vunpack.c.h.b16 %v1712
    %v1809 = vunpack.c.l.b16 %v1713
    %v1810 = vunpack.c.h.b16 %v1713
    %v1811 = vunpack.c.l.b16 %v1714
    %v1812 = vunpack.c.h.b16 %v1714
    %v1813 = vunpack.c.l.b16 %v1715
    %v1814 = vunpack.c.h.b16 %v1715
    %v1815 = vunpack.c.l.b16 %v1716
    %v1816 = vunpack.c.h.b16 %v1716
    %v1817 = vunpack.c.l.b16 %v1717
    %v1818 = vunpack.c.h.b16 %v1717
    %v1819 = vunpack.c.l.b16 %v1718
    %v1820 = vunpack.c.h.b16 %v1718
    %v1821 = vunpack.c.l.b16 %v1719
    %v1822 = vunpack.c.h.b16 %v1719
    %v1823 = vunpack.c.l.b16 %v1720
    %v1824 = vunpack.c.h.b16 %v1720
    %v1825 = vunpack.c.l.b16 %v1721
    %v1826 = vunpack.c.h.b16 %v1721
    %v1827 = vunpack.c.l.b16 %v1722
    %v1828 = vunpack.c.h.b16 %v1722
    %v1829 = vunpack.c.l.b16 %v1723
    %v1830 = vunpack.c.h.b16 %v1723
    %v1831 = vunpack.c.l.b16 %v1724
    %v1832 = vunpack.c.h.b16 %v1724
    %v1833 = vunpack.c.l.b16 %v1725
    %v1834 = vunpack.c.h.b16 %v1725
    %v1835 = vpack.c.b16 %v1773, %v1771
    %v1836 = vpack.c.b16 %v1774, %v1772
    %v1837 = vpack.c.b16 %v1777, %v1775
    %v1838 = vpack.c.b16 %v1778, %v1776
    %v1839 = vpack.c.b16 %v1781, %v1779
    %v1840 = vpack.c.b16 %v1782, %v1780
    %v1841 = vpack.c.b16 %v1785, %v1783
    %v1842 = vpack.c.b16 %v1786, %v1784
    %v1843 = vpack.c.b16 %v1789, %v1787
    %v1844 = vpack.c.b16 %v1790, %v1788
    %v1845 = vpack.c.b16 %v1793, %v1791
    %v1846 = vpack.c.b16 %v1794, %v1792
    %v1847 = vpack.c.b16 %v1797, %v1795
    %v1848 = vpack.c.b16 %v1798, %v1796
    %v1849 = vpack.c.b16 %v1801, %v1799
    %v1850 = vpack.c.b16 %v1802, %v1800
    %v1851 = vpack.c.b16 %v1805, %v1803
    %v1852 = vpack.c.b16 %v1806, %v1804
    %v1853 = vpack.c.b16 %v1809, %v1807
    %v1854 = vpack.c.b16 %v1810, %v1808
    %v1855 = vpack.c.b16 %v1813, %v1811
    %v1856 = vpack.c.b16 %v1814, %v1812
    %v1857 = vpack.c.b16 %v1817, %v1815
    %v1858 = vpack.c.b16 %v1818, %v1816
    %v1859 = vpack.c.b16 %v1821, %v1819
    %v1860 = vpack.c.b16 %v1822, %v1820
    %v1861 = vpack.c.b16 %v1825, %v1823
    %v1862 = vpack.c.b16 %v1826, %v1824
    %v1863 = vpack.c.b16 %v1829, %v1827
    %v1864 = vpack.c.b16 %v1830, %v1828
    %v1865 = vpack.c.b16 %v1833, %v1831
    %v1866 = vpack.c.b16 %v1834, %v1832
    %1899 = vmatprep.subr.bf16.mxu0 %v1836
    %1900 = vmatpush1.bf16.msra.mxu0 %v1835
    %1901 = vmatprep.subr.bf16.mxu0 %v1838
    %1902 = vmatpush1.bf16.msra.mxu0 %v1837
    %1903 = vmatprep.subr.bf16.mxu0 %v1840
    %1904 = vmatpush1.bf16.msra.mxu0 %v1839
    %1905 = vmatprep.subr.bf16.mxu0 %v1842
    %1906 = vmatpush1.bf16.msra.mxu0 %v1841
    %1907 = vmatprep.subr.bf16.mxu0 %v1844
    %1908 = vmatpush1.bf16.msra.mxu0 %v1843
    %1909 = vmatprep.subr.bf16.mxu0 %v1846
    %1910 = vmatpush1.bf16.msra.mxu0 %v1845
    %1911 = vmatprep.subr.bf16.mxu0 %v1848
    %1912 = vmatpush1.bf16.msra.mxu0 %v1847
    %1913 = vmatprep.subr.bf16.mxu0 %v1850
    %1914 = vmatpush1.bf16.msra.mxu0 %v1849
    %1915 = vmatprep.subr.bf16.mxu0 %v1852
    %1916 = vmatpush1.bf16.msra.mxu0 %v1851
    %1917 = vmatprep.subr.bf16.mxu0 %v1854
    %1918 = vmatpush1.bf16.msra.mxu0 %v1853
    %1919 = vmatprep.subr.bf16.mxu0 %v1856
    %1920 = vmatpush1.bf16.msra.mxu0 %v1855
    %1921 = vmatprep.subr.bf16.mxu0 %v1858
    %1922 = vmatpush1.bf16.msra.mxu0 %v1857
    %1923 = vmatprep.subr.bf16.mxu0 %v1860
    %1924 = vmatpush1.bf16.msra.mxu0 %v1859
    %1925 = vmatprep.subr.bf16.mxu0 %v1862
    %1926 = vmatpush1.bf16.msra.mxu0 %v1861
    %1927 = vmatprep.subr.bf16.mxu0 %v1864
    %1928 = vmatpush1.bf16.msra.mxu0 %v1863
    %1929 = vmatprep.subr.bf16.mxu0 %v1866
    %1930 = vmatpush1.bf16.msra.mxu0 %v1865
    %1931 = vmatprep.mubr.bf16.mxu0 %v1692
    %1932 = vmatmul.mubr.bf16.gmra.mrb[0].mxu0 %v1691
    %v1933 = vpop.f32.mrb[0].mxu0
    %v1934 = vadd.f32 %v1732, %v1933
    %v1935 = vpop.f32.mrb[0].mxu0
    %v1936 = vadd.f32 %v1736, %v1935
    %v1937 = vpop.f32.mrb[0].mxu0
    %v1938 = vpop.f32.mrb[0].mxu0
    %1939 = vdwg.mxu0
    %v1940 = vmax.f32 %v1934, 0.0
    %v1941 = vmax.f32 %v1936, 0.0
    %v1942 = vpack.c.bf16 %v1940, %v1940
    %v1943 = vpack.c.bf16 %v1941, %v1941
    %s1944 = scalar_lea.vmem [#allocation7], 768
    %v1945 = vld [vmem:[%s1944] sm:$0xff]
    %v1946 = vld [vmem:[%s1944 + $0x8] sm:$0xff]
    %v1947 = vld [vmem:[%s1944 + $0x10] sm:$0xff]
    %v1948 = vld [vmem:[%s1944 + $0x18] sm:$0xff]
    %v1949 = vld [vmem:[%s1944 + $0x20] sm:$0xff]
    %v1950 = vld [vmem:[%s1944 + $0x28] sm:$0xff]
    %v1951 = vld [vmem:[%s1944 + $0x30] sm:$0xff]
    %v1952 = vld [vmem:[%s1944 + $0x38] sm:$0xff]
    %v1953 = vld [vmem:[%s1944 + $0x40] sm:$0xff]
    %v1954 = vld [vmem:[%s1944 + $0x48] sm:$0xff]
    %v1955 = vld [vmem:[%s1944 + $0x50] sm:$0xff]
    %v1956 = vld [vmem:[%s1944 + $0x58] sm:$0xff]
    %v1957 = vld [vmem:[%s1944 + $0x60] sm:$0xff]
    %v1958 = vld [vmem:[%s1944 + $0x68] sm:$0xff]
    %v1959 = vld [vmem:[%s1944 + $0x70] sm:$0xff]
    %v1960 = vld [vmem:[%s1944 + $0x78] sm:$0xff]
    %v1961 = vld [vmem:[%s1944 + $0x80] sm:$0xff]
    %v1962 = vld [vmem:[%s1944 + $0x88] sm:$0xff]
    %v1963 = vld [vmem:[%s1944 + $0x90] sm:$0xff]
    %v1964 = vld [vmem:[%s1944 + $0x98] sm:$0xff]
    %v1965 = vld [vmem:[%s1944 + $0xa0] sm:$0xff]
    %v1966 = vld [vmem:[%s1944 + $0xa8] sm:$0xff]
    %v1967 = vld [vmem:[%s1944 + $0xb0] sm:$0xff]
    %v1968 = vld [vmem:[%s1944 + $0xb8] sm:$0xff]
    %v1969 = vld [vmem:[%s1944 + $0xc0] sm:$0xff]
    %v1970 = vld [vmem:[%s1944 + $0xc8] sm:$0xff]
    %v1971 = vld [vmem:[%s1944 + $0xd0] sm:$0xff]
    %v1972 = vld [vmem:[%s1944 + $0xd8] sm:$0xff]
    %v1973 = vld [vmem:[%s1944 + $0xe0] sm:$0xff]
    %v1974 = vld [vmem:[%s1944 + $0xe8] sm:$0xff]
    %v1975 = vld [vmem:[%s1944 + $0xf0] sm:$0xff]
    %v1976 = vld [vmem:[%s1944 + $0xf8] sm:$0xff]
    %s1977 = scalar_lea.vmem %s6, 6
    %v1978 = vld [vmem:[%s1977] sm:$0x3]
    %v1980 = vlaneseq
    %v1981 = vshrl.u32 %v1980, 7
    %v1982 = vsub.s32 0, %v1981
    %v1983 = vrot.slane %v1978, %v1982
    %v1984 = vlaneseq
    %v1985 = vshrl.u32 %v1984, 7
    %v1986 = vsub.s32 1, %v1985
    %v1987 = vrot.slane %v1978, %v1986
    %v2022 = vunpack.c.l.b16 %v1945
    %v2023 = vunpack.c.h.b16 %v1945
    %v2024 = vunpack.c.l.b16 %v1946
    %v2025 = vunpack.c.h.b16 %v1946
    %v2026 = vunpack.c.l.b16 %v1947
    %v2027 = vunpack.c.h.b16 %v1947
    %v2028 = vunpack.c.l.b16 %v1948
    %v2029 = vunpack.c.h.b16 %v1948
    %v2030 = vunpack.c.l.b16 %v1949
    %v2031 = vunpack.c.h.b16 %v1949
    %v2032 = vunpack.c.l.b16 %v1950
    %v2033 = vunpack.c.h.b16 %v1950
    %v2034 = vunpack.c.l.b16 %v1951
    %v2035 = vunpack.c.h.b16 %v1951
    %v2036 = vunpack.c.l.b16 %v1952
    %v2037 = vunpack.c.h.b16 %v1952
    %v2038 = vunpack.c.l.b16 %v1953
    %v2039 = vunpack.c.h.b16 %v1953
    %v2040 = vunpack.c.l.b16 %v1954
    %v2041 = vunpack.c.h.b16 %v1954
    %v2042 = vunpack.c.l.b16 %v1955
    %v2043 = vunpack.c.h.b16 %v1955
    %v2044 = vunpack.c.l.b16 %v1956
    %v2045 = vunpack.c.h.b16 %v1956
    %v2046 = vunpack.c.l.b16 %v1957
    %v2047 = vunpack.c.h.b16 %v1957
    %v2048 = vunpack.c.l.b16 %v1958
    %v2049 = vunpack.c.h.b16 %v1958
    %v2050 = vunpack.c.l.b16 %v1959
    %v2051 = vunpack.c.h.b16 %v1959
    %v2052 = vunpack.c.l.b16 %v1960
    %v2053 = vunpack.c.h.b16 %v1960
    %v2054 = vunpack.c.l.b16 %v1961
    %v2055 = vunpack.c.h.b16 %v1961
    %v2056 = vunpack.c.l.b16 %v1962
    %v2057 = vunpack.c.h.b16 %v1962
    %v2058 = vunpack.c.l.b16 %v1963
    %v2059 = vunpack.c.h.b16 %v1963
    %v2060 = vunpack.c.l.b16 %v1964
    %v2061 = vunpack.c.h.b16 %v1964
    %v2062 = vunpack.c.l.b16 %v1965
    %v2063 = vunpack.c.h.b16 %v1965
    %v2064 = vunpack.c.l.b16 %v1966
    %v2065 = vunpack.c.h.b16 %v1966
    %v2066 = vunpack.c.l.b16 %v1967
    %v2067 = vunpack.c.h.b16 %v1967
    %v2068 = vunpack.c.l.b16 %v1968
    %v2069 = vunpack.c.h.b16 %v1968
    %v2070 = vunpack.c.l.b16 %v1969
    %v2071 = vunpack.c.h.b16 %v1969
    %v2072 = vunpack.c.l.b16 %v1970
    %v2073 = vunpack.c.h.b16 %v1970
    %v2074 = vunpack.c.l.b16 %v1971
    %v2075 = vunpack.c.h.b16 %v1971
    %v2076 = vunpack.c.l.b16 %v1972
    %v2077 = vunpack.c.h.b16 %v1972
    %v2078 = vunpack.c.l.b16 %v1973
    %v2079 = vunpack.c.h.b16 %v1973
    %v2080 = vunpack.c.l.b16 %v1974
    %v2081 = vunpack.c.h.b16 %v1974
    %v2082 = vunpack.c.l.b16 %v1975
    %v2083 = vunpack.c.h.b16 %v1975
    %v2084 = vunpack.c.l.b16 %v1976
    %v2085 = vunpack.c.h.b16 %v1976
    %v2086 = vpack.c.b16 %v2024, %v2022
    %v2087 = vpack.c.b16 %v2025, %v2023
    %v2088 = vpack.c.b16 %v2028, %v2026
    %v2089 = vpack.c.b16 %v2029, %v2027
    %v2090 = vpack.c.b16 %v2032, %v2030
    %v2091 = vpack.c.b16 %v2033, %v2031
    %v2092 = vpack.c.b16 %v2036, %v2034
    %v2093 = vpack.c.b16 %v2037, %v2035
    %v2094 = vpack.c.b16 %v2040, %v2038
    %v2095 = vpack.c.b16 %v2041, %v2039
    %v2096 = vpack.c.b16 %v2044, %v2042
    %v2097 = vpack.c.b16 %v2045, %v2043
    %v2098 = vpack.c.b16 %v2048, %v2046
    %v2099 = vpack.c.b16 %v2049, %v2047
    %v2100 = vpack.c.b16 %v2052, %v2050
    %v2101 = vpack.c.b16 %v2053, %v2051
    %v2102 = vpack.c.b16 %v2056, %v2054
    %v2103 = vpack.c.b16 %v2057, %v2055
    %v2104 = vpack.c.b16 %v2060, %v2058
    %v2105 = vpack.c.b16 %v2061, %v2059
    %v2106 = vpack.c.b16 %v2064, %v2062
    %v2107 = vpack.c.b16 %v2065, %v2063
    %v2108 = vpack.c.b16 %v2068, %v2066
    %v2109 = vpack.c.b16 %v2069, %v2067
    %v2110 = vpack.c.b16 %v2072, %v2070
    %v2111 = vpack.c.b16 %v2073, %v2071
    %v2112 = vpack.c.b16 %v2076, %v2074
    %v2113 = vpack.c.b16 %v2077, %v2075
    %v2114 = vpack.c.b16 %v2080, %v2078
    %v2115 = vpack.c.b16 %v2081, %v2079
    %v2116 = vpack.c.b16 %v2084, %v2082
    %v2117 = vpack.c.b16 %v2085, %v2083
    %2150 = vmatprep.subr.bf16.mxu0 %v2087
    %2151 = vmatpush1.bf16.msra.mxu0 %v2086
    %2152 = vmatprep.subr.bf16.mxu0 %v2089
    %2153 = vmatpush1.bf16.msra.mxu0 %v2088
    %2154 = vmatprep.subr.bf16.mxu0 %v2091
    %2155 = vmatpush1.bf16.msra.mxu0 %v2090
    %2156 = vmatprep.subr.bf16.mxu0 %v2093
    %2157 = vmatpush1.bf16.msra.mxu0 %v2092
    %2158 = vmatprep.subr.bf16.mxu0 %v2095
    %2159 = vmatpush1.bf16.msra.mxu0 %v2094
    %2160 = vmatprep.subr.bf16.mxu0 %v2097
    %2161 = vmatpush1.bf16.msra.mxu0 %v2096
    %2162 = vmatprep.subr.bf16.mxu0 %v2099
    %2163 = vmatpush1.bf16.msra.mxu0 %v2098
    %2164 = vmatprep.subr.bf16.mxu0 %v2101
    %2165 = vmatpush1.bf16.msra.mxu0 %v2100
    %2166 = vmatprep.subr.bf16.mxu0 %v2103
    %2167 = vmatpush1.bf16.msra.mxu0 %v2102
    %2168 = vmatprep.subr.bf16.mxu0 %v2105
    %2169 = vmatpush1.bf16.msra.mxu0 %v2104
    %2170 = vmatprep.subr.bf16.mxu0 %v2107
    %2171 = vmatpush1.bf16.msra.mxu0 %v2106
    %2172 = vmatprep.subr.bf16.mxu0 %v2109
    %2173 = vmatpush1.bf16.msra.mxu0 %v2108
    %2174 = vmatprep.subr.bf16.mxu0 %v2111
    %2175 = vmatpush1.bf16.msra.mxu0 %v2110
    %2176 = vmatprep.subr.bf16.mxu0 %v2113
    %2177 = vmatpush1.bf16.msra.mxu0 %v2112
    %2178 = vmatprep.subr.bf16.mxu0 %v2115
    %2179 = vmatpush1.bf16.msra.mxu0 %v2114
    %2180 = vmatprep.subr.bf16.mxu0 %v2117
    %2181 = vmatpush1.bf16.msra.mxu0 %v2116
    %2182 = vmatprep.mubr.bf16.mxu0 %v1943
    %2183 = vmatmul.mubr.bf16.gmra.mrb[0].mxu0 %v1942
    %v2184 = vpop.f32.mrb[0].mxu0
    %v2185 = vadd.f32 %v1983, %v2184
    %v2186 = vpop.f32.mrb[0].mxu0
    %v2187 = vadd.f32 %v1987, %v2186
    %v2188 = vpop.f32.mrb[0].mxu0
    %v2189 = vpop.f32.mrb[0].mxu0
    %2190 = vdwg.mxu0
    %v2191 = vadd.f32 %v2185, %v1689
    %v2192 = vadd.f32 %v2187, %v1690
    %v2193 = vmax.f32 %v2191, 0.0
    %v2194 = vmax.f32 %v2192, 0.0
    %v2195 = vpack.c.bf16 %v2193, %v2193
    %v2196 = vpack.c.bf16 %v2194, %v2194
    %s2197 = scalar_lea.vmem [#allocation5], 1024
    %v2198 = vld [vmem:[%s2197] sm:$0xff]
    %v2199 = vld [vmem:[%s2197 + $0x8] sm:$0xff]
    %v2200 = vld [vmem:[%s2197 + $0x10] sm:$0xff]
    %v2201 = vld [vmem:[%s2197 + $0x18] sm:$0xff]
    %v2202 = vld [vmem:[%s2197 + $0x20] sm:$0xff]
    %v2203 = vld [vmem:[%s2197 + $0x28] sm:$0xff]
    %v2204 = vld [vmem:[%s2197 + $0x30] sm:$0xff]
    %v2205 = vld [vmem:[%s2197 + $0x38] sm:$0xff]
    %v2206 = vld [vmem:[%s2197 + $0x40] sm:$0xff]
    %v2207 = vld [vmem:[%s2197 + $0x48] sm:$0xff]
    %v2208 = vld [vmem:[%s2197 + $0x50] sm:$0xff]
    %v2209 = vld [vmem:[%s2197 + $0x58] sm:$0xff]
    %v2210 = vld [vmem:[%s2197 + $0x60] sm:$0xff]
    %v2211 = vld [vmem:[%s2197 + $0x68] sm:$0xff]
    %v2212 = vld [vmem:[%s2197 + $0x70] sm:$0xff]
    %v2213 = vld [vmem:[%s2197 + $0x78] sm:$0xff]
    %v2214 = vld [vmem:[%s2197 + $0x80] sm:$0xff]
    %v2215 = vld [vmem:[%s2197 + $0x88] sm:$0xff]
    %v2216 = vld [vmem:[%s2197 + $0x90] sm:$0xff]
    %v2217 = vld [vmem:[%s2197 + $0x98] sm:$0xff]
    %v2218 = vld [vmem:[%s2197 + $0xa0] sm:$0xff]
    %v2219 = vld [vmem:[%s2197 + $0xa8] sm:$0xff]
    %v2220 = vld [vmem:[%s2197 + $0xb0] sm:$0xff]
    %v2221 = vld [vmem:[%s2197 + $0xb8] sm:$0xff]
    %v2222 = vld [vmem:[%s2197 + $0xc0] sm:$0xff]
    %v2223 = vld [vmem:[%s2197 + $0xc8] sm:$0xff]
    %v2224 = vld [vmem:[%s2197 + $0xd0] sm:$0xff]
    %v2225 = vld [vmem:[%s2197 + $0xd8] sm:$0xff]
    %v2226 = vld [vmem:[%s2197 + $0xe0] sm:$0xff]
    %v2227 = vld [vmem:[%s2197 + $0xe8] sm:$0xff]
    %v2228 = vld [vmem:[%s2197 + $0xf0] sm:$0xff]
    %v2229 = vld [vmem:[%s2197 + $0xf8] sm:$0xff]
    %s2230 = scalar_lea.vmem %s5, 8
    %v2231 = vld [vmem:[%s2230] sm:$0x3]
    %v2233 = vlaneseq
    %v2234 = vshrl.u32 %v2233, 7
    %v2235 = vsub.s32 0, %v2234
    %v2236 = vrot.slane %v2231, %v2235
    %v2237 = vlaneseq
    %v2238 = vshrl.u32 %v2237, 7
    %v2239 = vsub.s32 1, %v2238
    %v2240 = vrot.slane %v2231, %v2239
    %v2275 = vunpack.c.l.b16 %v2198
    %v2276 = vunpack.c.h.b16 %v2198
    %v2277 = vunpack.c.l.b16 %v2199
    %v2278 = vunpack.c.h.b16 %v2199
    %v2279 = vunpack.c.l.b16 %v2200
    %v2280 = vunpack.c.h.b16 %v2200
    %v2281 = vunpack.c.l.b16 %v2201
    %v2282 = vunpack.c.h.b16 %v2201
    %v2283 = vunpack.c.l.b16 %v2202
    %v2284 = vunpack.c.h.b16 %v2202
    %v2285 = vunpack.c.l.b16 %v2203
    %v2286 = vunpack.c.h.b16 %v2203
    %v2287 = vunpack.c.l.b16 %v2204
    %v2288 = vunpack.c.h.b16 %v2204
    %v2289 = vunpack.c.l.b16 %v2205
    %v2290 = vunpack.c.h.b16 %v2205
    %v2291 = vunpack.c.l.b16 %v2206
    %v2292 = vunpack.c.h.b16 %v2206
    %v2293 = vunpack.c.l.b16 %v2207
    %v2294 = vunpack.c.h.b16 %v2207
    %v2295 = vunpack.c.l.b16 %v2208
    %v2296 = vunpack.c.h.b16 %v2208
    %v2297 = vunpack.c.l.b16 %v2209
    %v2298 = vunpack.c.h.b16 %v2209
    %v2299 = vunpack.c.l.b16 %v2210
    %v2300 = vunpack.c.h.b16 %v2210
    %v2301 = vunpack.c.l.b16 %v2211
    %v2302 = vunpack.c.h.b16 %v2211
    %v2303 = vunpack.c.l.b16 %v2212
    %v2304 = vunpack.c.h.b16 %v2212
    %v2305 = vunpack.c.l.b16 %v2213
    %v2306 = vunpack.c.h.b16 %v2213
    %v2307 = vunpack.c.l.b16 %v2214
    %v2308 = vunpack.c.h.b16 %v2214
    %v2309 = vunpack.c.l.b16 %v2215
    %v2310 = vunpack.c.h.b16 %v2215
    %v2311 = vunpack.c.l.b16 %v2216
    %v2312 = vunpack.c.h.b16 %v2216
    %v2313 = vunpack.c.l.b16 %v2217
    %v2314 = vunpack.c.h.b16 %v2217
    %v2315 = vunpack.c.l.b16 %v2218
    %v2316 = vunpack.c.h.b16 %v2218
    %v2317 = vunpack.c.l.b16 %v2219
    %v2318 = vunpack.c.h.b16 %v2219
    %v2319 = vunpack.c.l.b16 %v2220
    %v2320 = vunpack.c.h.b16 %v2220
    %v2321 = vunpack.c.l.b16 %v2221
    %v2322 = vunpack.c.h.b16 %v2221
    %v2323 = vunpack.c.l.b16 %v2222
    %v2324 = vunpack.c.h.b16 %v2222
    %v2325 = vunpack.c.l.b16 %v2223
    %v2326 = vunpack.c.h.b16 %v2223
    %v2327 = vunpack.c.l.b16 %v2224
    %v2328 = vunpack.c.h.b16 %v2224
    %v2329 = vunpack.c.l.b16 %v2225
    %v2330 = vunpack.c.h.b16 %v2225
    %v2331 = vunpack.c.l.b16 %v2226
    %v2332 = vunpack.c.h.b16 %v2226
    %v2333 = vunpack.c.l.b16 %v2227
    %v2334 = vunpack.c.h.b16 %v2227
    %v2335 = vunpack.c.l.b16 %v2228
    %v2336 = vunpack.c.h.b16 %v2228
    %v2337 = vunpack.c.l.b16 %v2229
    %v2338 = vunpack.c.h.b16 %v2229
    %v2339 = vpack.c.b16 %v2277, %v2275
    %v2340 = vpack.c.b16 %v2278, %v2276
    %v2341 = vpack.c.b16 %v2281, %v2279
    %v2342 = vpack.c.b16 %v2282, %v2280
    %v2343 = vpack.c.b16 %v2285, %v2283
    %v2344 = vpack.c.b16 %v2286, %v2284
    %v2345 = vpack.c.b16 %v2289, %v2287
    %v2346 = vpack.c.b16 %v2290, %v2288
    %v2347 = vpack.c.b16 %v2293, %v2291
    %v2348 = vpack.c.b16 %v2294, %v2292
    %v2349 = vpack.c.b16 %v2297, %v2295
    %v2350 = vpack.c.b16 %v2298, %v2296
    %v2351 = vpack.c.b16 %v2301, %v2299
    %v2352 = vpack.c.b16 %v2302, %v2300
    %v2353 = vpack.c.b16 %v2305, %v2303
    %v2354 = vpack.c.b16 %v2306, %v2304
    %v2355 = vpack.c.b16 %v2309, %v2307
    %v2356 = vpack.c.b16 %v2310, %v2308
    %v2357 = vpack.c.b16 %v2313, %v2311
    %v2358 = vpack.c.b16 %v2314, %v2312
    %v2359 = vpack.c.b16 %v2317, %v2315
    %v2360 = vpack.c.b16 %v2318, %v2316
    %v2361 = vpack.c.b16 %v2321, %v2319
    %v2362 = vpack.c.b16 %v2322, %v2320
    %v2363 = vpack.c.b16 %v2325, %v2323
    %v2364 = vpack.c.b16 %v2326, %v2324
    %v2365 = vpack.c.b16 %v2329, %v2327
    %v2366 = vpack.c.b16 %v2330, %v2328
    %v2367 = vpack.c.b16 %v2333, %v2331
    %v2368 = vpack.c.b16 %v2334, %v2332
    %v2369 = vpack.c.b16 %v2337, %v2335
    %v2370 = vpack.c.b16 %v2338, %v2336
    %2403 = vmatprep.subr.bf16.mxu0 %v2340
    %2404 = vmatpush1.bf16.msra.mxu0 %v2339
    %2405 = vmatprep.subr.bf16.mxu0 %v2342
    %2406 = vmatpush1.bf16.msra.mxu0 %v2341
    %2407 = vmatprep.subr.bf16.mxu0 %v2344
    %2408 = vmatpush1.bf16.msra.mxu0 %v2343
    %2409 = vmatprep.subr.bf16.mxu0 %v2346
    %2410 = vmatpush1.bf16.msra.mxu0 %v2345
    %2411 = vmatprep.subr.bf16.mxu0 %v2348
    %2412 = vmatpush1.bf16.msra.mxu0 %v2347
    %2413 = vmatprep.subr.bf16.mxu0 %v2350
    %2414 = vmatpush1.bf16.msra.mxu0 %v2349
    %2415 = vmatprep.subr.bf16.mxu0 %v2352
    %2416 = vmatpush1.bf16.msra.mxu0 %v2351
    %2417 = vmatprep.subr.bf16.mxu0 %v2354
    %2418 = vmatpush1.bf16.msra.mxu0 %v2353
    %2419 = vmatprep.subr.bf16.mxu0 %v2356
    %2420 = vmatpush1.bf16.msra.mxu0 %v2355
    %2421 = vmatprep.subr.bf16.mxu0 %v2358
    %2422 = vmatpush1.bf16.msra.mxu0 %v2357
    %2423 = vmatprep.subr.bf16.mxu0 %v2360
    %2424 = vmatpush1.bf16.msra.mxu0 %v2359
    %2425 = vmatprep.subr.bf16.mxu0 %v2362
    %2426 = vmatpush1.bf16.msra.mxu0 %v2361
    %2427 = vmatprep.subr.bf16.mxu0 %v2364
    %2428 = vmatpush1.bf16.msra.mxu0 %v2363
    %2429 = vmatprep.subr.bf16.mxu0 %v2366
    %2430 = vmatpush1.bf16.msra.mxu0 %v2365
    %2431 = vmatprep.subr.bf16.mxu0 %v2368
    %2432 = vmatpush1.bf16.msra.mxu0 %v2367
    %2433 = vmatprep.subr.bf16.mxu0 %v2370
    %2434 = vmatpush1.bf16.msra.mxu0 %v2369
    %2435 = vmatprep.mubr.bf16.mxu0 %v2196
    %2436 = vmatmul.mubr.bf16.gmra.mrb[0].mxu0 %v2195
    %v2437 = vpop.f32.mrb[0].mxu0
    %v2438 = vadd.f32 %v2236, %v2437
    %v2439 = vpop.f32.mrb[0].mxu0
    %v2440 = vadd.f32 %v2240, %v2439
    %v2441 = vpop.f32.mrb[0].mxu0
    %v2442 = vpop.f32.mrb[0].mxu0
    %2443 = vdwg.mxu0
    %v2444 = vmax.f32 %v2438, 0.0
    %v2445 = vmax.f32 %v2440, 0.0
    %v2446 = vpack.c.bf16 %v2444, %v2444
    %v2447 = vpack.c.bf16 %v2445, %v2445
    %s2448 = scalar_lea.vmem [#allocation7], 1024
    %v2449 = vld [vmem:[%s2448] sm:$0xff]
    %v2450 = vld [vmem:[%s2448 + $0x8] sm:$0xff]
    %v2451 = vld [vmem:[%s2448 + $0x10] sm:$0xff]
    %v2452 = vld [vmem:[%s2448 + $0x18] sm:$0xff]
    %v2453 = vld [vmem:[%s2448 + $0x20] sm:$0xff]
    %v2454 = vld [vmem:[%s2448 + $0x28] sm:$0xff]
    %v2455 = vld [vmem:[%s2448 + $0x30] sm:$0xff]
    %v2456 = vld [vmem:[%s2448 + $0x38] sm:$0xff]
    %v2457 = vld [vmem:[%s2448 + $0x40] sm:$0xff]
    %v2458 = vld [vmem:[%s2448 + $0x48] sm:$0xff]
    %v2459 = vld [vmem:[%s2448 + $0x50] sm:$0xff]
    %v2460 = vld [vmem:[%s2448 + $0x58] sm:$0xff]
    %v2461 = vld [vmem:[%s2448 + $0x60] sm:$0xff]
    %v2462 = vld [vmem:[%s2448 + $0x68] sm:$0xff]
    %v2463 = vld [vmem:[%s2448 + $0x70] sm:$0xff]
    %v2464 = vld [vmem:[%s2448 + $0x78] sm:$0xff]
    %v2465 = vld [vmem:[%s2448 + $0x80] sm:$0xff]
    %v2466 = vld [vmem:[%s2448 + $0x88] sm:$0xff]
    %v2467 = vld [vmem:[%s2448 + $0x90] sm:$0xff]
    %v2468 = vld [vmem:[%s2448 + $0x98] sm:$0xff]
    %v2469 = vld [vmem:[%s2448 + $0xa0] sm:$0xff]
    %v2470 = vld [vmem:[%s2448 + $0xa8] sm:$0xff]
    %v2471 = vld [vmem:[%s2448 + $0xb0] sm:$0xff]
    %v2472 = vld [vmem:[%s2448 + $0xb8] sm:$0xff]
    %v2473 = vld [vmem:[%s2448 + $0xc0] sm:$0xff]
    %v2474 = vld [vmem:[%s2448 + $0xc8] sm:$0xff]
    %v2475 = vld [vmem:[%s2448 + $0xd0] sm:$0xff]
    %v2476 = vld [vmem:[%s2448 + $0xd8] sm:$0xff]
    %v2477 = vld [vmem:[%s2448 + $0xe0] sm:$0xff]
    %v2478 = vld [vmem:[%s2448 + $0xe8] sm:$0xff]
    %v2479 = vld [vmem:[%s2448 + $0xf0] sm:$0xff]
    %v2480 = vld [vmem:[%s2448 + $0xf8] sm:$0xff]
    %s2481 = scalar_lea.vmem %s6, 8
    %v2482 = vld [vmem:[%s2481] sm:$0x3]
    %v2484 = vlaneseq
    %v2485 = vshrl.u32 %v2484, 7
    %v2486 = vsub.s32 0, %v2485
    %v2487 = vrot.slane %v2482, %v2486
    %v2488 = vlaneseq
    %v2489 = vshrl.u32 %v2488, 7
    %v2490 = vsub.s32 1, %v2489
    %v2491 = vrot.slane %v2482, %v2490
    %v2526 = vunpack.c.l.b16 %v2449
    %v2527 = vunpack.c.h.b16 %v2449
    %v2528 = vunpack.c.l.b16 %v2450
    %v2529 = vunpack.c.h.b16 %v2450
    %v2530 = vunpack.c.l.b16 %v2451
    %v2531 = vunpack.c.h.b16 %v2451
    %v2532 = vunpack.c.l.b16 %v2452
    %v2533 = vunpack.c.h.b16 %v2452
    %v2534 = vunpack.c.l.b16 %v2453
    %v2535 = vunpack.c.h.b16 %v2453
    %v2536 = vunpack.c.l.b16 %v2454
    %v2537 = vunpack.c.h.b16 %v2454
    %v2538 = vunpack.c.l.b16 %v2455
    %v2539 = vunpack.c.h.b16 %v2455
    %v2540 = vunpack.c.l.b16 %v2456
    %v2541 = vunpack.c.h.b16 %v2456
    %v2542 = vunpack.c.l.b16 %v2457
    %v2543 = vunpack.c.h.b16 %v2457
    %v2544 = vunpack.c.l.b16 %v2458
    %v2545 = vunpack.c.h.b16 %v2458
    %v2546 = vunpack.c.l.b16 %v2459
    %v2547 = vunpack.c.h.b16 %v2459
    %v2548 = vunpack.c.l.b16 %v2460
    %v2549 = vunpack.c.h.b16 %v2460
    %v2550 = vunpack.c.l.b16 %v2461
    %v2551 = vunpack.c.h.b16 %v2461
    %v2552 = vunpack.c.l.b16 %v2462
    %v2553 = vunpack.c.h.b16 %v2462
    %v2554 = vunpack.c.l.b16 %v2463
    %v2555 = vunpack.c.h.b16 %v2463
    %v2556 = vunpack.c.l.b16 %v2464
    %v2557 = vunpack.c.h.b16 %v2464
    %v2558 = vunpack.c.l.b16 %v2465
    %v2559 = vunpack.c.h.b16 %v2465
    %v2560 = vunpack.c.l.b16 %v2466
    %v2561 = vunpack.c.h.b16 %v2466
    %v2562 = vunpack.c.l.b16 %v2467
    %v2563 = vunpack.c.h.b16 %v2467
    %v2564 = vunpack.c.l.b16 %v2468
    %v2565 = vunpack.c.h.b16 %v2468
    %v2566 = vunpack.c.l.b16 %v2469
    %v2567 = vunpack.c.h.b16 %v2469
    %v2568 = vunpack.c.l.b16 %v2470
    %v2569 = vunpack.c.h.b16 %v2470
    %v2570 = vunpack.c.l.b16 %v2471
    %v2571 = vunpack.c.h.b16 %v2471
    %v2572 = vunpack.c.l.b16 %v2472
    %v2573 = vunpack.c.h.b16 %v2472
    %v2574 = vunpack.c.l.b16 %v2473
    %v2575 = vunpack.c.h.b16 %v2473
    %v2576 = vunpack.c.l.b16 %v2474
    %v2577 = vunpack.c.h.b16 %v2474
    %v2578 = vunpack.c.l.b16 %v2475
    %v2579 = vunpack.c.h.b16 %v2475
    %v2580 = vunpack.c.l.b16 %v2476
    %v2581 = vunpack.c.h.b16 %v2476
    %v2582 = vunpack.c.l.b16 %v2477
    %v2583 = vunpack.c.h.b16 %v2477
    %v2584 = vunpack.c.l.b16 %v2478
    %v2585 = vunpack.c.h.b16 %v2478
    %v2586 = vunpack.c.l.b16 %v2479
    %v2587 = vunpack.c.h.b16 %v2479
    %v2588 = vunpack.c.l.b16 %v2480
    %v2589 = vunpack.c.h.b16 %v2480
    %v2590 = vpack.c.b16 %v2528, %v2526
    %v2591 = vpack.c.b16 %v2529, %v2527
    %v2592 = vpack.c.b16 %v2532, %v2530
    %v2593 = vpack.c.b16 %v2533, %v2531
    %v2594 = vpack.c.b16 %v2536, %v2534
    %v2595 = vpack.c.b16 %v2537, %v2535
    %v2596 = vpack.c.b16 %v2540, %v2538
    %v2597 = vpack.c.b16 %v2541, %v2539
    %v2598 = vpack.c.b16 %v2544, %v2542
    %v2599 = vpack.c.b16 %v2545, %v2543
    %v2600 = vpack.c.b16 %v2548, %v2546
    %v2601 = vpack.c.b16 %v2549, %v2547
    %v2602 = vpack.c.b16 %v2552, %v2550
    %v2603 = vpack.c.b16 %v2553, %v2551
    %v2604 = vpack.c.b16 %v2556, %v2554
    %v2605 = vpack.c.b16 %v2557, %v2555
    %v2606 = vpack.c.b16 %v2560, %v2558
    %v2607 = vpack.c.b16 %v2561, %v2559
    %v2608 = vpack.c.b16 %v2564, %v2562
    %v2609 = vpack.c.b16 %v2565, %v2563
    %v2610 = vpack.c.b16 %v2568, %v2566
    %v2611 = vpack.c.b16 %v2569, %v2567
    %v2612 = vpack.c.b16 %v2572, %v2570
    %v2613 = vpack.c.b16 %v2573, %v2571
    %v2614 = vpack.c.b16 %v2576, %v2574
    %v2615 = vpack.c.b16 %v2577, %v2575
    %v2616 = vpack.c.b16 %v2580, %v2578
    %v2617 = vpack.c.b16 %v2581, %v2579
    %v2618 = vpack.c.b16 %v2584, %v2582
    %v2619 = vpack.c.b16 %v2585, %v2583
    %v2620 = vpack.c.b16 %v2588, %v2586
    %v2621 = vpack.c.b16 %v2589, %v2587
    %2654 = vmatprep.subr.bf16.mxu0 %v2591
    %2655 = vmatpush1.bf16.msra.mxu0 %v2590
    %2656 = vmatprep.subr.bf16.mxu0 %v2593
    %2657 = vmatpush1.bf16.msra.mxu0 %v2592
    %2658 = vmatprep.subr.bf16.mxu0 %v2595
    %2659 = vmatpush1.bf16.msra.mxu0 %v2594
    %2660 = vmatprep.subr.bf16.mxu0 %v2597
    %2661 = vmatpush1.bf16.msra.mxu0 %v2596
    %2662 = vmatprep.subr.bf16.mxu0 %v2599
    %2663 = vmatpush1.bf16.msra.mxu0 %v2598
    %2664 = vmatprep.subr.bf16.mxu0 %v2601
    %2665 = vmatpush1.bf16.msra.mxu0 %v2600
    %2666 = vmatprep.subr.bf16.mxu0 %v2603
    %2667 = vmatpush1.bf16.msra.mxu0 %v2602
    %2668 = vmatprep.subr.bf16.mxu0 %v2605
    %2669 = vmatpush1.bf16.msra.mxu0 %v2604
    %2670 = vmatprep.subr.bf16.mxu0 %v2607
    %2671 = vmatpush1.bf16.msra.mxu0 %v2606
    %2672 = vmatprep.subr.bf16.mxu0 %v2609
    %2673 = vmatpush1.bf16.msra.mxu0 %v2608
    %2674 = vmatprep.subr.bf16.mxu0 %v2611
    %2675 = vmatpush1.bf16.msra.mxu0 %v2610
    %2676 = vmatprep.subr.bf16.mxu0 %v2613
    %2677 = vmatpush1.bf16.msra.mxu0 %v2612
    %2678 = vmatprep.subr.bf16.mxu0 %v2615
    %2679 = vmatpush1.bf16.msra.mxu0 %v2614
    %2680 = vmatprep.subr.bf16.mxu0 %v2617
    %2681 = vmatpush1.bf16.msra.mxu0 %v2616
    %2682 = vmatprep.subr.bf16.mxu0 %v2619
    %2683 = vmatpush1.bf16.msra.mxu0 %v2618
    %2684 = vmatprep.subr.bf16.mxu0 %v2621
    %2685 = vmatpush1.bf16.msra.mxu0 %v2620
    %2686 = vmatprep.mubr.bf16.mxu0 %v2447
    %2687 = vmatmul.mubr.bf16.gmra.mrb[0].mxu0 %v2446
    %v2688 = vpop.f32.mrb[0].mxu0
    %v2689 = vadd.f32 %v2487, %v2688
    %v2690 = vpop.f32.mrb[0].mxu0
    %v2691 = vadd.f32 %v2491, %v2690
    %v2692 = vpop.f32.mrb[0].mxu0
    %v2693 = vpop.f32.mrb[0].mxu0
    %2694 = vdwg.mxu0
    %v2695 = vadd.f32 %v2689, %v2193
    %v2696 = vadd.f32 %v2691, %v2194
    %v2697 = vmax.f32 %v2695, 0.0
    %v2698 = vmax.f32 %v2696, 0.0
    %v2699 = vpack.c.bf16 %v2697, %v2697
    %v2700 = vpack.c.bf16 %v2698, %v2698
    %v2701 = vld [vmem:[#allocation8] sm:$0xf]
    %v2702 = vld [vmem:[#allocation8 + $0x4] sm:$0xf]
    %v2703 = vld [vmem:[#allocation8 + $0x8] sm:$0xf]
    %v2704 = vld [vmem:[#allocation8 + $0xc] sm:$0xf]
    %v2705 = vld [vmem:[#allocation8 + $0x10] sm:$0xf]
    %v2706 = vld [vmem:[#allocation8 + $0x14] sm:$0xf]
    %v2707 = vld [vmem:[#allocation8 + $0x18] sm:$0xf]
    %v2708 = vld [vmem:[#allocation8 + $0x1c] sm:$0xf]
    %v2709 = vld [vmem:[#allocation8 + $0x20] sm:$0xf]
    %v2710 = vld [vmem:[#allocation8 + $0x24] sm:$0xf]
    %v2711 = vld [vmem:[#allocation8 + $0x28] sm:$0xf]
    %v2712 = vld [vmem:[#allocation8 + $0x2c] sm:$0xf]
    %v2713 = vld [vmem:[#allocation8 + $0x30] sm:$0xf]
    %v2714 = vld [vmem:[#allocation8 + $0x34] sm:$0xf]
    %v2715 = vld [vmem:[#allocation8 + $0x38] sm:$0xf]
    %v2716 = vld [vmem:[#allocation8 + $0x3c] sm:$0xf]
    %v2717 = vld [vmem:[#allocation8 + $0x40] sm:$0xf]
    %v2718 = vld [vmem:[#allocation8 + $0x44] sm:$0xf]
    %v2719 = vld [vmem:[#allocation8 + $0x48] sm:$0xf]
    %v2720 = vld [vmem:[#allocation8 + $0x4c] sm:$0xf]
    %v2721 = vld [vmem:[#allocation8 + $0x50] sm:$0xf]
    %v2722 = vld [vmem:[#allocation8 + $0x54] sm:$0xf]
    %v2723 = vld [vmem:[#allocation8 + $0x58] sm:$0xf]
    %v2724 = vld [vmem:[#allocation8 + $0x5c] sm:$0xf]
    %v2725 = vld [vmem:[#allocation8 + $0x60] sm:$0xf]
    %v2726 = vld [vmem:[#allocation8 + $0x64] sm:$0xf]
    %v2727 = vld [vmem:[#allocation8 + $0x68] sm:$0xf]
    %v2728 = vld [vmem:[#allocation8 + $0x6c] sm:$0xf]
    %v2729 = vld [vmem:[#allocation8 + $0x70] sm:$0xf]
    %v2730 = vld [vmem:[#allocation8 + $0x74] sm:$0xf]
    %v2731 = vld [vmem:[#allocation8 + $0x78] sm:$0xf]
    %v2732 = vld [vmem:[#allocation8 + $0x7c] sm:$0xf]
    %v2733 = vld [vmem:[%s8] sm:$0x1]
    %v2735 = vlaneseq
    %v2736 = vshrl.u32 %v2735, 7
    %v2737 = vsub.s32 0, %v2736
    %v2738 = vrot.slane %v2733, %v2737
    %v2772 = vunpack.c.l.b16 %v2701
    %v2773 = vunpack.c.l.b16 %v2702
    %v2774 = vunpack.c.l.b16 %v2703
    %v2775 = vunpack.c.l.b16 %v2704
    %v2776 = vunpack.c.l.b16 %v2705
    %v2777 = vunpack.c.l.b16 %v2706
    %v2778 = vunpack.c.l.b16 %v2707
    %v2779 = vunpack.c.l.b16 %v2708
    %v2780 = vunpack.c.l.b16 %v2709
    %v2781 = vunpack.c.l.b16 %v2710
    %v2782 = vunpack.c.l.b16 %v2711
    %v2783 = vunpack.c.l.b16 %v2712
    %v2784 = vunpack.c.l.b16 %v2713
    %v2785 = vunpack.c.l.b16 %v2714
    %v2786 = vunpack.c.l.b16 %v2715
    %v2787 = vunpack.c.l.b16 %v2716
    %v2788 = vunpack.c.l.b16 %v2717
    %v2789 = vunpack.c.l.b16 %v2718
    %v2790 = vunpack.c.l.b16 %v2719
    %v2791 = vunpack.c.l.b16 %v2720
    %v2792 = vunpack.c.l.b16 %v2721
    %v2793 = vunpack.c.l.b16 %v2722
    %v2794 = vunpack.c.l.b16 %v2723
    %v2795 = vunpack.c.l.b16 %v2724
    %v2796 = vunpack.c.l.b16 %v2725
    %v2797 = vunpack.c.l.b16 %v2726
    %v2798 = vunpack.c.l.b16 %v2727
    %v2799 = vunpack.c.l.b16 %v2728
    %v2800 = vunpack.c.l.b16 %v2729
    %v2801 = vunpack.c.l.b16 %v2730
    %v2802 = vunpack.c.l.b16 %v2731
    %v2803 = vunpack.c.l.b16 %v2732
    %v2804 = vpack.c.b16 %v2773, %v2772
    %v2805 = vpack.c.b16 %v2775, %v2774
    %v2806 = vpack.c.b16 %v2777, %v2776
    %v2807 = vpack.c.b16 %v2779, %v2778
    %v2808 = vpack.c.b16 %v2781, %v2780
    %v2809 = vpack.c.b16 %v2783, %v2782
    %v2810 = vpack.c.b16 %v2785, %v2784
    %v2811 = vpack.c.b16 %v2787, %v2786
    %v2812 = vpack.c.b16 %v2789, %v2788
    %v2813 = vpack.c.b16 %v2791, %v2790
    %v2814 = vpack.c.b16 %v2793, %v2792
    %v2815 = vpack.c.b16 %v2795, %v2794
    %v2816 = vpack.c.b16 %v2797, %v2796
    %v2817 = vpack.c.b16 %v2799, %v2798
    %v2818 = vpack.c.b16 %v2801, %v2800
    %v2819 = vpack.c.b16 %v2803, %v2802
    %2836 = vmatprep.subr.bf16.mxu0 0
    %2837 = vmatpush1.bf16.msra.mxu0 %v2804
    %2838 = vmatprep.subr.bf16.mxu0 0
    %2839 = vmatpush1.bf16.msra.mxu0 %v2805
    %2840 = vmatprep.subr.bf16.mxu0 0
    %2841 = vmatpush1.bf16.msra.mxu0 %v2806
    %2842 = vmatprep.subr.bf16.mxu0 0
    %2843 = vmatpush1.bf16.msra.mxu0 %v2807
    %2844 = vmatprep.subr.bf16.mxu0 0
    %2845 = vmatpush1.bf16.msra.mxu0 %v2808
    %2846 = vmatprep.subr.bf16.mxu0 0
    %2847 = vmatpush1.bf16.msra.mxu0 %v2809
    %2848 = vmatprep.subr.bf16.mxu0 0
    %2849 = vmatpush1.bf16.msra.mxu0 %v2810
    %2850 = vmatprep.subr.bf16.mxu0 0
    %2851 = vmatpush1.bf16.msra.mxu0 %v2811
    %2852 = vmatprep.subr.bf16.mxu0 0
    %2853 = vmatpush1.bf16.msra.mxu0 %v2812
    %2854 = vmatprep.subr.bf16.mxu0 0
    %2855 = vmatpush1.bf16.msra.mxu0 %v2813
    %2856 = vmatprep.subr.bf16.mxu0 0
    %2857 = vmatpush1.bf16.msra.mxu0 %v2814
    %2858 = vmatprep.subr.bf16.mxu0 0
    %2859 = vmatpush1.bf16.msra.mxu0 %v2815
    %2860 = vmatprep.subr.bf16.mxu0 0
    %2861 = vmatpush1.bf16.msra.mxu0 %v2816
    %2862 = vmatprep.subr.bf16.mxu0 0
    %2863 = vmatpush1.bf16.msra.mxu0 %v2817
    %2864 = vmatprep.subr.bf16.mxu0 0
    %2865 = vmatpush1.bf16.msra.mxu0 %v2818
    %2866 = vmatprep.subr.bf16.mxu0 0
    %2867 = vmatpush1.bf16.msra.mxu0 %v2819
    %2868 = vmatprep.mubr.bf16.mxu0 %v2700
    %2869 = vmatmul.mubr.bf16.gmra.mrb[0].mxu0 %v2699
    %v2870 = vpop.f32.mrb[0].mxu0
    %v2871 = vadd.f32 %v2738, %v2870
    %v2872 = vpop.f32.mrb[0].mxu0
    %v2873 = vpop.f32.mrb[0].mxu0
    %v2874 = vpop.f32.mrb[0].mxu0
    %2875 = vdwg.mxu0
    %2876 = vst [vmem:[#allocation10] sm:$0xff] %v2871
    // Predicated region
    $region54: #{tpu_custom_call.1} parent=1 // pred_check
      _
    $region55: #{tpu_custom_call.1} parent=1 // pred_check_branch
      %2878 = sbr.rel (0) target = $region57
    $region56: #{tpu_custom_call.1} parent=1 // pred_region
      %s2880 = ssub.s32 128, 128
      %2881 = vsyncadd [#allocation4], %s2880
      %s2883 = sshll.u32 [#allocation10], 4
      %s2884 = int_to_ptr.vmem [resolvable:$true] %s2883
      %2886 = dma.vmem_to_hbm [thread:$0]  %s2884, 128, %s9, [#allocation4]
    $region57: #{tpu_custom_call.1} parent=1 // pred_fallthru
      _
    // Predicated region
    $region58: #{tpu_custom_call.1} parent=1 // pred_check
      _
    $region59: #{tpu_custom_call.1} parent=1 // pred_check_branch
      %2888 = sbr.rel (0) target = $region61
    $region60: #{tpu_custom_call.1} parent=1 // pred_region
      %2889 = dma.done [#allocation4], 128
    $region61: #{tpu_custom_call.1} parent=1 // pred_fallthru
      _
    %2890 = vsyncpa [#allocation3], 1
    %2891 = vsyncpa [#allocation6], 1
    %2892 = vsyncpa [#allocation9], 1
    %2893 = vsyncpa [#allocation4], 1

// kernel: tpu_custom_call.1
$region0: #{tpu_custom_call.1}
  #allocation0 [shape = 'u32[]', space=smem, size = 0x4, offset = 0x4, fixed_abs, tag = 'smem constant byte address 0x4 - core index']
  #allocation1 [shape = 'u32[144,128]{1,0:T(1,128)}', space=vmem, size = 0x12000, scoped, tag = 'internal scratch']
  %s0 = inlined_call_operand.vmem [shape: f32[8,3], index: 0, kind: input, shape index: {}]
  %s1 = inlined_call_operand.hbm [shape: f32[3,256], index: 1, kind: input, shape index: {}]
  %s2 = inlined_call_operand.vmem [shape: f32[1,256], index: 2, kind: input, shape index: {}]
  %s3 = inlined_call_operand.hbm [shape: bf16[5,256,256], index: 3, kind: input, shape index: {}]
  %s4 = inlined_call_operand.hbm [shape: bf16[5,256,256], index: 4, kind: input, shape index: {}]
  %s5 = inlined_call_operand.vmem [shape: f32[5,1,256], index: 5, kind: input, shape index: {}]
  %s6 = inlined_call_operand.vmem [shape: f32[5,1,256], index: 6, kind: input, shape index: {}]
  %s7 = inlined_call_operand.hbm [shape: bf16[256,128], index: 7, kind: input, shape index: {}]
  %s8 = inlined_call_operand.vmem [shape: f32[1,128], index: 8, kind: input, shape index: {}]
  %s9 = inlined_call_operand.hbm [shape: f32[8,128], index: 9, kind: output, shape index: {}]
  %s10 = sld [smem:[#allocation0]]
  $region62: #{tpu_custom_call.1} parent=0
    _
  %s12 = ssub.s32 1, %s10
  %s13 = scalar_select 0, %s12, %s10
  $region1: #{tpu_custom_call.1} parent=0
    #allocation2 [shape = 'u8[4096]{0}', space=vmem, size = 0x1000, scoped, tag = 'input window, operand 1, single buffered']
    #allocation3 [shape = 's32[1]{0}', space=sflag, size = 0x4, scoped, tag = 'scoped memory for tpu_custom_call.1']
    #allocation4 [shape = 's32[1]{0}', space=sflag, size = 0x4, scoped, tag = 'scoped memory for tpu_custom_call.1']
    #allocation5 [shape = 'u8[655360]{0}', space=vmem, size = 0xa0000, scoped, tag = 'input window, operand 3, single buffered']
    #allocation6 [shape = 's32[1]{0}', space=sflag, size = 0x4, scoped, tag = 'scoped memory for tpu_custom_call.1']
    #allocation7 [shape = 'u8[655360]{0}', space=vmem, size = 0xa0000, scoped, tag = 'input window, operand 4, single buffered']
    #allocation8 [shape = 'u8[65536]{0}', space=vmem, size = 0x10000, scoped, tag = 'input window, operand 7, single buffered']
    #allocation9 [shape = 's32[1]{0}', space=sflag, size = 0x4, scoped, tag = 'scoped memory for tpu_custom_call.1']
    #allocation10 [shape = 'u8[4096]{0}', space=vmem, size = 0x1000, scoped, tag = 'output window, operand 0, single buffered']
    %14 = vsyncpa [#allocation3], 0
    %15 = vsyncpa [#allocation6], 0
    %16 = vsyncpa [#allocation9], 0
    %17 = vsyncpa [#allocation4], 0
    // Predicated region
    $region2: #{tpu_custom_call.1} parent=1 // pred_check
      _
    $region3: #{tpu_custom_call.1} parent=1 // pred_check_branch
      %19 = sbr.rel (0) target = $region5
    $region4: #{tpu_custom_call.1} parent=1 // pred_region
      _
    $region5: #{tpu_custom_call.1} parent=1 // pred_fallthru
      _
    // Predicated region
    $region6: #{tpu_custom_call.1} parent=1 // pred_check
      _
    $region7: #{tpu_custom_call.1} parent=1 // pred_check_branch
      %21 = sbr.rel (0) target = $region9
    $region8: #{tpu_custom_call.1} parent=1 // pred_region
      %s23 = ssub.s32 128, 128
      %24 = vsyncadd [#allocation3], %s23
      %s26 = sshll.u32 [#allocation2], 4
      %s27 = int_to_ptr.vmem [resolvable:$true] %s26
      %29 = dma.hbm_to_vmem [thread:$0]  %s1, 128, %s27, [#allocation3]
    $region9: #{tpu_custom_call.1} parent=1 // pred_fallthru
      _
    // Predicated region
    $region10: #{tpu_custom_call.1} parent=1 // pred_check
      _
    $region11: #{tpu_custom_call.1} parent=1 // pred_check_branch
      %31 = sbr.rel (0) target = $region13
    $region12: #{tpu_custom_call.1} parent=1 // pred_region
      _
    $region13: #{tpu_custom_call.1} parent=1 // pred_fallthru
      _
    // Predicated region
    $region14: #{tpu_custom_call.1} parent=1 // pred_check
      _
    $region15: #{tpu_custom_call.1} parent=1 // pred_check_branch
      %33 = sbr.rel (0) target = $region17
    $region16: #{tpu_custom_call.1} parent=1 // pred_region
      %s35 = ssub.s32 20480, 20480
      %36 = vsyncadd [#allocation6], %s35
      %s37 = sshll.u32 [#allocation5], 4
      %s38 = int_to_ptr.vmem [resolvable:$true] %s37
      %43 = dma.hbm_to_vmem [thread:$0]  %s3, 20480, %s38, [#allocation6], 128, 128, 8
    $region17: #{tpu_custom_call.1} parent=1 // pred_fallthru
      _
    // Predicated region
    $region18: #{tpu_custom_call.1} parent=1 // pred_check
      _
    $region19: #{tpu_custom_call.1} parent=1 // pred_check_branch
      %45 = sbr.rel (0) target = $region21
    $region20: #{tpu_custom_call.1} parent=1 // pred_region
      %s47 = ssub.s32 20480, 20480
      %48 = vsyncadd [#allocation6], %s47
      %s49 = sshll.u32 [#allocation7], 4
      %s50 = int_to_ptr.vmem [resolvable:$true] %s49
      %55 = dma.hbm_to_vmem [thread:$0]  %s4, 20480, %s50, [#allocation6], 128, 128, 8
    $region21: #{tpu_custom_call.1} parent=1 // pred_fallthru
      _
    // Predicated region
    $region22: #{tpu_custom_call.1} parent=1 // pred_check
      _
    $region23: #{tpu_custom_call.1} parent=1 // pred_check_branch
      %57 = sbr.rel (0) target = $region25
    $region24: #{tpu_custom_call.1} parent=1 // pred_region
      _
    $region25: #{tpu_custom_call.1} parent=1 // pred_fallthru
      _
    // Predicated region
    $region26: #{tpu_custom_call.1} parent=1 // pred_check
      _
    $region27: #{tpu_custom_call.1} parent=1 // pred_check_branch
      %59 = sbr.rel (0) target = $region29
    $region28: #{tpu_custom_call.1} parent=1 // pred_region
      _
    $region29: #{tpu_custom_call.1} parent=1 // pred_fallthru
      _
    // Predicated region
    $region30: #{tpu_custom_call.1} parent=1 // pred_check
      _
    $region31: #{tpu_custom_call.1} parent=1 // pred_check_branch
      %61 = sbr.rel (0) target = $region33
    $region32: #{tpu_custom_call.1} parent=1 // pred_region
      %s63 = ssub.s32 2048, 2048
      %64 = vsyncadd [#allocation9], %s63
      %s65 = sshll.u32 [#allocation8], 4
      %s66 = int_to_ptr.vmem [resolvable:$true] %s65
      %71 = dma.hbm_to_vmem [thread:$0]  %s7, 2048, %s66, [#allocation9], 64, 64, 4
    $region33: #{tpu_custom_call.1} parent=1 // pred_fallthru
      _
    // Predicated region
    $region34: #{tpu_custom_call.1} parent=1 // pred_check
      _
    $region35: #{tpu_custom_call.1} parent=1 // pred_check_branch
      %73 = sbr.rel (0) target = $region37
    $region36: #{tpu_custom_call.1} parent=1 // pred_region
      _
    $region37: #{tpu_custom_call.1} parent=1 // pred_fallthru
      _
    // Predicated region
    $region38: #{tpu_custom_call.1} parent=1 // pred_check
      _
    $region39: #{tpu_custom_call.1} parent=1 // pred_check_branch
      %75 = sbr.rel (0) target = $region41
    $region40: #{tpu_custom_call.1} parent=1 // pred_region
      %76 = dma.done [#allocation3], 128
    $region41: #{tpu_custom_call.1} parent=1 // pred_fallthru
      _
    // Predicated region
    $region42: #{tpu_custom_call.1} parent=1 // pred_check
      _
    $region43: #{tpu_custom_call.1} parent=1 // pred_check_branch
      %78 = sbr.rel (0) target = $region45
    $region44: #{tpu_custom_call.1} parent=1 // pred_region
      %79 = dma.done [#allocation6], 20480
    $region45: #{tpu_custom_call.1} parent=1 // pred_fallthru
      _
    // Predicated region
    $region46: #{tpu_custom_call.1} parent=1 // pred_check
      _
    $region47: #{tpu_custom_call.1} parent=1 // pred_check_branch
      %81 = sbr.rel (0) target = $region49
    $region48: #{tpu_custom_call.1} parent=1 // pred_region
      %82 = dma.done [#allocation6], 20480
    $region49: #{tpu_custom_call.1} parent=1 // pred_fallthru
      _
    // Predicated region
    $region50: #{tpu_custom_call.1} parent=1 // pred_check
      _
    $region51: #{tpu_custom_call.1} parent=1 // pred_check_branch
      %84 = sbr.rel (0) target = $region53
    $region52: #{tpu_custom_call.1} parent=1 // pred_region
      %85 = dma.done [#allocation9], 2048
    $region53: #{tpu_custom_call.1} parent=1 // pred_fallthru
      _
    %v87 = vld [vmem:[%s0] sm:$0xff]
    %v88 = vld [vmem:[#allocation2] sm:$0x77]
    %90 = vset.pattern.permute.xlu0 0
    %91 = vperm.xlu0 %90, %v87
    %v92 = vpop.permute.xlu0 %91
    %v95 = vlaneseq
    %v96 = vshrl.u32 %v95, 7
    %v97 = vsub.s32 0, %v96
    %v98 = vrot.slane %v88, %v97
    %v99 = vlaneseq
    %v100 = vshrl.u32 %v99, 7
    %v101 = vsub.s32 4, %v100
    %v102 = vrot.slane %v88, %v101
    %v105 = vlaneseq
    %v106 = vshrl.u32 %v105, 7
    %v107 = vsub.s32 0, %v106
    %v108 = vrot.slane %v98, %v107
    %v109 = vlaneseq
    %v110 = vshrl.u32 %v109, 7
    %v111 = vsub.s32 0, %v110
    %v112 = vrot.slane %v102, %v111
    %v113 = vmul.f32 %v92, %v108
    %v114 = vmul.f32 %v92, %v112
    %115 = vset.pattern.permute.xlu0 1
    %116 = vperm.xlu0 %115, %v87
    %v117 = vpop.permute.xlu0 %116
    %v119 = vlaneseq
    %v120 = vshrl.u32 %v119, 7
    %v121 = vsub.s32 1, %v120
    %v122 = vrot.slane %v88, %v121
    %v123 = vlaneseq
    %v124 = vshrl.u32 %v123, 7
    %v125 = vsub.s32 5, %v124
    %v126 = vrot.slane %v88, %v125
    %v129 = vlaneseq
    %v130 = vshrl.u32 %v129, 7
    %v131 = vsub.s32 1, %v130
    %v132 = vrot.slane %v122, %v131
    %v133 = vlaneseq
    %v134 = vshrl.u32 %v133, 7
    %v135 = vsub.s32 1, %v134
    %v136 = vrot.slane %v126, %v135
    %v137 = vmul.f32 %v117, %v132
    %v138 = vmul.f32 %v117, %v136
    %v139 = vadd.f32 %v113, %v137
    %v140 = vadd.f32 %v114, %v138
    %141 = vset.pattern.permute.xlu0 2
    %142 = vperm.xlu0 %141, %v87
    %v143 = vpop.permute.xlu0 %142
    %v145 = vlaneseq
    %v146 = vshrl.u32 %v145, 7
    %v147 = vsub.s32 2, %v146
    %v148 = vrot.slane %v88, %v147
    %v149 = vlaneseq
    %v150 = vshrl.u32 %v149, 7
    %v151 = vsub.s32 6, %v150
    %v152 = vrot.slane %v88, %v151
    %v155 = vlaneseq
    %v156 = vshrl.u32 %v155, 7
    %v157 = vsub.s32 2, %v156
    %v158 = vrot.slane %v148, %v157
    %v159 = vlaneseq
    %v160 = vshrl.u32 %v159, 7
    %v161 = vsub.s32 2, %v160
    %v162 = vrot.slane %v152, %v161
    %v163 = vmul.f32 %v143, %v158
    %v164 = vmul.f32 %v143, %v162
    %v165 = vadd.f32 %v139, %v163
    %v166 = vadd.f32 %v140, %v164
    %v167 = vld [vmem:[%s2] sm:$0x3]
    %v169 = vlaneseq
    %v170 = vshrl.u32 %v169, 7
    %v171 = vsub.s32 0, %v170
    %v172 = vrot.slane %v167, %v171
    %v173 = vlaneseq
    %v174 = vshrl.u32 %v173, 7
    %v175 = vsub.s32 1, %v174
    %v176 = vrot.slane %v167, %v175
    %v179 = vadd.f32 %v165, %v172
    %v180 = vadd.f32 %v166, %v176
    %v181 = vmax.f32 %v179, 0.0
    %v182 = vmax.f32 %v180, 0.0
    %v183 = vpack.c.bf16 %v181, %v181
    %v184 = vpack.c.bf16 %v182, %v182
    %v185 = vld [vmem:[#allocation5] sm:$0xff]
    %v186 = vld [vmem:[#allocation5 + $0x8] sm:$0xff]
    %v187 = vld [vmem:[#allocation5 + $0x10] sm:$0xff]
    %v188 = vld [vmem:[#allocation5 + $0x18] sm:$0xff]
    %v189 = vld [vmem:[#allocation5 + $0x20] sm:$0xff]
    %v190 = vld [vmem:[#allocation5 + $0x28] sm:$0xff]
    %v191 = vld [vmem:[#allocation5 + $0x30] sm:$0xff]
    %v192 = vld [vmem:[#allocation5 + $0x38] sm:$0xff]
    %v193 = vld [vmem:[#allocation5 + $0x40] sm:$0xff]
    %v194 = vld [vmem:[#allocation5 + $0x48] sm:$0xff]
    %v195 = vld [vmem:[#allocation5 + $0x50] sm:$0xff]
    %v196 = vld [vmem:[#allocation5 + $0x58] sm:$0xff]
    %v197 = vld [vmem:[#allocation5 + $0x60] sm:$0xff]
    %v198 = vld [vmem:[#allocation5 + $0x68] sm:$0xff]
    %v199 = vld [vmem:[#allocation5 + $0x70] sm:$0xff]
    %v200 = vld [vmem:[#allocation5 + $0x78] sm:$0xff]
    %v201 = vld [vmem:[#allocation5 + $0x80] sm:$0xff]
    %v202 = vld [vmem:[#allocation5 + $0x88] sm:$0xff]
    %v203 = vld [vmem:[#allocation5 + $0x90] sm:$0xff]
    %v204 = vld [vmem:[#allocation5 + $0x98] sm:$0xff]
    %v205 = vld [vmem:[#allocation5 + $0xa0] sm:$0xff]
    %v206 = vld [vmem:[#allocation5 + $0xa8] sm:$0xff]
    %v207 = vld [vmem:[#allocation5 + $0xb0] sm:$0xff]
    %v208 = vld [vmem:[#allocation5 + $0xb8] sm:$0xff]
    %v209 = vld [vmem:[#allocation5 + $0xc0] sm:$0xff]
    %v210 = vld [vmem:[#allocation5 + $0xc8] sm:$0xff]
    %v211 = vld [vmem:[#allocation5 + $0xd0] sm:$0xff]
    %v212 = vld [vmem:[#allocation5 + $0xd8] sm:$0xff]
    %v213 = vld [vmem:[#allocation5 + $0xe0] sm:$0xff]
    %v214 = vld [vmem:[#allocation5 + $0xe8] sm:$0xff]
    %v215 = vld [vmem:[#allocation5 + $0xf0] sm:$0xff]
    %v216 = vld [vmem:[#allocation5 + $0xf8] sm:$0xff]
    %v217 = vld [vmem:[%s5] sm:$0x3]
    %v219 = vlaneseq
    %v220 = vshrl.u32 %v219, 7
    %v221 = vsub.s32 0, %v220
    %v222 = vrot.slane %v217, %v221
    %v223 = vlaneseq
    %v224 = vshrl.u32 %v223, 7
    %v225 = vsub.s32 1, %v224
    %v226 = vrot.slane %v217, %v225
    %v261 = vunpack.c.l.b16 %v185
    %v262 = vunpack.c.h.b16 %v185
    %v263 = vunpack.c.l.b16 %v186
    %v264 = vunpack.c.h.b16 %v186
    %v265 = vunpack.c.l.b16 %v187
    %v266 = vunpack.c.h.b16 %v187
    %v267 = vunpack.c.l.b16 %v188
    %v268 = vunpack.c.h.b16 %v188
    %v269 = vunpack.c.l.b16 %v189
    %v270 = vunpack.c.h.b16 %v189
    %v271 = vunpack.c.l.b16 %v190
    %v272 = vunpack.c.h.b16 %v190
    %v273 = vunpack.c.l.b16 %v191
    %v274 = vunpack.c.h.b16 %v191
    %v275 = vunpack.c.l.b16 %v192
    %v276 = vunpack.c.h.b16 %v192
    %v277 = vunpack.c.l.b16 %v193
    %v278 = vunpack.c.h.b16 %v193
    %v279 = vunpack.c.l.b16 %v194
    %v280 = vunpack.c.h.b16 %v194
    %v281 = vunpack.c.l.b16 %v195
    %v282 = vunpack.c.h.b16 %v195
    %v283 = vunpack.c.l.b16 %v196
    %v284 = vunpack.c.h.b16 %v196
    %v285 = vunpack.c.l.b16 %v197
    %v286 = vunpack.c.h.b16 %v197
    %v287 = vunpack.c.l.b16 %v198
    %v288 = vunpack.c.h.b16 %v198
    %v289 = vunpack.c.l.b16 %v199
    %v290 = vunpack.c.h.b16 %v199
    %v291 = vunpack.c.l.b16 %v200
    %v292 = vunpack.c.h.b16 %v200
    %v293 = vunpack.c.l.b16 %v201
    %v294 = vunpack.c.h.b16 %v201
    %v295 = vunpack.c.l.b16 %v202
    %v296 = vunpack.c.h.b16 %v202
    %v297 = vunpack.c.l.b16 %v203
    %v298 = vunpack.c.h.b16 %v203
    %v299 = vunpack.c.l.b16 %v204
    %v300 = vunpack.c.h.b16 %v204
    %v301 = vunpack.c.l.b16 %v205
    %v302 = vunpack.c.h.b16 %v205
    %v303 = vunpack.c.l.b16 %v206
    %v304 = vunpack.c.h.b16 %v206
    %v305 = vunpack.c.l.b16 %v207
    %v306 = vunpack.c.h.b16 %v207
    %v307 = vunpack.c.l.b16 %v208
    %v308 = vunpack.c.h.b16 %v208
    %v309 = vunpack.c.l.b16 %v209
    %v310 = vunpack.c.h.b16 %v209
    %v311 = vunpack.c.l.b16 %v210
    %v312 = vunpack.c.h.b16 %v210
    %v313 = vunpack.c.l.b16 %v211
    %v314 = vunpack.c.h.b16 %v211
    %v315 = vunpack.c.l.b16 %v212
    %v316 = vunpack.c.h.b16 %v212
    %v317 = vunpack.c.l.b16 %v213
    %v318 = vunpack.c.h.b16 %v213
    %v319 = vunpack.c.l.b16 %v214
    %v320 = vunpack.c.h.b16 %v214
    %v321 = vunpack.c.l.b16 %v215
    %v322 = vunpack.c.h.b16 %v215
    %v323 = vunpack.c.l.b16 %v216
    %v324 = vunpack.c.h.b16 %v216
    %v325 = vpack.c.b16 %v263, %v261
    %v326 = vpack.c.b16 %v264, %v262
    %v327 = vpack.c.b16 %v267, %v265
    %v328 = vpack.c.b16 %v268, %v266
    %v329 = vpack.c.b16 %v271, %v269
    %v330 = vpack.c.b16 %v272, %v270
    %v331 = vpack.c.b16 %v275, %v273
    %v332 = vpack.c.b16 %v276, %v274
    %v333 = vpack.c.b16 %v279, %v277
    %v334 = vpack.c.b16 %v280, %v278
    %v335 = vpack.c.b16 %v283, %v281
    %v336 = vpack.c.b16 %v284, %v282
    %v337 = vpack.c.b16 %v287, %v285
    %v338 = vpack.c.b16 %v288, %v286
    %v339 = vpack.c.b16 %v291, %v289
    %v340 = vpack.c.b16 %v292, %v290
    %v341 = vpack.c.b16 %v295, %v293
    %v342 = vpack.c.b16 %v296, %v294
    %v343 = vpack.c.b16 %v299, %v297
    %v344 = vpack.c.b16 %v300, %v298
    %v345 = vpack.c.b16 %v303, %v301
    %v346 = vpack.c.b16 %v304, %v302
    %v347 = vpack.c.b16 %v307, %v305
    %v348 = vpack.c.b16 %v308, %v306
    %v349 = vpack.c.b16 %v311, %v309
    %v350 = vpack.c.b16 %v312, %v310
    %v351 = vpack.c.b16 %v315, %v313
    %v352 = vpack.c.b16 %v316, %v314
    %v353 = vpack.c.b16 %v319, %v317
    %v354 = vpack.c.b16 %v320, %v318
    %v355 = vpack.c.b16 %v323, %v321
    %v356 = vpack.c.b16 %v324, %v322
    %389 = vmatprep.subr.bf16.mxu0 %v326
    %390 = vmatpush1.bf16.msra.mxu0 %v325
    %391 = vmatprep.subr.bf16.mxu0 %v328
    %392 = vmatpush1.bf16.msra.mxu0 %v327
    %393 = vmatprep.subr.bf16.mxu0 %v330
    %394 = vmatpush1.bf16.msra.mxu0 %v329
    %395 = vmatprep.subr.bf16.mxu0 %v332
    %396 = vmatpush1.bf16.msra.mxu0 %v331
    %397 = vmatprep.subr.bf16.mxu0 %v334
    %398 = vmatpush1.bf16.msra.mxu0 %v333
    %399 = vmatprep.subr.bf16.mxu0 %v336
    %400 = vmatpush1.bf16.msra.mxu0 %v335
    %401 = vmatprep.subr.bf16.mxu0 %v338
    %402 = vmatpush1.bf16.msra.mxu0 %v337
    %403 = vmatprep.subr.bf16.mxu0 %v340
    %404 = vmatpush1.bf16.msra.mxu0 %v339
    %405 = vmatprep.subr.bf16.mxu0 %v342
    %406 = vmatpush1.bf16.msra.mxu0 %v341
    %407 = vmatprep.subr.bf16.mxu0 %v344
    %408 = vmatpush1.bf16.msra.mxu0 %v343
    %409 = vmatprep.subr.bf16.mxu0 %v346
    %410 = vmatpush1.bf16.msra.mxu0 %v345
    %411 = vmatprep.subr.bf16.mxu0 %v348
    %412 = vmatpush1.bf16.msra.mxu0 %v347
    %413 = vmatprep.subr.bf16.mxu0 %v350
    %414 = vmatpush1.bf16.msra.mxu0 %v349
    %415 = vmatprep.subr.bf16.mxu0 %v352
    %416 = vmatpush1.bf16.msra.mxu0 %v351
    %417 = vmatprep.subr.bf16.mxu0 %v354
    %418 = vmatpush1.bf16.msra.mxu0 %v353
    %419 = vmatprep.subr.bf16.mxu0 %v356
    %420 = vmatpush1.bf16.msra.mxu0 %v355
    %421 = vmatprep.mubr.bf16.mxu0 %v184
    %422 = vmatmul.mubr.bf16.gmra.mrb[0].mxu0 %v183
    %v423 = vpop.f32.mrb[0].mxu0
    %v424 = vadd.f32 %v222, %v423
    %v425 = vpop.f32.mrb[0].mxu0
    %v426 = vadd.f32 %v226, %v425
    %v427 = vpop.f32.mrb[0].mxu0
    %v428 = vpop.f32.mrb[0].mxu0
    %429 = vdwg.mxu0
    %v430 = vmax.f32 %v424, 0.0
    %v431 = vmax.f32 %v426, 0.0
    %v432 = vpack.c.bf16 %v430, %v430
    %v433 = vpack.c.bf16 %v431, %v431
    %v434 = vld [vmem:[#allocation7] sm:$0xff]
    %v435 = vld [vmem:[#allocation7 + $0x8] sm:$0xff]
    %v436 = vld [vmem:[#allocation7 + $0x10] sm:$0xff]
    %v437 = vld [vmem:[#allocation7 + $0x18] sm:$0xff]
    %v438 = vld [vmem:[#allocation7 + $0x20] sm:$0xff]
    %v439 = vld [vmem:[#allocation7 + $0x28] sm:$0xff]
    %v440 = vld [vmem:[#allocation7 + $0x30] sm:$0xff]
    %v441 = vld [vmem:[#allocation7 + $0x38] sm:$0xff]
    %v442 = vld [vmem:[#allocation7 + $0x40] sm:$0xff]
    %v443 = vld [vmem:[#allocation7 + $0x48] sm:$0xff]
    %v444 = vld [vmem:[#allocation7 + $0x50] sm:$0xff]
    %v445 = vld [vmem:[#allocation7 + $0x58] sm:$0xff]
    %v446 = vld [vmem:[#allocation7 + $0x60] sm:$0xff]
    %v447 = vld [vmem:[#allocation7 + $0x68] sm:$0xff]
    %v448 = vld [vmem:[#allocation7 + $0x70] sm:$0xff]
    %v449 = vld [vmem:[#allocation7 + $0x78] sm:$0xff]
    %v450 = vld [vmem:[#allocation7 + $0x80] sm:$0xff]
    %v451 = vld [vmem:[#allocation7 + $0x88] sm:$0xff]
    %v452 = vld [vmem:[#allocation7 + $0x90] sm:$0xff]
    %v453 = vld [vmem:[#allocation7 + $0x98] sm:$0xff]
    %v454 = vld [vmem:[#allocation7 + $0xa0] sm:$0xff]
    %v455 = vld [vmem:[#allocation7 + $0xa8] sm:$0xff]
    %v456 = vld [vmem:[#allocation7 + $0xb0] sm:$0xff]
    %v457 = vld [vmem:[#allocation7 + $0xb8] sm:$0xff]
    %v458 = vld [vmem:[#allocation7 + $0xc0] sm:$0xff]
    %v459 = vld [vmem:[#allocation7 + $0xc8] sm:$0xff]
    %v460 = vld [vmem:[#allocation7 + $0xd0] sm:$0xff]
    %v461 = vld [vmem:[#allocation7 + $0xd8] sm:$0xff]
    %v462 = vld [vmem:[#allocation7 + $0xe0] sm:$0xff]
    %v463 = vld [vmem:[#allocation7 + $0xe8] sm:$0xff]
    %v464 = vld [vmem:[#allocation7 + $0xf0] sm:$0xff]
    %v465 = vld [vmem:[#allocation7 + $0xf8] sm:$0xff]
    %v466 = vld [vmem:[%s6] sm:$0x3]
    %v468 = vlaneseq
    %v469 = vshrl.u32 %v468, 7
    %v470 = vsub.s32 0, %v469
    %v471 = vrot.slane %v466, %v470
    %v472 = vlaneseq
    %v473 = vshrl.u32 %v472, 7
    %v474 = vsub.s32 1, %v473
    %v475 = vrot.slane %v466, %v474
    %v510 = vunpack.c.l.b16 %v434
    %v511 = vunpack.c.h.b16 %v434
    %v512 = vunpack.c.l.b16 %v435
    %v513 = vunpack.c.h.b16 %v435
    %v514 = vunpack.c.l.b16 %v436
    %v515 = vunpack.c.h.b16 %v436
    %v516 = vunpack.c.l.b16 %v437
    %v517 = vunpack.c.h.b16 %v437
    %v518 = vunpack.c.l.b16 %v438
    %v519 = vunpack.c.h.b16 %v438
    %v520 = vunpack.c.l.b16 %v439
    %v521 = vunpack.c.h.b16 %v439
    %v522 = vunpack.c.l.b16 %v440
    %v523 = vunpack.c.h.b16 %v440
    %v524 = vunpack.c.l.b16 %v441
    %v525 = vunpack.c.h.b16 %v441
    %v526 = vunpack.c.l.b16 %v442
    %v527 = vunpack.c.h.b16 %v442
    %v528 = vunpack.c.l.b16 %v443
    %v529 = vunpack.c.h.b16 %v443
    %v530 = vunpack.c.l.b16 %v444
    %v531 = vunpack.c.h.b16 %v444
    %v532 = vunpack.c.l.b16 %v445
    %v533 = vunpack.c.h.b16 %v445
    %v534 = vunpack.c.l.b16 %v446
    %v535 = vunpack.c.h.b16 %v446
    %v536 = vunpack.c.l.b16 %v447
    %v537 = vunpack.c.h.b16 %v447
    %v538 = vunpack.c.l.b16 %v448
    %v539 = vunpack.c.h.b16 %v448
    %v540 = vunpack.c.l.b16 %v449
    %v541 = vunpack.c.h.b16 %v449
    %v542 = vunpack.c.l.b16 %v450
    %v543 = vunpack.c.h.b16 %v450
    %v544 = vunpack.c.l.b16 %v451
    %v545 = vunpack.c.h.b16 %v451
    %v546 = vunpack.c.l.b16 %v452
    %v547 = vunpack.c.h.b16 %v452
    %v548 = vunpack.c.l.b16 %v453
    %v549 = vunpack.c.h.b16 %v453
    %v550 = vunpack.c.l.b16 %v454
    %v551 = vunpack.c.h.b16 %v454
    %v552 = vunpack.c.l.b16 %v455
    %v553 = vunpack.c.h.b16 %v455
    %v554 = vunpack.c.l.b16 %v456
    %v555 = vunpack.c.h.b16 %v456
    %v556 = vunpack.c.l.b16 %v457
    %v557 = vunpack.c.h.b16 %v457
    %v558 = vunpack.c.l.b16 %v458
    %v559 = vunpack.c.h.b16 %v458
    %v560 = vunpack.c.l.b16 %v459
    %v561 = vunpack.c.h.b16 %v459
    %v562 = vunpack.c.l.b16 %v460
    %v563 = vunpack.c.h.b16 %v460
    %v564 = vunpack.c.l.b16 %v461
    %v565 = vunpack.c.h.b16 %v461
    %v566 = vunpack.c.l.b16 %v462
    %v567 = vunpack.c.h.b16 %v462
    %v568 = vunpack.c.l.b16 %v463
    %v569 = vunpack.c.h.b16 %v463
    %v570 = vunpack.c.l.b16 %v464
    %v571 = vunpack.c.h.b16 %v464
    %v572 = vunpack.c.l.b16 %v465
    %v573 = vunpack.c.h.b16 %v465
    %v574 = vpack.c.b16 %v512, %v510
    %v575 = vpack.c.b16 %v513, %v511
    %v576 = vpack.c.b16 %v516, %v514
    %v577 = vpack.c.b16 %v517, %v515
    %v578 = vpack.c.b16 %v520, %v518
    %v579 = vpack.c.b16 %v521, %v519
    %v580 = vpack.c.b16 %v524, %v522
    %v581 = vpack.c.b16 %v525, %v523
    %v582 = vpack.c.b16 %v528, %v526
    %v583 = vpack.c.b16 %v529, %v527
    %v584 = vpack.c.b16 %v532, %v530
    %v585 = vpack.c.b16 %v533, %v531
    %v586 = vpack.c.b16 %v536, %v534
    %v587 = vpack.c.b16 %v537, %v535
    %v588 = vpack.c.b16 %v540, %v538
    %v589 = vpack.c.b16 %v541, %v539
    %v590 = vpack.c.b16 %v544, %v542
    %v591 = vpack.c.b16 %v545, %v543
    %v592 = vpack.c.b16 %v548, %v546
    %v593 = vpack.c.b16 %v549, %v547
    %v594 = vpack.c.b16 %v552, %v550
    %v595 = vpack.c.b16 %v553, %v551
    %v596 = vpack.c.b16 %v556, %v554
    %v597 = vpack.c.b16 %v557, %v555
    %v598 = vpack.c.b16 %v560, %v558
    %v599 = vpack.c.b16 %v561, %v559
    %v600 = vpack.c.b16 %v564, %v562
    %v601 = vpack.c.b16 %v565, %v563
    %v602 = vpack.c.b16 %v568, %v566
    %v603 = vpack.c.b16 %v569, %v567
    %v604 = vpack.c.b16 %v572, %v570
    %v605 = vpack.c.b16 %v573, %v571
    %638 = vmatprep.subr.bf16.mxu0 %v575
    %639 = vmatpush1.bf16.msra.mxu0 %v574
    %640 = vmatprep.subr.bf16.mxu0 %v577
    %641 = vmatpush1.bf16.msra.mxu0 %v576
    %642 = vmatprep.subr.bf16.mxu0 %v579
    %643 = vmatpush1.bf16.msra.mxu0 %v578
    %644 = vmatprep.subr.bf16.mxu0 %v581
    %645 = vmatpush1.bf16.msra.mxu0 %v580
    %646 = vmatprep.subr.bf16.mxu0 %v583
    %647 = vmatpush1.bf16.msra.mxu0 %v582
    %648 = vmatprep.subr.bf16.mxu0 %v585
    %649 = vmatpush1.bf16.msra.mxu0 %v584
    %650 = vmatprep.subr.bf16.mxu0 %v587
    %651 = vmatpush1.bf16.msra.mxu0 %v586
    %652 = vmatprep.subr.bf16.mxu0 %v589
    %653 = vmatpush1.bf16.msra.mxu0 %v588
    %654 = vmatprep.subr.bf16.mxu0 %v591
    %655 = vmatpush1.bf16.msra.mxu0 %v590
    %656 = vmatprep.subr.bf16.mxu0 %v593
    %657 = vmatpush1.bf16.msra.mxu0 %v592
    %658 = vmatprep.subr.bf16.mxu0 %v595
    %659 = vmatpush1.bf16.msra.mxu0 %v594
    %660 = vmatprep.subr.bf16.mxu0 %v597
    %661 = vmatpush1.bf16.msra.mxu0 %v596
    %662 = vmatprep.subr.bf16.mxu0 %v599
    %663 = vmatpush1.bf16.msra.mxu0 %v598
    %664 = vmatprep.subr.bf16.mxu0 %v601
    %665 = vmatpush1.bf16.msra.mxu0 %v600
    %666 = vmatprep.subr.bf16.mxu0 %v603
    %667 = vmatpush1.bf16.msra.mxu0 %v602
    %668 = vmatprep.subr.bf16.mxu0 %v605
    %669 = vmatpush1.bf16.msra.mxu0 %v604
    %670 = vmatprep.mubr.bf16.mxu0 %v433
    %671 = vmatmul.mubr.bf16.gmra.mrb[0].mxu0 %v432
    %v672 = vpop.f32.mrb[0].mxu0
    %v673 = vadd.f32 %v471, %v672
    %v674 = vpop.f32.mrb[0].mxu0
    %v675 = vadd.f32 %v475, %v674
    %v676 = vpop.f32.mrb[0].mxu0
    %v677 = vpop.f32.mrb[0].mxu0
    %678 = vdwg.mxu0
    %v679 = vadd.f32 %v673, %v181
    %v680 = vadd.f32 %v675, %v182
    %v681 = vmax.f32 %v679, 0.0
    %v682 = vmax.f32 %v680, 0.0
    %v683 = vpack.c.bf16 %v681, %v681
    %v684 = vpack.c.bf16 %v682, %v682
    %s685 = scalar_lea.vmem [#allocation5], 256
    %v686 = vld [vmem:[%s685] sm:$0xff]
    %v687 = vld [vmem:[%s685 + $0x8] sm:$0xff]
    %v688 = vld [vmem:[%s685 + $0x10] sm:$0xff]
    %v689 = vld [vmem:[%s685 + $0x18] sm:$0xff]
    %v690 = vld [vmem:[%s685 + $0x20] sm:$0xff]
    %v691 = vld [vmem:[%s685 + $0x28] sm:$0xff]
    %v692 = vld [vmem:[%s685 + $0x30] sm:$0xff]
    %v693 = vld [vmem:[%s685 + $0x38] sm:$0xff]
    %v694 = vld [vmem:[%s685 + $0x40] sm:$0xff]
    %v695 = vld [vmem:[%s685 + $0x48] sm:$0xff]
    %v696 = vld [vmem:[%s685 + $0x50] sm:$0xff]
    %v697 = vld [vmem:[%s685 + $0x58] sm:$0xff]
    %v698 = vld [vmem:[%s685 + $0x60] sm:$0xff]
    %v699 = vld [vmem:[%s685 + $0x68] sm:$0xff]
    %v700 = vld [vmem:[%s685 + $0x70] sm:$0xff]
    %v701 = vld [vmem:[%s685 + $0x78] sm:$0xff]
    %v702 = vld [vmem:[%s685 + $0x80] sm:$0xff]
    %v703 = vld [vmem:[%s685 + $0x88] sm:$0xff]
    %v704 = vld [vmem:[%s685 + $0x90] sm:$0xff]
    %v705 = vld [vmem:[%s685 + $0x98] sm:$0xff]
    %v706 = vld [vmem:[%s685 + $0xa0] sm:$0xff]
    %v707 = vld [vmem:[%s685 + $0xa8] sm:$0xff]
    %v708 = vld [vmem:[%s685 + $0xb0] sm:$0xff]
    %v709 = vld [vmem:[%s685 + $0xb8] sm:$0xff]
    %v710 = vld [vmem:[%s685 + $0xc0] sm:$0xff]
    %v711 = vld [vmem:[%s685 + $0xc8] sm:$0xff]
    %v712 = vld [vmem:[%s685 + $0xd0] sm:$0xff]
    %v713 = vld [vmem:[%s685 + $0xd8] sm:$0xff]
    %v714 = vld [vmem:[%s685 + $0xe0] sm:$0xff]
    %v715 = vld [vmem:[%s685 + $0xe8] sm:$0xff]
    %v716 = vld [vmem:[%s685 + $0xf0] sm:$0xff]
    %v717 = vld [vmem:[%s685 + $0xf8] sm:$0xff]
    %s718 = scalar_lea.vmem %s5, 2
    %v719 = vld [vmem:[%s718] sm:$0x3]
    %v721 = vlaneseq
    %v722 = vshrl.u32 %v721, 7
    %v723 = vsub.s32 0, %v722
    %v724 = vrot.slane %v719, %v723
    %v725 = vlaneseq
    %v726 = vshrl.u32 %v725, 7
    %v727 = vsub.s32 1, %v726
    %v728 = vrot.slane %v719, %v727
    %v763 = vunpack.c.l.b16 %v686
    %v764 = vunpack.c.h.b16 %v686
    %v765 = vunpack.c.l.b16 %v687
    %v766 = vunpack.c.h.b16 %v687
    %v767 = vunpack.c.l.b16 %v688
    %v768 = vunpack.c.h.b16 %v688
    %v769 = vunpack.c.l.b16 %v689
    %v770 = vunpack.c.h.b16 %v689
    %v771 = vunpack.c.l.b16 %v690
    %v772 = vunpack.c.h.b16 %v690
    %v773 = vunpack.c.l.b16 %v691
    %v774 = vunpack.c.h.b16 %v691
    %v775 = vunpack.c.l.b16 %v692
    %v776 = vunpack.c.h.b16 %v692
    %v777 = vunpack.c.l.b16 %v693
    %v778 = vunpack.c.h.b16 %v693
    %v779 = vunpack.c.l.b16 %v694
    %v780 = vunpack.c.h.b16 %v694
    %v781 = vunpack.c.l.b16 %v695
    %v782 = vunpack.c.h.b16 %v695
    %v783 = vunpack.c.l.b16 %v696
    %v784 = vunpack.c.h.b16 %v696
    %v785 = vunpack.c.l.b16 %v697
    %v786 = vunpack.c.h.b16 %v697
    %v787 = vunpack.c.l.b16 %v698
    %v788 = vunpack.c.h.b16 %v698
    %v789 = vunpack.c.l.b16 %v699
    %v790 = vunpack.c.h.b16 %v699
    %v791 = vunpack.c.l.b16 %v700
    %v792 = vunpack.c.h.b16 %v700
    %v793 = vunpack.c.l.b16 %v701
    %v794 = vunpack.c.h.b16 %v701
    %v795 = vunpack.c.l.b16 %v702
    %v796 = vunpack.c.h.b16 %v702
    %v797 = vunpack.c.l.b16 %v703
    %v798 = vunpack.c.h.b16 %v703
    %v799 = vunpack.c.l.b16 %v704
    %v800 = vunpack.c.h.b16 %v704
    %v801 = vunpack.c.l.b16 %v705
    %v802 = vunpack.c.h.b16 %v705
    %v803 = vunpack.c.l.b16 %v706
    %v804 = vunpack.c.h.b16 %v706
    %v805 = vunpack.c.l.b16 %v707
    %v806 = vunpack.c.h.b16 %v707
    %v807 = vunpack.c.l.b16 %v708
    %v808 = vunpack.c.h.b16 %v708
    %v809 = vunpack.c.l.b16 %v709
    %v810 = vunpack.c.h.b16 %v709
    %v811 = vunpack.c.l.b16 %v710
    %v812 = vunpack.c.h.b16 %v710
    %v813 = vunpack.c.l.b16 %v711
    %v814 = vunpack.c.h.b16 %v711
    %v815 = vunpack.c.l.b16 %v712
    %v816 = vunpack.c.h.b16 %v712
    %v817 = vunpack.c.l.b16 %v713
    %v818 = vunpack.c.h.b16 %v713
    %v819 = vunpack.c.l.b16 %v714
    %v820 = vunpack.c.h.b16 %v714
    %v821 = vunpack.c.l.b16 %v715
    %v822 = vunpack.c.h.b16 %v715
    %v823 = vunpack.c.l.b16 %v716
    %v824 = vunpack.c.h.b16 %v716
    %v825 = vunpack.c.l.b16 %v717
    %v826 = vunpack.c.h.b16 %v717
    %v827 = vpack.c.b16 %v765, %v763
    %v828 = vpack.c.b16 %v766, %v764
    %v829 = vpack.c.b16 %v769, %v767
    %v830 = vpack.c.b16 %v770, %v768
    %v831 = vpack.c.b16 %v773, %v771
    %v832 = vpack.c.b16 %v774, %v772
    %v833 = vpack.c.b16 %v777, %v775
    %v834 = vpack.c.b16 %v778, %v776
    %v835 = vpack.c.b16 %v781, %v779
    %v836 = vpack.c.b16 %v782, %v780
    %v837 = vpack.c.b16 %v785, %v783
    %v838 = vpack.c.b16 %v786, %v784
    %v839 = vpack.c.b16 %v789, %v787
    %v840 = vpack.c.b16 %v790, %v788
    %v841 = vpack.c.b16 %v793, %v791
    %v842 = vpack.c.b16 %v794, %v792
    %v843 = vpack.c.b16 %v797, %v795
    %v844 = vpack.c.b16 %v798, %v796
    %v845 = vpack.c.b16 %v801, %v799
    %v846 = vpack.c.b16 %v802, %v800
    %v847 = vpack.c.b16 %v805, %v803
    %v848 = vpack.c.b16 %v806, %v804
    %v849 = vpack.c.b16 %v809, %v807
    %v850 = vpack.c.b16 %v810, %v808
    %v851 = vpack.c.b16 %v813, %v811
    %v852 = vpack.c.b16 %v814, %v812
    %v853 = vpack.c.b16 %v817, %v815
    %v854 = vpack.c.b16 %v818, %v816
    %v855 = vpack.c.b16 %v821, %v819
    %v856 = vpack.c.b16 %v822, %v820
    %v857 = vpack.c.b16 %v825, %v823
    %v858 = vpack.c.b16 %v826, %v824
    %891 = vmatprep.subr.bf16.mxu0 %v828
    %892 = vmatpush1.bf16.msra.mxu0 %v827
    %893 = vmatprep.subr.bf16.mxu0 %v830
    %894 = vmatpush1.bf16.msra.mxu0 %v829
    %895 = vmatprep.subr.bf16.mxu0 %v832
    %896 = vmatpush1.bf16.msra.mxu0 %v831
    %897 = vmatprep.subr.bf16.mxu0 %v834
    %898 = vmatpush1.bf16.msra.mxu0 %v833
    %899 = vmatprep.subr.bf16.mxu0 %v836
    %900 = vmatpush1.bf16.msra.mxu0 %v835
    %901 = vmatprep.subr.bf16.mxu0 %v838
    %902 = vmatpush1.bf16.msra.mxu0 %v837
    %903 = vmatprep.subr.bf16.mxu0 %v840
    %904 = vmatpush1.bf16.msra.mxu0 %v839
    %905 = vmatprep.subr.bf16.mxu0 %v842
    %906 = vmatpush1.bf16.msra.mxu0 %v841
    %907 = vmatprep.subr.bf16.mxu0 %v844
    %908 = vmatpush1.bf16.msra.mxu0 %v843
    %909 = vmatprep.subr.bf16.mxu0 %v846
    %910 = vmatpush1.bf16.msra.mxu0 %v845
    %911 = vmatprep.subr.bf16.mxu0 %v848
    %912 = vmatpush1.bf16.msra.mxu0 %v847
    %913 = vmatprep.subr.bf16.mxu0 %v850
    %914 = vmatpush1.bf16.msra.mxu0 %v849
    %915 = vmatprep.subr.bf16.mxu0 %v852
    %916 = vmatpush1.bf16.msra.mxu0 %v851
    %917 = vmatprep.subr.bf16.mxu0 %v854
    %918 = vmatpush1.bf16.msra.mxu0 %v853
    %919 = vmatprep.subr.bf16.mxu0 %v856
    %920 = vmatpush1.bf16.msra.mxu0 %v855
    %921 = vmatprep.subr.bf16.mxu0 %v858
    %922 = vmatpush1.bf16.msra.mxu0 %v857
    %923 = vmatprep.mubr.bf16.mxu0 %v684
    %924 = vmatmul.mubr.bf16.gmra.mrb[0].mxu0 %v683
    %v925 = vpop.f32.mrb[0].mxu0
    %v926 = vadd.f32 %v724, %v925
    %v927 = vpop.f32.mrb[0].mxu0
    %v928 = vadd.f32 %v728, %v927
    %v929 = vpop.f32.mrb[0].mxu0
    %v930 = vpop.f32.mrb[0].mxu0
    %931 = vdwg.mxu0
    %v932 = vmax.f32 %v926, 0.0
    %v933 = vmax.f32 %v928, 0.0
    %v934 = vpack.c.bf16 %v932, %v932
    %v935 = vpack.c.bf16 %v933, %v933
    %s936 = scalar_lea.vmem [#allocation7], 256
    %v937 = vld [vmem:[%s936] sm:$0xff]
    %v938 = vld [vmem:[%s936 + $0x8] sm:$0xff]
    %v939 = vld [vmem:[%s936 + $0x10] sm:$0xff]
    %v940 = vld [vmem:[%s936 + $0x18] sm:$0xff]
    %v941 = vld [vmem:[%s936 + $0x20] sm:$0xff]
    %v942 = vld [vmem:[%s936 + $0x28] sm:$0xff]
    %v943 = vld [vmem:[%s936 + $0x30] sm:$0xff]
    %v944 = vld [vmem:[%s936 + $0x38] sm:$0xff]
    %v945 = vld [vmem:[%s936 + $0x40] sm:$0xff]
    %v946 = vld [vmem:[%s936 + $0x48] sm:$0xff]
    %v947 = vld [vmem:[%s936 + $0x50] sm:$0xff]
    %v948 = vld [vmem:[%s936 + $0x58] sm:$0xff]
    %v949 = vld [vmem:[%s936 + $0x60] sm:$0xff]
    %v950 = vld [vmem:[%s936 + $0x68] sm:$0xff]
    %v951 = vld [vmem:[%s936 + $0x70] sm:$0xff]
    %v952 = vld [vmem:[%s936 + $0x78] sm:$0xff]
    %v953 = vld [vmem:[%s936 + $0x80] sm:$0xff]
    %v954 = vld [vmem:[%s936 + $0x88] sm:$0xff]
    %v955 = vld [vmem:[%s936 + $0x90] sm:$0xff]
    %v956 = vld [vmem:[%s936 + $0x98] sm:$0xff]
    %v957 = vld [vmem:[%s936 + $0xa0] sm:$0xff]
    %v958 = vld [vmem:[%s936 + $0xa8] sm:$0xff]
    %v959 = vld [vmem:[%s936 + $0xb0] sm:$0xff]
    %v960 = vld [vmem:[%s936 + $0xb8] sm:$0xff]
    %v961 = vld [vmem:[%s936 + $0xc0] sm:$0xff]
    %v962 = vld [vmem:[%s936 + $0xc8] sm:$0xff]
    %v963 = vld [vmem:[%s936 + $0xd0] sm:$0xff]
    %v964 = vld [vmem:[%s936 + $0xd8] sm:$0xff]
    %v965 = vld [vmem:[%s936 + $0xe0] sm:$0xff]
    %v966 = vld [vmem:[%s936 + $0xe8] sm:$0xff]
    %v967 = vld [vmem:[%s936 + $0xf0] sm:$0xff]
    %v968 = vld [vmem:[%s936 + $0xf8] sm:$0xff]
    %s969 = scalar_lea.vmem %s6, 2
    %v970 = vld [vmem:[%s969] sm:$0x3]
    %v972 = vlaneseq
    %v973 = vshrl.u32 %v972, 7
    %v974 = vsub.s32 0, %v973
    %v975 = vrot.slane %v970, %v974
    %v976 = vlaneseq
    %v977 = vshrl.u32 %v976, 7
    %v978 = vsub.s32 1, %v977
    %v979 = vrot.slane %v970, %v978
    %v1014 = vunpack.c.l.b16 %v937
    %v1015 = vunpack.c.h.b16 %v937
    %v1016 = vunpack.c.l.b16 %v938
    %v1017 = vunpack.c.h.b16 %v938
    %v1018 = vunpack.c.l.b16 %v939
    %v1019 = vunpack.c.h.b16 %v939
    %v1020 = vunpack.c.l.b16 %v940
    %v1021 = vunpack.c.h.b16 %v940
    %v1022 = vunpack.c.l.b16 %v941
    %v1023 = vunpack.c.h.b16 %v941
    %v1024 = vunpack.c.l.b16 %v942
    %v1025 = vunpack.c.h.b16 %v942
    %v1026 = vunpack.c.l.b16 %v943
    %v1027 = vunpack.c.h.b16 %v943
    %v1028 = vunpack.c.l.b16 %v944
    %v1029 = vunpack.c.h.b16 %v944
    %v1030 = vunpack.c.l.b16 %v945
    %v1031 = vunpack.c.h.b16 %v945
    %v1032 = vunpack.c.l.b16 %v946
    %v1033 = vunpack.c.h.b16 %v946
    %v1034 = vunpack.c.l.b16 %v947
    %v1035 = vunpack.c.h.b16 %v947
    %v1036 = vunpack.c.l.b16 %v948
    %v1037 = vunpack.c.h.b16 %v948
    %v1038 = vunpack.c.l.b16 %v949
    %v1039 = vunpack.c.h.b16 %v949
    %v1040 = vunpack.c.l.b16 %v950
    %v1041 = vunpack.c.h.b16 %v950
    %v1042 = vunpack.c.l.b16 %v951
    %v1043 = vunpack.c.h.b16 %v951
    %v1044 = vunpack.c.l.b16 %v952
    %v1045 = vunpack.c.h.b16 %v952
    %v1046 = vunpack.c.l.b16 %v953
    %v1047 = vunpack.c.h.b16 %v953
    %v1048 = vunpack.c.l.b16 %v954
    %v1049 = vunpack.c.h.b16 %v954
    %v1050 = vunpack.c.l.b16 %v955
    %v1051 = vunpack.c.h.b16 %v955
    %v1052 = vunpack.c.l.b16 %v956
    %v1053 = vunpack.c.h.b16 %v956
    %v1054 = vunpack.c.l.b16 %v957
    %v1055 = vunpack.c.h.b16 %v957
    %v1056 = vunpack.c.l.b16 %v958
    %v1057 = vunpack.c.h.b16 %v958
    %v1058 = vunpack.c.l.b16 %v959
    %v1059 = vunpack.c.h.b16 %v959
    %v1060 = vunpack.c.l.b16 %v960
    %v1061 = vunpack.c.h.b16 %v960
    %v1062 = vunpack.c.l.b16 %v961
    %v1063 = vunpack.c.h.b16 %v961
    %v1064 = vunpack.c.l.b16 %v962
    %v1065 = vunpack.c.h.b16 %v962
    %v1066 = vunpack.c.l.b16 %v963
    %v1067 = vunpack.c.h.b16 %v963
    %v1068 = vunpack.c.l.b16 %v964
    %v1069 = vunpack.c.h.b16 %v964
    %v1070 = vunpack.c.l.b16 %v965
    %v1071 = vunpack.c.h.b16 %v965
    %v1072 = vunpack.c.l.b16 %v966
    %v1073 = vunpack.c.h.b16 %v966
    %v1074 = vunpack.c.l.b16 %v967
    %v1075 = vunpack.c.h.b16 %v967
    %v1076 = vunpack.c.l.b16 %v968
    %v1077 = vunpack.c.h.b16 %v968
    %v1078 = vpack.c.b16 %v1016, %v1014
    %v1079 = vpack.c.b16 %v1017, %v1015
    %v1080 = vpack.c.b16 %v1020, %v1018
    %v1081 = vpack.c.b16 %v1021, %v1019
    %v1082 = vpack.c.b16 %v1024, %v1022
    %v1083 = vpack.c.b16 %v1025, %v1023
    %v1084 = vpack.c.b16 %v1028, %v1026
    %v1085 = vpack.c.b16 %v1029, %v1027
    %v1086 = vpack.c.b16 %v1032, %v1030
    %v1087 = vpack.c.b16 %v1033, %v1031
    %v1088 = vpack.c.b16 %v1036, %v1034
    %v1089 = vpack.c.b16 %v1037, %v1035
    %v1090 = vpack.c.b16 %v1040, %v1038
    %v1091 = vpack.c.b16 %v1041, %v1039
    %v1092 = vpack.c.b16 %v1044, %v1042
    %v1093 = vpack.c.b16 %v1045, %v1043
    %v1094 = vpack.c.b16 %v1048, %v1046
    %v1095 = vpack.c.b16 %v1049, %v1047
    %v1096 = vpack.c.b16 %v1052, %v1050
    %v1097 = vpack.c.b16 %v1053, %v1051
    %v1098 = vpack.c.b16 %v1056, %v1054
    %v1099 = vpack.c.b16 %v1057, %v1055
    %v1100 = vpack.c.b16 %v1060, %v1058
    %v1101 = vpack.c.b16 %v1061, %v1059
    %v1102 = vpack.c.b16 %v1064, %v1062
    %v1103 = vpack.c.b16 %v1065, %v1063
    %v1104 = vpack.c.b16 %v1068, %v1066
    %v1105 = vpack.c.b16 %v1069, %v1067
    %v1106 = vpack.c.b16 %v1072, %v1070
    %v1107 = vpack.c.b16 %v1073, %v1071
    %v1108 = vpack.c.b16 %v1076, %v1074
    %v1109 = vpack.c.b16 %v1077, %v1075
    %1142 = vmatprep.subr.bf16.mxu0 %v1079
    %1143 = vmatpush1.bf16.msra.mxu0 %v1078
    %1144 = vmatprep.subr.bf16.mxu0 %v1081
    %1145 = vmatpush1.bf16.msra.mxu0 %v1080
    %1146 = vmatprep.subr.bf16.mxu0 %v1083
    %1147 = vmatpush1.bf16.msra.mxu0 %v1082
    %1148 = vmatprep.subr.bf16.mxu0 %v1085
    %1149 = vmatpush1.bf16.msra.mxu0 %v1084
    %1150 = vmatprep.subr.bf16.mxu0 %v1087
    %1151 = vmatpush1.bf16.msra.mxu0 %v1086
    %1152 = vmatprep.subr.bf16.mxu0 %v1089
    %1153 = vmatpush1.bf16.msra.mxu0 %v1088
    %1154 = vmatprep.subr.bf16.mxu0 %v1091
    %1155 = vmatpush1.bf16.msra.mxu0 %v1090
    %1156 = vmatprep.subr.bf16.mxu0 %v1093
    %1157 = vmatpush1.bf16.msra.mxu0 %v1092
    %1158 = vmatprep.subr.bf16.mxu0 %v1095
    %1159 = vmatpush1.bf16.msra.mxu0 %v1094
    %1160 = vmatprep.subr.bf16.mxu0 %v1097
    %1161 = vmatpush1.bf16.msra.mxu0 %v1096
    %1162 = vmatprep.subr.bf16.mxu0 %v1099
    %1163 = vmatpush1.bf16.msra.mxu0 %v1098
    %1164 = vmatprep.subr.bf16.mxu0 %v1101
    %1165 = vmatpush1.bf16.msra.mxu0 %v1100
    %1166 = vmatprep.subr.bf16.mxu0 %v1103
    %1167 = vmatpush1.bf16.msra.mxu0 %v1102
    %1168 = vmatprep.subr.bf16.mxu0 %v1105
    %1169 = vmatpush1.bf16.msra.mxu0 %v1104
    %1170 = vmatprep.subr.bf16.mxu0 %v1107
    %1171 = vmatpush1.bf16.msra.mxu0 %v1106
    %1172 = vmatprep.subr.bf16.mxu0 %v1109
    %1173 = vmatpush1.bf16.msra.mxu0 %v1108
    %1174 = vmatprep.mubr.bf16.mxu0 %v935
    %1175 = vmatmul.mubr.bf16.gmra.mrb[0].mxu0 %v934
    %v1176 = vpop.f32.mrb[0].mxu0
    %v1177 = vadd.f32 %v975, %v1176
    %v1178 = vpop.f32.mrb[0].mxu0
    %v1179 = vadd.f32 %v979, %v1178
    %v1180 = vpop.f32.mrb[0].mxu0
    %v1181 = vpop.f32.mrb[0].mxu0
    %1182 = vdwg.mxu0
    %v1183 = vadd.f32 %v1177, %v681
    %v1184 = vadd.f32 %v1179, %v682
    %v1185 = vmax.f32 %v1183, 0.0
    %v1186 = vmax.f32 %v1184, 0.0
    %v1187 = vpack.c.bf16 %v1185, %v1185
    %v1188 = vpack.c.bf16 %v1186, %v1186
    %s1189 = scalar_lea.vmem [#allocation5], 512
    %v1190 = vld [vmem:[%s1189] sm:$0xff]
    %v1191 = vld [vmem:[%s1189 + $0x8] sm:$0xff]
    %v1192 = vld [vmem:[%s1189 + $0x10] sm:$0xff]
    %v1193 = vld [vmem:[%s1189 + $0x18] sm:$0xff]
    %v1194 = vld [vmem:[%s1189 + $0x20] sm:$0xff]
    %v1195 = vld [vmem:[%s1189 + $0x28] sm:$0xff]
    %v1196 = vld [vmem:[%s1189 + $0x30] sm:$0xff]
    %v1197 = vld [vmem:[%s1189 + $0x38] sm:$0xff]
    %v1198 = vld [vmem:[%s1189 + $0x40] sm:$0xff]
    %v1199 = vld [vmem:[%s1189 + $0x48] sm:$0xff]
    %v1200 = vld [vmem:[%s1189 + $0x50] sm:$0xff]
    %v1201 = vld [vmem:[%s1189 + $0x58] sm:$0xff]
    %v1202 = vld [vmem:[%s1189 + $0x60] sm:$0xff]
    %v1203 = vld [vmem:[%s1189 + $0x68] sm:$0xff]
    %v1204 = vld [vmem:[%s1189 + $0x70] sm:$0xff]
    %v1205 = vld [vmem:[%s1189 + $0x78] sm:$0xff]
    %v1206 = vld [vmem:[%s1189 + $0x80] sm:$0xff]
    %v1207 = vld [vmem:[%s1189 + $0x88] sm:$0xff]
    %v1208 = vld [vmem:[%s1189 + $0x90] sm:$0xff]
    %v1209 = vld [vmem:[%s1189 + $0x98] sm:$0xff]
    %v1210 = vld [vmem:[%s1189 + $0xa0] sm:$0xff]
    %v1211 = vld [vmem:[%s1189 + $0xa8] sm:$0xff]
    %v1212 = vld [vmem:[%s1189 + $0xb0] sm:$0xff]
    %v1213 = vld [vmem:[%s1189 + $0xb8] sm:$0xff]
    %v1214 = vld [vmem:[%s1189 + $0xc0] sm:$0xff]
    %v1215 = vld [vmem:[%s1189 + $0xc8] sm:$0xff]
    %v1216 = vld [vmem:[%s1189 + $0xd0] sm:$0xff]
    %v1217 = vld [vmem:[%s1189 + $0xd8] sm:$0xff]
    %v1218 = vld [vmem:[%s1189 + $0xe0] sm:$0xff]
    %v1219 = vld [vmem:[%s1189 + $0xe8] sm:$0xff]
    %v1220 = vld [vmem:[%s1189 + $0xf0] sm:$0xff]
    %v1221 = vld [vmem:[%s1189 + $0xf8] sm:$0xff]
    %s1222 = scalar_lea.vmem %s5, 4
    %v1223 = vld [vmem:[%s1222] sm:$0x3]
    %v1225 = vlaneseq
    %v1226 = vshrl.u32 %v1225, 7
    %v1227 = vsub.s32 0, %v1226
    %v1228 = vrot.slane %v1223, %v1227
    %v1229 = vlaneseq
    %v1230 = vshrl.u32 %v1229, 7
    %v1231 = vsub.s32 1, %v1230
    %v1232 = vrot.slane %v1223, %v1231
    %v1267 = vunpack.c.l.b16 %v1190
    %v1268 = vunpack.c.h.b16 %v1190
    %v1269 = vunpack.c.l.b16 %v1191
    %v1270 = vunpack.c.h.b16 %v1191
    %v1271 = vunpack.c.l.b16 %v1192
    %v1272 = vunpack.c.h.b16 %v1192
    %v1273 = vunpack.c.l.b16 %v1193
    %v1274 = vunpack.c.h.b16 %v1193
    %v1275 = vunpack.c.l.b16 %v1194
    %v1276 = vunpack.c.h.b16 %v1194
    %v1277 = vunpack.c.l.b16 %v1195
    %v1278 = vunpack.c.h.b16 %v1195
    %v1279 = vunpack.c.l.b16 %v1196
    %v1280 = vunpack.c.h.b16 %v1196
    %v1281 = vunpack.c.l.b16 %v1197
    %v1282 = vunpack.c.h.b16 %v1197
    %v1283 = vunpack.c.l.b16 %v1198
    %v1284 = vunpack.c.h.b16 %v1198
    %v1285 = vunpack.c.l.b16 %v1199
    %v1286 = vunpack.c.h.b16 %v1199
    %v1287 = vunpack.c.l.b16 %v1200
    %v1288 = vunpack.c.h.b16 %v1200
    %v1289 = vunpack.c.l.b16 %v1201
    %v1290 = vunpack.c.h.b16 %v1201
    %v1291 = vunpack.c.l.b16 %v1202
    %v1292 = vunpack.c.h.b16 %v1202
    %v1293 = vunpack.c.l.b16 %v1203
    %v1294 = vunpack.c.h.b16 %v1203
    %v1295 = vunpack.c.l.b16 %v1204
    %v1296 = vunpack.c.h.b16 %v1204
    %v1297 = vunpack.c.l.b16 %v1205
    %v1298 = vunpack.c.h.b16 %v1205
    %v1299 = vunpack.c.l.b16 %v1206
    %v1300 = vunpack.c.h.b16 %v1206
    %v1301 = vunpack.c.l.b16 %v1207
    %v1302 = vunpack.c.h.b16 %v1207
    %v1303 = vunpack.c.l.b16 %v1208
    %v1304 = vunpack.c.h.b16 %v1208
    %v1305 = vunpack.c.l.b16 %v1209
    %v1306 = vunpack.c.h.b16 %v1209
    %v1307 = vunpack.c.l.b16 %v1210
    %v1308 = vunpack.c.h.b16 %v1210
    %v1309 = vunpack.c.l.b16 %v1211
    %v1310 = vunpack.c.h.b16 %v1211
    %v1311 = vunpack.c.l.b16 %v1212
    %v1312 = vunpack.c.h.b16 %v1212
    %v1313 = vunpack.c.l.b16 %v1213
    %v1314 = vunpack.c.h.b16 %v1213
    %v1315 = vunpack.c.l.b16 %v1214
    %v1316 = vunpack.c.h.b16 %v1214
    %v1317 = vunpack.c.l.b16 %v1215
    %v1318 = vunpack.c.h.b16 %v1215
    %v1319 = vunpack.c.l.b16 %v1216
    %v1320 = vunpack.c.h.b16 %v1216
    %v1321 = vunpack.c.l.b16 %v1217
    %v1322 = vunpack.c.h.b16 %v1217
    %v1323 = vunpack.c.l.b16 %v1218
    %v1324 = vunpack.c.h.b16 %v1218
    %v1325 = vunpack.c.l.b16 %v1219
    %v1326 = vunpack.c.h.b16 %v1219
    %v1327 = vunpack.c.l.b16 %v1220
    %v1328 = vunpack.c.h.b16 %v1220
    %v1329 = vunpack.c.l.b16 %v1221
    %v1330 = vunpack.c.h.b16 %v1221
    %v1331 = vpack.c.b16 %v1269, %v1267
    %v1332 = vpack.c.b16 %v1270, %v1268
    %v1333 = vpack.c.b16 %v1273, %v1271
    %v1334 = vpack.c.b16 %v1274, %v1272
    %v1335 = vpack.c.b16 %v1277, %v1275
    %v1336 = vpack.c.b16 %v1278, %v1276
    %v1337 = vpack.c.b16 %v1281, %v1279
    %v1338 = vpack.c.b16 %v1282, %v1280
    %v1339 = vpack.c.b16 %v1285, %v1283
    %v1340 = vpack.c.b16 %v1286, %v1284
    %v1341 = vpack.c.b16 %v1289, %v1287
    %v1342 = vpack.c.b16 %v1290, %v1288
    %v1343 = vpack.c.b16 %v1293, %v1291
    %v1344 = vpack.c.b16 %v1294, %v1292
    %v1345 = vpack.c.b16 %v1297, %v1295
    %v1346 = vpack.c.b16 %v1298, %v1296
    %v1347 = vpack.c.b16 %v1301, %v1299
    %v1348 = vpack.c.b16 %v1302, %v1300
    %v1349 = vpack.c.b16 %v1305, %v1303
    %v1350 = vpack.c.b16 %v1306, %v1304
    %v1351 = vpack.c.b16 %v1309, %v1307
    %v1352 = vpack.c.b16 %v1310, %v1308
    %v1353 = vpack.c.b16 %v1313, %v1311
    %v1354 = vpack.c.b16 %v1314, %v1312
    %v1355 = vpack.c.b16 %v1317, %v1315
    %v1356 = vpack.c.b16 %v1318, %v1316
    %v1357 = vpack.c.b16 %v1321, %v1319
    %v1358 = vpack.c.b16 %v1322, %v1320
    %v1359 = vpack.c.b16 %v1325, %v1323
    %v1360 = vpack.c.b16 %v1326, %v1324
    %v1361 = vpack.c.b16 %v1329, %v1327
    %v1362 = vpack.c.b16 %v1330, %v1328
    %1395 = vmatprep.subr.bf16.mxu0 %v1332
    %1396 = vmatpush1.bf16.msra.mxu0 %v1331
    %1397 = vmatprep.subr.bf16.mxu0 %v1334
    %1398 = vmatpush1.bf16.msra.mxu0 %v1333
    %1399 = vmatprep.subr.bf16.mxu0 %v1336
    %1400 = vmatpush1.bf16.msra.mxu0 %v1335
    %1401 = vmatprep.subr.bf16.mxu0 %v1338
    %1402 = vmatpush1.bf16.msra.mxu0 %v1337
    %1403 = vmatprep.subr.bf16.mxu0 %v1340
    %1404 = vmatpush1.bf16.msra.mxu0 %v1339
    %1405 = vmatprep.subr.bf16.mxu0 %v1342
    %1406 = vmatpush1.bf16.msra.mxu0 %v1341
    %1407 = vmatprep.subr.bf16.mxu0 %v1344
    %1408 = vmatpush1.bf16.msra.mxu0 %v1343
    %1409 = vmatprep.subr.bf16.mxu0 %v1346
    %1410 = vmatpush1.bf16.msra.mxu0 %v1345
    %1411 = vmatprep.subr.bf16.mxu0 %v1348
    %1412 = vmatpush1.bf16.msra.mxu0 %v1347
    %1413 = vmatprep.subr.bf16.mxu0 %v1350
    %1414 = vmatpush1.bf16.msra.mxu0 %v1349
    %1415 = vmatprep.subr.bf16.mxu0 %v1352
    %1416 = vmatpush1.bf16.msra.mxu0 %v1351
    %1417 = vmatprep.subr.bf16.mxu0 %v1354
    %1418 = vmatpush1.bf16.msra.mxu0 %v1353
    %1419 = vmatprep.subr.bf16.mxu0 %v1356
    %1420 = vmatpush1.bf16.msra.mxu0 %v1355
    %1421 = vmatprep.subr.bf16.mxu0 %v1358
    %1422 = vmatpush1.bf16.msra.mxu0 %v1357
    %1423 = vmatprep.subr.bf16.mxu0 %v1360
    %1424 = vmatpush1.bf16.msra.mxu0 %v1359
    %1425 = vmatprep.subr.bf16.mxu0 %v1362
    %1426 = vmatpush1.bf16.msra.mxu0 %v1361
    %1427 = vmatprep.mubr.bf16.mxu0 %v1188
    %1428 = vmatmul.mubr.bf16.gmra.mrb[0].mxu0 %v1187
    %v1429 = vpop.f32.mrb[0].mxu0
    %v1430 = vadd.f32 %v1228, %v1429
    %v1431 = vpop.f32.mrb[0].mxu0
    %v1432 = vadd.f32 %v1232, %v1431
    %v1433 = vpop.f32.mrb[0].mxu0
    %v1434 = vpop.f32.mrb[0].mxu0
    %1435 = vdwg.mxu0
    %v1436 = vmax.f32 %v1430, 0.0
    %v1437 = vmax.f32 %v1432, 0.0
    %v1438 = vpack.c.bf16 %v1436, %v1436
    %v1439 = vpack.c.bf16 %v1437, %v1437
    %s1440 = scalar_lea.vmem [#allocation7], 512
    %v1441 = vld [vmem:[%s1440] sm:$0xff]
    %v1442 = vld [vmem:[%s1440 + $0x8] sm:$0xff]
    %v1443 = vld [vmem:[%s1440 + $0x10] sm:$0xff]
    %v1444 = vld [vmem:[%s1440 + $0x18] sm:$0xff]
    %v1445 = vld [vmem:[%s1440 + $0x20] sm:$0xff]
    %v1446 = vld [vmem:[%s1440 + $0x28] sm:$0xff]
    %v1447 = vld [vmem:[%s1440 + $0x30] sm:$0xff]
    %v1448 = vld [vmem:[%s1440 + $0x38] sm:$0xff]
    %v1449 = vld [vmem:[%s1440 + $0x40] sm:$0xff]
    %v1450 = vld [vmem:[%s1440 + $0x48] sm:$0xff]
    %v1451 = vld [vmem:[%s1440 + $0x50] sm:$0xff]
    %v1452 = vld [vmem:[%s1440 + $0x58] sm:$0xff]
    %v1453 = vld [vmem:[%s1440 + $0x60] sm:$0xff]
    %v1454 = vld [vmem:[%s1440 + $0x68] sm:$0xff]
    %v1455 = vld [vmem:[%s1440 + $0x70] sm:$0xff]
    %v1456 = vld [vmem:[%s1440 + $0x78] sm:$0xff]
    %v1457 = vld [vmem:[%s1440 + $0x80] sm:$0xff]
    %v1458 = vld [vmem:[%s1440 + $0x88] sm:$0xff]
    %v1459 = vld [vmem:[%s1440 + $0x90] sm:$0xff]
    %v1460 = vld [vmem:[%s1440 + $0x98] sm:$0xff]
    %v1461 = vld [vmem:[%s1440 + $0xa0] sm:$0xff]
    %v1462 = vld [vmem:[%s1440 + $0xa8] sm:$0xff]
    %v1463 = vld [vmem:[%s1440 + $0xb0] sm:$0xff]
    %v1464 = vld [vmem:[%s1440 + $0xb8] sm:$0xff]
    %v1465 = vld [vmem:[%s1440 + $0xc0] sm:$0xff]
    %v1466 = vld [vmem:[%s1440 + $0xc8] sm:$0xff]
    %v1467 = vld [vmem:[%s1440 + $0xd0] sm:$0xff]
    %v1468 = vld [vmem:[%s1440 + $0xd8] sm:$0xff]
    %v1469 = vld [vmem:[%s1440 + $0xe0] sm:$0xff]
    %v1470 = vld [vmem:[%s1440 + $0xe8] sm:$0xff]
    %v1471 = vld [vmem:[%s1440 + $0xf0] sm:$0xff]
    %v1472 = vld [vmem:[%s1440 + $0xf8] sm:$0xff]
    %s1473 = scalar_lea.vmem %s6, 4
    %v1474 = vld [vmem:[%s1473] sm:$0x3]
    %v1476 = vlaneseq
    %v1477 = vshrl.u32 %v1476, 7
    %v1478 = vsub.s32 0, %v1477
    %v1479 = vrot.slane %v1474, %v1478
    %v1480 = vlaneseq
    %v1481 = vshrl.u32 %v1480, 7
    %v1482 = vsub.s32 1, %v1481
    %v1483 = vrot.slane %v1474, %v1482
    %v1518 = vunpack.c.l.b16 %v1441
    %v1519 = vunpack.c.h.b16 %v1441
    %v1520 = vunpack.c.l.b16 %v1442
    %v1521 = vunpack.c.h.b16 %v1442
    %v1522 = vunpack.c.l.b16 %v1443
    %v1523 = vunpack.c.h.b16 %v1443
    %v1524 = vunpack.c.l.b16 %v1444
    %v1525 = vunpack.c.h.b16 %v1444
    %v1526 = vunpack.c.l.b16 %v1445
    %v1527 = vunpack.c.h.b16 %v1445
    %v1528 = vunpack.c.l.b16 %v1446
    %v1529 = vunpack.c.h.b16 %v1446
    %v1530 = vunpack.c.l.b16 %v1447
    %v1531 = vunpack.c.h.b16 %v1447
    %v1532 = vunpack.c.l.b16 %v1448
    %v1533 = vunpack.c.h.b16 %v1448
    %v1534 = vunpack.c.l.b16 %v1449
    %v1535 = vunpack.c.h.b16 %v1449
    %v1536 = vunpack.c.l.b16 %v1450
    %v1537 = vunpack.c.h.b16 %v1450
    %v1538 = vunpack.c.l.b16 %v1451
    %v1539 = vunpack.c.h.b16 %v1451
    %v1540 = vunpack.c.l.b16 %v1452
    %v1541 = vunpack.c.h.b16 %v1452
    %v1542 = vunpack.c.l.b16 %v1453
    %v1543 = vunpack.c.h.b16 %v1453
    %v1544 = vunpack.c.l.b16 %v1454
    %v1545 = vunpack.c.h.b16 %v1454
    %v1546 = vunpack.c.l.b16 %v1455
    %v1547 = vunpack.c.h.b16 %v1455
    %v1548 = vunpack.c.l.b16 %v1456
    %v1549 = vunpack.c.h.b16 %v1456
    %v1550 = vunpack.c.l.b16 %v1457
    %v1551 = vunpack.c.h.b16 %v1457
    %v1552 = vunpack.c.l.b16 %v1458
    %v1553 = vunpack.c.h.b16 %v1458
    %v1554 = vunpack.c.l.b16 %v1459
    %v1555 = vunpack.c.h.b16 %v1459
    %v1556 = vunpack.c.l.b16 %v1460
    %v1557 = vunpack.c.h.b16 %v1460
    %v1558 = vunpack.c.l.b16 %v1461
    %v1559 = vunpack.c.h.b16 %v1461
    %v1560 = vunpack.c.l.b16 %v1462
    %v1561 = vunpack.c.h.b16 %v1462
    %v1562 = vunpack.c.l.b16 %v1463
    %v1563 = vunpack.c.h.b16 %v1463
    %v1564 = vunpack.c.l.b16 %v1464
    %v1565 = vunpack.c.h.b16 %v1464
    %v1566 = vunpack.c.l.b16 %v1465
    %v1567 = vunpack.c.h.b16 %v1465
    %v1568 = vunpack.c.l.b16 %v1466
    %v1569 = vunpack.c.h.b16 %v1466
    %v1570 = vunpack.c.l.b16 %v1467
    %v1571 = vunpack.c.h.b16 %v1467
    %v1572 = vunpack.c.l.b16 %v1468
    %v1573 = vunpack.c.h.b16 %v1468
    %v1574 = vunpack.c.l.b16 %v1469
    %v1575 = vunpack.c.h.b16 %v1469
    %v1576 = vunpack.c.l.b16 %v1470
    %v1577 = vunpack.c.h.b16 %v1470
    %v1578 = vunpack.c.l.b16 %v1471
    %v1579 = vunpack.c.h.b16 %v1471
    %v1580 = vunpack.c.l.b16 %v1472
    %v1581 = vunpack.c.h.b16 %v1472
    %v1582 = vpack.c.b16 %v1520, %v1518
    %v1583 = vpack.c.b16 %v1521, %v1519
    %v1584 = vpack.c.b16 %v1524, %v1522
    %v1585 = vpack.c.b16 %v1525, %v1523
    %v1586 = vpack.c.b16 %v1528, %v1526
    %v1587 = vpack.c.b16 %v1529, %v1527
    %v1588 = vpack.c.b16 %v1532, %v1530
    %v1589 = vpack.c.b16 %v1533, %v1531
    %v1590 = vpack.c.b16 %v1536, %v1534
    %v1591 = vpack.c.b16 %v1537, %v1535
    %v1592 = vpack.c.b16 %v1540, %v1538
    %v1593 = vpack.c.b16 %v1541, %v1539
    %v1594 = vpack.c.b16 %v1544, %v1542
    %v1595 = vpack.c.b16 %v1545, %v1543
    %v1596 = vpack.c.b16 %v1548, %v1546
    %v1597 = vpack.c.b16 %v1549, %v1547
    %v1598 = vpack.c.b16 %v1552, %v1550
    %v1599 = vpack.c.b16 %v1553, %v1551
    %v1600 = vpack.c.b16 %v1556, %v1554
    %v1601 = vpack.c.b16 %v1557, %v1555
    %v1602 = vpack.c.b16 %v1560, %v1558
    %v1603 = vpack.c.b16 %v1561, %v1559
    %v1604 = vpack.c.b16 %v1564, %v1562
    %v1605 = vpack.c.b16 %v1565, %v1563
    %v1606 = vpack.c.b16 %v1568, %v1566
    %v1607 = vpack.c.b16 %v1569, %v1567
    %v1608 = vpack.c.b16 %v1572, %v1570
    %v1609 = vpack.c.b16 %v1573, %v1571
    %v1610 = vpack.c.b16 %v1576, %v1574
    %v1611 = vpack.c.b16 %v1577, %v1575
    %v1612 = vpack.c.b16 %v1580, %v1578
    %v1613 = vpack.c.b16 %v1581, %v1579
    %1646 = vmatprep.subr.bf16.mxu0 %v1583
    %1647 = vmatpush1.bf16.msra.mxu0 %v1582
    %1648 = vmatprep.subr.bf16.mxu0 %v1585
    %1649 = vmatpush1.bf16.msra.mxu0 %v1584
    %1650 = vmatprep.subr.bf16.mxu0 %v1587
    %1651 = vmatpush1.bf16.msra.mxu0 %v1586
    %1652 = vmatprep.subr.bf16.mxu0 %v1589
    %1653 = vmatpush1.bf16.msra.mxu0 %v1588
    %1654 = vmatprep.subr.bf16.mxu0 %v1591
    %1655 = vmatpush1.bf16.msra.mxu0 %v1590
    %1656 = vmatprep.subr.bf16.mxu0 %v1593
    %1657 = vmatpush1.bf16.msra.mxu0 %v1592
    %1658 = vmatprep.subr.bf16.mxu0 %v1595
    %1659 = vmatpush1.bf16.msra.mxu0 %v1594
    %1660 = vmatprep.subr.bf16.mxu0 %v1597
    %1661 = vmatpush1.bf16.msra.mxu0 %v1596
    %1662 = vmatprep.subr.bf16.mxu0 %v1599
    %1663 = vmatpush1.bf16.msra.mxu0 %v1598
    %1664 = vmatprep.subr.bf16.mxu0 %v1601
    %1665 = vmatpush1.bf16.msra.mxu0 %v1600
    %1666 = vmatprep.subr.bf16.mxu0 %v1603
    %1667 = vmatpush1.bf16.msra.mxu0 %v1602
    %1668 = vmatprep.subr.bf16.mxu0 %v1605
    %1669 = vmatpush1.bf16.msra.mxu0 %v1604
    %1670 = vmatprep.subr.bf16.mxu0 %v1607
    %1671 = vmatpush1.bf16.msra.mxu0 %v1606
    %1672 = vmatprep.subr.bf16.mxu0 %v1609
    %1673 = vmatpush1.bf16.msra.mxu0 %v1608
    %1674 = vmatprep.subr.bf16.mxu0 %v1611
    %1675 = vmatpush1.bf16.msra.mxu0 %v1610
    %1676 = vmatprep.subr.bf16.mxu0 %v1613
    %1677 = vmatpush1.bf16.msra.mxu0 %v1612
    %1678 = vmatprep.mubr.bf16.mxu0 %v1439
    %1679 = vmatmul.mubr.bf16.gmra.mrb[0].mxu0 %v1438
    %v1680 = vpop.f32.mrb[0].mxu0
    %v1681 = vadd.f32 %v1479, %v1680
    %v1682 = vpop.f32.mrb[0].mxu0
    %v1683 = vadd.f32 %v1483, %v1682
    %v1684 = vpop.f32.mrb[0].mxu0
    %v1685 = vpop.f32.mrb[0].mxu0
    %1686 = vdwg.mxu0
    %v1687 = vadd.f32 %v1681, %v1185
    %v1688 = vadd.f32 %v1683, %v1186
    %v1689 = vmax.f32 %v1687, 0.0
    %v1690 = vmax.f32 %v1688, 0.0
    %v1691 = vpack.c.bf16 %v1689, %v1689
    %v1692 = vpack.c.bf16 %v1690, %v1690
    %s1693 = scalar_lea.vmem [#allocation5], 768
    %v1694 = vld [vmem:[%s1693] sm:$0xff]
    %v1695 = vld [vmem:[%s1693 + $0x8] sm:$0xff]
    %v1696 = vld [vmem:[%s1693 + $0x10] sm:$0xff]
    %v1697 = vld [vmem:[%s1693 + $0x18] sm:$0xff]
    %v1698 = vld [vmem:[%s1693 + $0x20] sm:$0xff]
    %v1699 = vld [vmem:[%s1693 + $0x28] sm:$0xff]
    %v1700 = vld [vmem:[%s1693 + $0x30] sm:$0xff]
    %v1701 = vld [vmem:[%s1693 + $0x38] sm:$0xff]
    %v1702 = vld [vmem:[%s1693 + $0x40] sm:$0xff]
    %v1703 = vld [vmem:[%s1693 + $0x48] sm:$0xff]
    %v1704 = vld [vmem:[%s1693 + $0x50] sm:$0xff]
    %v1705 = vld [vmem:[%s1693 + $0x58] sm:$0xff]
    %v1706 = vld [vmem:[%s1693 + $0x60] sm:$0xff]
    %v1707 = vld [vmem:[%s1693 + $0x68] sm:$0xff]
    %v1708 = vld [vmem:[%s1693 + $0x70] sm:$0xff]
    %v1709 = vld [vmem:[%s1693 + $0x78] sm:$0xff]
    %v1710 = vld [vmem:[%s1693 + $0x80] sm:$0xff]
    %v1711 = vld [vmem:[%s1693 + $0x88] sm:$0xff]
    %v1712 = vld [vmem:[%s1693 + $0x90] sm:$0xff]
    %v1713 = vld [vmem:[%s1693 + $0x98] sm:$0xff]
    %v1714 = vld [vmem:[%s1693 + $0xa0] sm:$0xff]
    %v1715 = vld [vmem:[%s1693 + $0xa8] sm:$0xff]
    %v1716 = vld [vmem:[%s1693 + $0xb0] sm:$0xff]
    %v1717 = vld [vmem:[%s1693 + $0xb8] sm:$0xff]
    %v1718 = vld [vmem:[%s1693 + $0xc0] sm:$0xff]
    %v1719 = vld [vmem:[%s1693 + $0xc8] sm:$0xff]
    %v1720 = vld [vmem:[%s1693 + $0xd0] sm:$0xff]
    %v1721 = vld [vmem:[%s1693 + $0xd8] sm:$0xff]
    %v1722 = vld [vmem:[%s1693 + $0xe0] sm:$0xff]
    %v1723 = vld [vmem:[%s1693 + $0xe8] sm:$0xff]
    %v1724 = vld [vmem:[%s1693 + $0xf0] sm:$0xff]
    %v1725 = vld [vmem:[%s1693 + $0xf8] sm:$0xff]
    %s1726 = scalar_lea.vmem %s5, 6
    %v1727 = vld [vmem:[%s1726] sm:$0x3]
    %v1729 = vlaneseq
    %v1730 = vshrl.u32 %v1729, 7
    %v1731 = vsub.s32 0, %v1730
    %v1732 = vrot.slane %v1727, %v1731
    %v1733 = vlaneseq
    %v1734 = vshrl.u32 %v1733, 7
    %v1735 = vsub.s32 1, %v1734
    %v1736 = vrot.slane %v1727, %v1735
    %v1771 = vunpack.c.l.b16 %v1694
    %v1772 = vunpack.c.h.b16 %v1694
    %v1773 = vunpack.c.l.b16 %v1695
    %v1774 = vunpack.c.h.b16 %v1695
    %v1775 = vunpack.c.l.b16 %v1696
    %v1776 = vunpack.c.h.b16 %v1696
    %v1777 = vunpack.c.l.b16 %v1697
    %v1778 = vunpack.c.h.b16 %v1697
    %v1779 = vunpack.c.l.b16 %v1698
    %v1780 = vunpack.c.h.b16 %v1698
    %v1781 = vunpack.c.l.b16 %v1699
    %v1782 = vunpack.c.h.b16 %v1699
    %v1783 = vunpack.c.l.b16 %v1700
    %v1784 = vunpack.c.h.b16 %v1700
    %v1785 = vunpack.c.l.b16 %v1701
    %v1786 = vunpack.c.h.b16 %v1701
    %v1787 = vunpack.c.l.b16 %v1702
    %v1788 = vunpack.c.h.b16 %v1702
    %v1789 = vunpack.c.l.b16 %v1703
    %v1790 = vunpack.c.h.b16 %v1703
    %v1791 = vunpack.c.l.b16 %v1704
    %v1792 = vunpack.c.h.b16 %v1704
    %v1793 = vunpack.c.l.b16 %v1705
    %v1794 = vunpack.c.h.b16 %v1705
    %v1795 = vunpack.c.l.b16 %v1706
    %v1796 = vunpack.c.h.b16 %v1706
    %v1797 = vunpack.c.l.b16 %v1707
    %v1798 = vunpack.c.h.b16 %v1707
    %v1799 = vunpack.c.l.b16 %v1708
    %v1800 = vunpack.c.h.b16 %v1708
    %v1801 = vunpack.c.l.b16 %v1709
    %v1802 = vunpack.c.h.b16 %v1709
    %v1803 = vunpack.c.l.b16 %v1710
    %v1804 = vunpack.c.h.b16 %v1710
    %v1805 = vunpack.c.l.b16 %v1711
    %v1806 = vunpack.c.h.b16 %v1711
    %v1807 = vunpack.c.l.b16 %v1712
    %v1808 = vunpack.c.h.b16 %v1712
    %v1809 = vunpack.c.l.b16 %v1713
    %v1810 = vunpack.c.h.b16 %v1713
    %v1811 = vunpack.c.l.b16 %v1714
    %v1812 = vunpack.c.h.b16 %v1714
    %v1813 = vunpack.c.l.b16 %v1715
    %v1814 = vunpack.c.h.b16 %v1715
    %v1815 = vunpack.c.l.b16 %v1716
    %v1816 = vunpack.c.h.b16 %v1716
    %v1817 = vunpack.c.l.b16 %v1717
    %v1818 = vunpack.c.h.b16 %v1717
    %v1819 = vunpack.c.l.b16 %v1718
    %v1820 = vunpack.c.h.b16 %v1718
    %v1821 = vunpack.c.l.b16 %v1719
    %v1822 = vunpack.c.h.b16 %v1719
    %v1823 = vunpack.c.l.b16 %v1720
    %v1824 = vunpack.c.h.b16 %v1720
    %v1825 = vunpack.c.l.b16 %v1721
    %v1826 = vunpack.c.h.b16 %v1721
    %v1827 = vunpack.c.l.b16 %v1722
    %v1828 = vunpack.c.h.b16 %v1722
    %v1829 = vunpack.c.l.b16 %v1723
    %v1830 = vunpack.c.h.b16 %v1723
    %v1831 = vunpack.c.l.b16 %v1724
    %v1832 = vunpack.c.h.b16 %v1724
    %v1833 = vunpack.c.l.b16 %v1725
    %v1834 = vunpack.c.h.b16 %v1725
    %v1835 = vpack.c.b16 %v1773, %v1771
    %v1836 = vpack.c.b16 %v1774, %v1772
    %v1837 = vpack.c.b16 %v1777, %v1775
    %v1838 = vpack.c.b16 %v1778, %v1776
    %v1839 = vpack.c.b16 %v1781, %v1779
    %v1840 = vpack.c.b16 %v1782, %v1780
    %v1841 = vpack.c.b16 %v1785, %v1783
    %v1842 = vpack.c.b16 %v1786, %v1784
    %v1843 = vpack.c.b16 %v1789, %v1787
    %v1844 = vpack.c.b16 %v1790, %v1788
    %v1845 = vpack.c.b16 %v1793, %v1791
    %v1846 = vpack.c.b16 %v1794, %v1792
    %v1847 = vpack.c.b16 %v1797, %v1795
    %v1848 = vpack.c.b16 %v1798, %v1796
    %v1849 = vpack.c.b16 %v1801, %v1799
    %v1850 = vpack.c.b16 %v1802, %v1800
    %v1851 = vpack.c.b16 %v1805, %v1803
    %v1852 = vpack.c.b16 %v1806, %v1804
    %v1853 = vpack.c.b16 %v1809, %v1807
    %v1854 = vpack.c.b16 %v1810, %v1808
    %v1855 = vpack.c.b16 %v1813, %v1811
    %v1856 = vpack.c.b16 %v1814, %v1812
    %v1857 = vpack.c.b16 %v1817, %v1815
    %v1858 = vpack.c.b16 %v1818, %v1816
    %v1859 = vpack.c.b16 %v1821, %v1819
    %v1860 = vpack.c.b16 %v1822, %v1820
    %v1861 = vpack.c.b16 %v1825, %v1823
    %v1862 = vpack.c.b16 %v1826, %v1824
    %v1863 = vpack.c.b16 %v1829, %v1827
    %v1864 = vpack.c.b16 %v1830, %v1828
    %v1865 = vpack.c.b16 %v1833, %v1831
    %v1866 = vpack.c.b16 %v1834, %v1832
    %1899 = vmatprep.subr.bf16.mxu0 %v1836
    %1900 = vmatpush1.bf16.msra.mxu0 %v1835
    %1901 = vmatprep.subr.bf16.mxu0 %v1838
    %1902 = vmatpush1.bf16.msra.mxu0 %v1837
    %1903 = vmatprep.subr.bf16.mxu0 %v1840
    %1904 = vmatpush1.bf16.msra.mxu0 %v1839
    %1905 = vmatprep.subr.bf16.mxu0 %v1842
    %1906 = vmatpush1.bf16.msra.mxu0 %v1841
    %1907 = vmatprep.subr.bf16.mxu0 %v1844
    %1908 = vmatpush1.bf16.msra.mxu0 %v1843
    %1909 = vmatprep.subr.bf16.mxu0 %v1846
    %1910 = vmatpush1.bf16.msra.mxu0 %v1845
    %1911 = vmatprep.subr.bf16.mxu0 %v1848
    %1912 = vmatpush1.bf16.msra.mxu0 %v1847
    %1913 = vmatprep.subr.bf16.mxu0 %v1850
    %1914 = vmatpush1.bf16.msra.mxu0 %v1849
    %1915 = vmatprep.subr.bf16.mxu0 %v1852
    %1916 = vmatpush1.bf16.msra.mxu0 %v1851
    %1917 = vmatprep.subr.bf16.mxu0 %v1854
    %1918 = vmatpush1.bf16.msra.mxu0 %v1853
    %1919 = vmatprep.subr.bf16.mxu0 %v1856
    %1920 = vmatpush1.bf16.msra.mxu0 %v1855
    %1921 = vmatprep.subr.bf16.mxu0 %v1858
    %1922 = vmatpush1.bf16.msra.mxu0 %v1857
    %1923 = vmatprep.subr.bf16.mxu0 %v1860
    %1924 = vmatpush1.bf16.msra.mxu0 %v1859
    %1925 = vmatprep.subr.bf16.mxu0 %v1862
    %1926 = vmatpush1.bf16.msra.mxu0 %v1861
    %1927 = vmatprep.subr.bf16.mxu0 %v1864
    %1928 = vmatpush1.bf16.msra.mxu0 %v1863
    %1929 = vmatprep.subr.bf16.mxu0 %v1866
    %1930 = vmatpush1.bf16.msra.mxu0 %v1865
    %1931 = vmatprep.mubr.bf16.mxu0 %v1692
    %1932 = vmatmul.mubr.bf16.gmra.mrb[0].mxu0 %v1691
    %v1933 = vpop.f32.mrb[0].mxu0
    %v1934 = vadd.f32 %v1732, %v1933
    %v1935 = vpop.f32.mrb[0].mxu0
    %v1936 = vadd.f32 %v1736, %v1935
    %v1937 = vpop.f32.mrb[0].mxu0
    %v1938 = vpop.f32.mrb[0].mxu0
    %1939 = vdwg.mxu0
    %v1940 = vmax.f32 %v1934, 0.0
    %v1941 = vmax.f32 %v1936, 0.0
    %v1942 = vpack.c.bf16 %v1940, %v1940
    %v1943 = vpack.c.bf16 %v1941, %v1941
    %s1944 = scalar_lea.vmem [#allocation7], 768
    %v1945 = vld [vmem:[%s1944] sm:$0xff]
    %v1946 = vld [vmem:[%s1944 + $0x8] sm:$0xff]
    %v1947 = vld [vmem:[%s1944 + $0x10] sm:$0xff]
    %v1948 = vld [vmem:[%s1944 + $0x18] sm:$0xff]
    %v1949 = vld [vmem:[%s1944 + $0x20] sm:$0xff]
    %v1950 = vld [vmem:[%s1944 + $0x28] sm:$0xff]
    %v1951 = vld [vmem:[%s1944 + $0x30] sm:$0xff]
    %v1952 = vld [vmem:[%s1944 + $0x38] sm:$0xff]
    %v1953 = vld [vmem:[%s1944 + $0x40] sm:$0xff]
    %v1954 = vld [vmem:[%s1944 + $0x48] sm:$0xff]
    %v1955 = vld [vmem:[%s1944 + $0x50] sm:$0xff]
    %v1956 = vld [vmem:[%s1944 + $0x58] sm:$0xff]
    %v1957 = vld [vmem:[%s1944 + $0x60] sm:$0xff]
    %v1958 = vld [vmem:[%s1944 + $0x68] sm:$0xff]
    %v1959 = vld [vmem:[%s1944 + $0x70] sm:$0xff]
    %v1960 = vld [vmem:[%s1944 + $0x78] sm:$0xff]
    %v1961 = vld [vmem:[%s1944 + $0x80] sm:$0xff]
    %v1962 = vld [vmem:[%s1944 + $0x88] sm:$0xff]
    %v1963 = vld [vmem:[%s1944 + $0x90] sm:$0xff]
    %v1964 = vld [vmem:[%s1944 + $0x98] sm:$0xff]
    %v1965 = vld [vmem:[%s1944 + $0xa0] sm:$0xff]
    %v1966 = vld [vmem:[%s1944 + $0xa8] sm:$0xff]
    %v1967 = vld [vmem:[%s1944 + $0xb0] sm:$0xff]
    %v1968 = vld [vmem:[%s1944 + $0xb8] sm:$0xff]
    %v1969 = vld [vmem:[%s1944 + $0xc0] sm:$0xff]
    %v1970 = vld [vmem:[%s1944 + $0xc8] sm:$0xff]
    %v1971 = vld [vmem:[%s1944 + $0xd0] sm:$0xff]
    %v1972 = vld [vmem:[%s1944 + $0xd8] sm:$0xff]
    %v1973 = vld [vmem:[%s1944 + $0xe0] sm:$0xff]
    %v1974 = vld [vmem:[%s1944 + $0xe8] sm:$0xff]
    %v1975 = vld [vmem:[%s1944 + $0xf0] sm:$0xff]
    %v1976 = vld [vmem:[%s1944 + $0xf8] sm:$0xff]
    %s1977 = scalar_lea.vmem %s6, 6
    %v1978 = vld [vmem:[%s1977] sm:$0x3]
    %v1980 = vlaneseq
    %v1981 = vshrl.u32 %v1980, 7
    %v1982 = vsub.s32 0, %v1981
    %v1983 = vrot.slane %v1978, %v1982
    %v1984 = vlaneseq
    %v1985 = vshrl.u32 %v1984, 7
    %v1986 = vsub.s32 1, %v1985
    %v1987 = vrot.slane %v1978, %v1986
    %v2022 = vunpack.c.l.b16 %v1945
    %v2023 = vunpack.c.h.b16 %v1945
    %v2024 = vunpack.c.l.b16 %v1946
    %v2025 = vunpack.c.h.b16 %v1946
    %v2026 = vunpack.c.l.b16 %v1947
    %v2027 = vunpack.c.h.b16 %v1947
    %v2028 = vunpack.c.l.b16 %v1948
    %v2029 = vunpack.c.h.b16 %v1948
    %v2030 = vunpack.c.l.b16 %v1949
    %v2031 = vunpack.c.h.b16 %v1949
    %v2032 = vunpack.c.l.b16 %v1950
    %v2033 = vunpack.c.h.b16 %v1950
    %v2034 = vunpack.c.l.b16 %v1951
    %v2035 = vunpack.c.h.b16 %v1951
    %v2036 = vunpack.c.l.b16 %v1952
    %v2037 = vunpack.c.h.b16 %v1952
    %v2038 = vunpack.c.l.b16 %v1953
    %v2039 = vunpack.c.h.b16 %v1953
    %v2040 = vunpack.c.l.b16 %v1954
    %v2041 = vunpack.c.h.b16 %v1954
    %v2042 = vunpack.c.l.b16 %v1955
    %v2043 = vunpack.c.h.b16 %v1955
    %v2044 = vunpack.c.l.b16 %v1956
    %v2045 = vunpack.c.h.b16 %v1956
    %v2046 = vunpack.c.l.b16 %v1957
    %v2047 = vunpack.c.h.b16 %v1957
    %v2048 = vunpack.c.l.b16 %v1958
    %v2049 = vunpack.c.h.b16 %v1958
    %v2050 = vunpack.c.l.b16 %v1959
    %v2051 = vunpack.c.h.b16 %v1959
    %v2052 = vunpack.c.l.b16 %v1960
    %v2053 = vunpack.c.h.b16 %v1960
    %v2054 = vunpack.c.l.b16 %v1961
    %v2055 = vunpack.c.h.b16 %v1961
    %v2056 = vunpack.c.l.b16 %v1962
    %v2057 = vunpack.c.h.b16 %v1962
    %v2058 = vunpack.c.l.b16 %v1963
    %v2059 = vunpack.c.h.b16 %v1963
    %v2060 = vunpack.c.l.b16 %v1964
    %v2061 = vunpack.c.h.b16 %v1964
    %v2062 = vunpack.c.l.b16 %v1965
    %v2063 = vunpack.c.h.b16 %v1965
    %v2064 = vunpack.c.l.b16 %v1966
    %v2065 = vunpack.c.h.b16 %v1966
    %v2066 = vunpack.c.l.b16 %v1967
    %v2067 = vunpack.c.h.b16 %v1967
    %v2068 = vunpack.c.l.b16 %v1968
    %v2069 = vunpack.c.h.b16 %v1968
    %v2070 = vunpack.c.l.b16 %v1969
    %v2071 = vunpack.c.h.b16 %v1969
    %v2072 = vunpack.c.l.b16 %v1970
    %v2073 = vunpack.c.h.b16 %v1970
    %v2074 = vunpack.c.l.b16 %v1971
    %v2075 = vunpack.c.h.b16 %v1971
    %v2076 = vunpack.c.l.b16 %v1972
    %v2077 = vunpack.c.h.b16 %v1972
    %v2078 = vunpack.c.l.b16 %v1973
    %v2079 = vunpack.c.h.b16 %v1973
    %v2080 = vunpack.c.l.b16 %v1974
    %v2081 = vunpack.c.h.b16 %v1974
    %v2082 = vunpack.c.l.b16 %v1975
    %v2083 = vunpack.c.h.b16 %v1975
    %v2084 = vunpack.c.l.b16 %v1976
    %v2085 = vunpack.c.h.b16 %v1976
    %v2086 = vpack.c.b16 %v2024, %v2022
    %v2087 = vpack.c.b16 %v2025, %v2023
    %v2088 = vpack.c.b16 %v2028, %v2026
    %v2089 = vpack.c.b16 %v2029, %v2027
    %v2090 = vpack.c.b16 %v2032, %v2030
    %v2091 = vpack.c.b16 %v2033, %v2031
    %v2092 = vpack.c.b16 %v2036, %v2034
    %v2093 = vpack.c.b16 %v2037, %v2035
    %v2094 = vpack.c.b16 %v2040, %v2038
    %v2095 = vpack.c.b16 %v2041, %v2039
    %v2096 = vpack.c.b16 %v2044, %v2042
    %v2097 = vpack.c.b16 %v2045, %v2043
    %v2098 = vpack.c.b16 %v2048, %v2046
    %v2099 = vpack.c.b16 %v2049, %v2047
    %v2100 = vpack.c.b16 %v2052, %v2050
    %v2101 = vpack.c.b16 %v2053, %v2051
    %v2102 = vpack.c.b16 %v2056, %v2054
    %v2103 = vpack.c.b16 %v2057, %v2055
    %v2104 = vpack.c.b16 %v2060, %v2058
    %v2105 = vpack.c.b16 %v2061, %v2059
    %v2106 = vpack.c.b16 %v2064, %v2062
    %v2107 = vpack.c.b16 %v2065, %v2063
    %v2108 = vpack.c.b16 %v2068, %v2066
    %v2109 = vpack.c.b16 %v2069, %v2067
    %v2110 = vpack.c.b16 %v2072, %v2070
    %v2111 = vpack.c.b16 %v2073, %v2071
    %v2112 = vpack.c.b16 %v2076, %v2074
    %v2113 = vpack.c.b16 %v2077, %v2075
    %v2114 = vpack.c.b16 %v2080, %v2078
    %v2115 = vpack.c.b16 %v2081, %v2079
    %v2116 = vpack.c.b16 %v2084, %v2082
    %v2117 = vpack.c.b16 %v2085, %v2083
    %2150 = vmatprep.subr.bf16.mxu0 %v2087
    %2151 = vmatpush1.bf16.msra.mxu0 %v2086
    %2152 = vmatprep.subr.bf16.mxu0 %v2089
    %2153 = vmatpush1.bf16.msra.mxu0 %v2088
    %2154 = vmatprep.subr.bf16.mxu0 %v2091
    %2155 = vmatpush1.bf16.msra.mxu0 %v2090
    %2156 = vmatprep.subr.bf16.mxu0 %v2093
    %2157 = vmatpush1.bf16.msra.mxu0 %v2092
    %2158 = vmatprep.subr.bf16.mxu0 %v2095
    %2159 = vmatpush1.bf16.msra.mxu0 %v2094
    %2160 = vmatprep.subr.bf16.mxu0 %v2097
    %2161 = vmatpush1.bf16.msra.mxu0 %v2096
    %2162 = vmatprep.subr.bf16.mxu0 %v2099
    %2163 = vmatpush1.bf16.msra.mxu0 %v2098
    %2164 = vmatprep.subr.bf16.mxu0 %v2101
    %2165 = vmatpush1.bf16.msra.mxu0 %v2100
    %2166 = vmatprep.subr.bf16.mxu0 %v2103
    %2167 = vmatpush1.bf16.msra.mxu0 %v2102
    %2168 = vmatprep.subr.bf16.mxu0 %v2105
    %2169 = vmatpush1.bf16.msra.mxu0 %v2104
    %2170 = vmatprep.subr.bf16.mxu0 %v2107
    %2171 = vmatpush1.bf16.msra.mxu0 %v2106
    %2172 = vmatprep.subr.bf16.mxu0 %v2109
    %2173 = vmatpush1.bf16.msra.mxu0 %v2108
    %2174 = vmatprep.subr.bf16.mxu0 %v2111
    %2175 = vmatpush1.bf16.msra.mxu0 %v2110
    %2176 = vmatprep.subr.bf16.mxu0 %v2113
    %2177 = vmatpush1.bf16.msra.mxu0 %v2112
    %2178 = vmatprep.subr.bf16.mxu0 %v2115
    %2179 = vmatpush1.bf16.msra.mxu0 %v2114
    %2180 = vmatprep.subr.bf16.mxu0 %v2117
    %2181 = vmatpush1.bf16.msra.mxu0 %v2116
    %2182 = vmatprep.mubr.bf16.mxu0 %v1943
    %2183 = vmatmul.mubr.bf16.gmra.mrb[0].mxu0 %v1942
    %v2184 = vpop.f32.mrb[0].mxu0
    %v2185 = vadd.f32 %v1983, %v2184
    %v2186 = vpop.f32.mrb[0].mxu0
    %v2187 = vadd.f32 %v1987, %v2186
    %v2188 = vpop.f32.mrb[0].mxu0
    %v2189 = vpop.f32.mrb[0].mxu0
    %2190 = vdwg.mxu0
    %v2191 = vadd.f32 %v2185, %v1689
    %v2192 = vadd.f32 %v2187, %v1690
    %v2193 = vmax.f32 %v2191, 0.0
    %v2194 = vmax.f32 %v2192, 0.0
    %v2195 = vpack.c.bf16 %v2193, %v2193
    %v2196 = vpack.c.bf16 %v2194, %v2194
    %s2197 = scalar_lea.vmem [#allocation5], 1024
    %v2198 = vld [vmem:[%s2197] sm:$0xff]
    %v2199 = vld [vmem:[%s2197 + $0x8] sm:$0xff]
    %v2200 = vld [vmem:[%s2197 + $0x10] sm:$0xff]
    %v2201 = vld [vmem:[%s2197 + $0x18] sm:$0xff]
    %v2202 = vld [vmem:[%s2197 + $0x20] sm:$0xff]
    %v2203 = vld [vmem:[%s2197 + $0x28] sm:$0xff]
    %v2204 = vld [vmem:[%s2197 + $0x30] sm:$0xff]
    %v2205 = vld [vmem:[%s2197 + $0x38] sm:$0xff]
    %v2206 = vld [vmem:[%s2197 + $0x40] sm:$0xff]
    %v2207 = vld [vmem:[%s2197 + $0x48] sm:$0xff]
    %v2208 = vld [vmem:[%s2197 + $0x50] sm:$0xff]
    %v2209 = vld [vmem:[%s2197 + $0x58] sm:$0xff]
    %v2210 = vld [vmem:[%s2197 + $0x60] sm:$0xff]
    %v2211 = vld [vmem:[%s2197 + $0x68] sm:$0xff]
    %v2212 = vld [vmem:[%s2197 + $0x70] sm:$0xff]
    %v2213 = vld [vmem:[%s2197 + $0x78] sm:$0xff]
    %v2214 = vld [vmem:[%s2197 + $0x80] sm:$0xff]
    %v2215 = vld [vmem:[%s2197 + $0x88] sm:$0xff]
    %v2216 = vld [vmem:[%s2197 + $0x90] sm:$0xff]
    %v2217 = vld [vmem:[%s2197 + $0x98] sm:$0xff]
    %v2218 = vld [vmem:[%s2197 + $0xa0] sm:$0xff]
    %v2219 = vld [vmem:[%s2197 + $0xa8] sm:$0xff]
    %v2220 = vld [vmem:[%s2197 + $0xb0] sm:$0xff]
    %v2221 = vld [vmem:[%s2197 + $0xb8] sm:$0xff]
    %v2222 = vld [vmem:[%s2197 + $0xc0] sm:$0xff]
    %v2223 = vld [vmem:[%s2197 + $0xc8] sm:$0xff]
    %v2224 = vld [vmem:[%s2197 + $0xd0] sm:$0xff]
    %v2225 = vld [vmem:[%s2197 + $0xd8] sm:$0xff]
    %v2226 = vld [vmem:[%s2197 + $0xe0] sm:$0xff]
    %v2227 = vld [vmem:[%s2197 + $0xe8] sm:$0xff]
    %v2228 = vld [vmem:[%s2197 + $0xf0] sm:$0xff]
    %v2229 = vld [vmem:[%s2197 + $0xf8] sm:$0xff]
    %s2230 = scalar_lea.vmem %s5, 8
    %v2231 = vld [vmem:[%s2230] sm:$0x3]
    %v2233 = vlaneseq
    %v2234 = vshrl.u32 %v2233, 7
    %v2235 = vsub.s32 0, %v2234
    %v2236 = vrot.slane %v2231, %v2235
    %v2237 = vlaneseq
    %v2238 = vshrl.u32 %v2237, 7
    %v2239 = vsub.s32 1, %v2238
    %v2240 = vrot.slane %v2231, %v2239
    %v2275 = vunpack.c.l.b16 %v2198
    %v2276 = vunpack.c.h.b16 %v2198
    %v2277 = vunpack.c.l.b16 %v2199
    %v2278 = vunpack.c.h.b16 %v2199
    %v2279 = vunpack.c.l.b16 %v2200
    %v2280 = vunpack.c.h.b16 %v2200
    %v2281 = vunpack.c.l.b16 %v2201
    %v2282 = vunpack.c.h.b16 %v2201
    %v2283 = vunpack.c.l.b16 %v2202
    %v2284 = vunpack.c.h.b16 %v2202
    %v2285 = vunpack.c.l.b16 %v2203
    %v2286 = vunpack.c.h.b16 %v2203
    %v2287 = vunpack.c.l.b16 %v2204
    %v2288 = vunpack.c.h.b16 %v2204
    %v2289 = vunpack.c.l.b16 %v2205
    %v2290 = vunpack.c.h.b16 %v2205
    %v2291 = vunpack.c.l.b16 %v2206
    %v2292 = vunpack.c.h.b16 %v2206
    %v2293 = vunpack.c.l.b16 %v2207
    %v2294 = vunpack.c.h.b16 %v2207
    %v2295 = vunpack.c.l.b16 %v2208
    %v2296 = vunpack.c.h.b16 %v2208
    %v2297 = vunpack.c.l.b16 %v2209
    %v2298 = vunpack.c.h.b16 %v2209
    %v2299 = vunpack.c.l.b16 %v2210
    %v2300 = vunpack.c.h.b16 %v2210
    %v2301 = vunpack.c.l.b16 %v2211
    %v2302 = vunpack.c.h.b16 %v2211
    %v2303 = vunpack.c.l.b16 %v2212
    %v2304 = vunpack.c.h.b16 %v2212
    %v2305 = vunpack.c.l.b16 %v2213
    %v2306 = vunpack.c.h.b16 %v2213
    %v2307 = vunpack.c.l.b16 %v2214
    %v2308 = vunpack.c.h.b16 %v2214
    %v2309 = vunpack.c.l.b16 %v2215
    %v2310 = vunpack.c.h.b16 %v2215
    %v2311 = vunpack.c.l.b16 %v2216
    %v2312 = vunpack.c.h.b16 %v2216
    %v2313 = vunpack.c.l.b16 %v2217
    %v2314 = vunpack.c.h.b16 %v2217
    %v2315 = vunpack.c.l.b16 %v2218
    %v2316 = vunpack.c.h.b16 %v2218
    %v2317 = vunpack.c.l.b16 %v2219
    %v2318 = vunpack.c.h.b16 %v2219
    %v2319 = vunpack.c.l.b16 %v2220
    %v2320 = vunpack.c.h.b16 %v2220
    %v2321 = vunpack.c.l.b16 %v2221
    %v2322 = vunpack.c.h.b16 %v2221
    %v2323 = vunpack.c.l.b16 %v2222
    %v2324 = vunpack.c.h.b16 %v2222
    %v2325 = vunpack.c.l.b16 %v2223
    %v2326 = vunpack.c.h.b16 %v2223
    %v2327 = vunpack.c.l.b16 %v2224
    %v2328 = vunpack.c.h.b16 %v2224
    %v2329 = vunpack.c.l.b16 %v2225
    %v2330 = vunpack.c.h.b16 %v2225
    %v2331 = vunpack.c.l.b16 %v2226
    %v2332 = vunpack.c.h.b16 %v2226
    %v2333 = vunpack.c.l.b16 %v2227
    %v2334 = vunpack.c.h.b16 %v2227
    %v2335 = vunpack.c.l.b16 %v2228
    %v2336 = vunpack.c.h.b16 %v2228
    %v2337 = vunpack.c.l.b16 %v2229
    %v2338 = vunpack.c.h.b16 %v2229
    %v2339 = vpack.c.b16 %v2277, %v2275
    %v2340 = vpack.c.b16 %v2278, %v2276
    %v2341 = vpack.c.b16 %v2281, %v2279
    %v2342 = vpack.c.b16 %v2282, %v2280
    %v2343 = vpack.c.b16 %v2285, %v2283
    %v2344 = vpack.c.b16 %v2286, %v2284
    %v2345 = vpack.c.b16 %v2289, %v2287
    %v2346 = vpack.c.b16 %v2290, %v2288
    %v2347 = vpack.c.b16 %v2293, %v2291
    %v2348 = vpack.c.b16 %v2294, %v2292
    %v2349 = vpack.c.b16 %v2297, %v2295
    %v2350 = vpack.c.b16 %v2298, %v2296
    %v2351 = vpack.c.b16 %v2301, %v2299
    %v2352 = vpack.c.b16 %v2302, %v2300
    %v2353 = vpack.c.b16 %v2305, %v2303
    %v2354 = vpack.c.b16 %v2306, %v2304
    %v2355 = vpack.c.b16 %v2309, %v2307
    %v2356 = vpack.c.b16 %v2310, %v2308
    %v2357 = vpack.c.b16 %v2313, %v2311
    %v2358 = vpack.c.b16 %v2314, %v2312
    %v2359 = vpack.c.b16 %v2317, %v2315
    %v2360 = vpack.c.b16 %v2318, %v2316
    %v2361 = vpack.c.b16 %v2321, %v2319
    %v2362 = vpack.c.b16 %v2322, %v2320
    %v2363 = vpack.c.b16 %v2325, %v2323
    %v2364 = vpack.c.b16 %v2326, %v2324
    %v2365 = vpack.c.b16 %v2329, %v2327
    %v2366 = vpack.c.b16 %v2330, %v2328
    %v2367 = vpack.c.b16 %v2333, %v2331
    %v2368 = vpack.c.b16 %v2334, %v2332
    %v2369 = vpack.c.b16 %v2337, %v2335
    %v2370 = vpack.c.b16 %v2338, %v2336
    %2403 = vmatprep.subr.bf16.mxu0 %v2340
    %2404 = vmatpush1.bf16.msra.mxu0 %v2339
    %2405 = vmatprep.subr.bf16.mxu0 %v2342
    %2406 = vmatpush1.bf16.msra.mxu0 %v2341
    %2407 = vmatprep.subr.bf16.mxu0 %v2344
    %2408 = vmatpush1.bf16.msra.mxu0 %v2343
    %2409 = vmatprep.subr.bf16.mxu0 %v2346
    %2410 = vmatpush1.bf16.msra.mxu0 %v2345
    %2411 = vmatprep.subr.bf16.mxu0 %v2348
    %2412 = vmatpush1.bf16.msra.mxu0 %v2347
    %2413 = vmatprep.subr.bf16.mxu0 %v2350
    %2414 = vmatpush1.bf16.msra.mxu0 %v2349
    %2415 = vmatprep.subr.bf16.mxu0 %v2352
    %2416 = vmatpush1.bf16.msra.mxu0 %v2351
    %2417 = vmatprep.subr.bf16.mxu0 %v2354
    %2418 = vmatpush1.bf16.msra.mxu0 %v2353
    %2419 = vmatprep.subr.bf16.mxu0 %v2356
    %2420 = vmatpush1.bf16.msra.mxu0 %v2355
    %2421 = vmatprep.subr.bf16.mxu0 %v2358
    %2422 = vmatpush1.bf16.msra.mxu0 %v2357
    %2423 = vmatprep.subr.bf16.mxu0 %v2360
    %2424 = vmatpush1.bf16.msra.mxu0 %v2359
    %2425 = vmatprep.subr.bf16.mxu0 %v2362
    %2426 = vmatpush1.bf16.msra.mxu0 %v2361
    %2427 = vmatprep.subr.bf16.mxu0 %v2364
    %2428 = vmatpush1.bf16.msra.mxu0 %v2363
    %2429 = vmatprep.subr.bf16.mxu0 %v2366
    %2430 = vmatpush1.bf16.msra.mxu0 %v2365
    %2431 = vmatprep.subr.bf16.mxu0 %v2368
    %2432 = vmatpush1.bf16.msra.mxu0 %v2367
    %2433 = vmatprep.subr.bf16.mxu0 %v2370
    %2434 = vmatpush1.bf16.msra.mxu0 %v2369
    %2435 = vmatprep.mubr.bf16.mxu0 %v2196
    %2436 = vmatmul.mubr.bf16.gmra.mrb[0].mxu0 %v2195
    %v2437 = vpop.f32.mrb[0].mxu0
    %v2438 = vadd.f32 %v2236, %v2437
    %v2439 = vpop.f32.mrb[0].mxu0
    %v2440 = vadd.f32 %v2240, %v2439
    %v2441 = vpop.f32.mrb[0].mxu0
    %v2442 = vpop.f32.mrb[0].mxu0
    %2443 = vdwg.mxu0
    %v2444 = vmax.f32 %v2438, 0.0
    %v2445 = vmax.f32 %v2440, 0.0
    %v2446 = vpack.c.bf16 %v2444, %v2444
    %v2447 = vpack.c.bf16 %v2445, %v2445
    %s2448 = scalar_lea.vmem [#allocation7], 1024
    %v2449 = vld [vmem:[%s2448] sm:$0xff]
    %v2450 = vld [vmem:[%s2448 + $0x8] sm:$0xff]
    %v2451 = vld [vmem:[%s2448 + $0x10] sm:$0xff]
    %v2452 = vld [vmem:[%s2448 + $0x18] sm:$0xff]
    %v2453 = vld [vmem:[%s2448 + $0x20] sm:$0xff]
    %v2454 = vld [vmem:[%s2448 + $0x28] sm:$0xff]
    %v2455 = vld [vmem:[%s2448 + $0x30] sm:$0xff]
    %v2456 = vld [vmem:[%s2448 + $0x38] sm:$0xff]
    %v2457 = vld [vmem:[%s2448 + $0x40] sm:$0xff]
    %v2458 = vld [vmem:[%s2448 + $0x48] sm:$0xff]
    %v2459 = vld [vmem:[%s2448 + $0x50] sm:$0xff]
    %v2460 = vld [vmem:[%s2448 + $0x58] sm:$0xff]
    %v2461 = vld [vmem:[%s2448 + $0x60] sm:$0xff]
    %v2462 = vld [vmem:[%s2448 + $0x68] sm:$0xff]
    %v2463 = vld [vmem:[%s2448 + $0x70] sm:$0xff]
    %v2464 = vld [vmem:[%s2448 + $0x78] sm:$0xff]
    %v2465 = vld [vmem:[%s2448 + $0x80] sm:$0xff]
    %v2466 = vld [vmem:[%s2448 + $0x88] sm:$0xff]
    %v2467 = vld [vmem:[%s2448 + $0x90] sm:$0xff]
    %v2468 = vld [vmem:[%s2448 + $0x98] sm:$0xff]
    %v2469 = vld [vmem:[%s2448 + $0xa0] sm:$0xff]
    %v2470 = vld [vmem:[%s2448 + $0xa8] sm:$0xff]
    %v2471 = vld [vmem:[%s2448 + $0xb0] sm:$0xff]
    %v2472 = vld [vmem:[%s2448 + $0xb8] sm:$0xff]
    %v2473 = vld [vmem:[%s2448 + $0xc0] sm:$0xff]
    %v2474 = vld [vmem:[%s2448 + $0xc8] sm:$0xff]
    %v2475 = vld [vmem:[%s2448 + $0xd0] sm:$0xff]
    %v2476 = vld [vmem:[%s2448 + $0xd8] sm:$0xff]
    %v2477 = vld [vmem:[%s2448 + $0xe0] sm:$0xff]
    %v2478 = vld [vmem:[%s2448 + $0xe8] sm:$0xff]
    %v2479 = vld [vmem:[%s2448 + $0xf0] sm:$0xff]
    %v2480 = vld [vmem:[%s2448 + $0xf8] sm:$0xff]
    %s2481 = scalar_lea.vmem %s6, 8
    %v2482 = vld [vmem:[%s2481] sm:$0x3]
    %v2484 = vlaneseq
    %v2485 = vshrl.u32 %v2484, 7
    %v2486 = vsub.s32 0, %v2485
    %v2487 = vrot.slane %v2482, %v2486
    %v2488 = vlaneseq
    %v2489 = vshrl.u32 %v2488, 7
    %v2490 = vsub.s32 1, %v2489
    %v2491 = vrot.slane %v2482, %v2490
    %v2526 = vunpack.c.l.b16 %v2449
    %v2527 = vunpack.c.h.b16 %v2449
    %v2528 = vunpack.c.l.b16 %v2450
    %v2529 = vunpack.c.h.b16 %v2450
    %v2530 = vunpack.c.l.b16 %v2451
    %v2531 = vunpack.c.h.b16 %v2451
    %v2532 = vunpack.c.l.b16 %v2452
    %v2533 = vunpack.c.h.b16 %v2452
    %v2534 = vunpack.c.l.b16 %v2453
    %v2535 = vunpack.c.h.b16 %v2453
    %v2536 = vunpack.c.l.b16 %v2454
    %v2537 = vunpack.c.h.b16 %v2454
    %v2538 = vunpack.c.l.b16 %v2455
    %v2539 = vunpack.c.h.b16 %v2455
    %v2540 = vunpack.c.l.b16 %v2456
    %v2541 = vunpack.c.h.b16 %v2456
    %v2542 = vunpack.c.l.b16 %v2457
    %v2543 = vunpack.c.h.b16 %v2457
    %v2544 = vunpack.c.l.b16 %v2458
    %v2545 = vunpack.c.h.b16 %v2458
    %v2546 = vunpack.c.l.b16 %v2459
    %v2547 = vunpack.c.h.b16 %v2459
    %v2548 = vunpack.c.l.b16 %v2460
    %v2549 = vunpack.c.h.b16 %v2460
    %v2550 = vunpack.c.l.b16 %v2461
    %v2551 = vunpack.c.h.b16 %v2461
    %v2552 = vunpack.c.l.b16 %v2462
    %v2553 = vunpack.c.h.b16 %v2462
    %v2554 = vunpack.c.l.b16 %v2463
    %v2555 = vunpack.c.h.b16 %v2463
    %v2556 = vunpack.c.l.b16 %v2464
    %v2557 = vunpack.c.h.b16 %v2464
    %v2558 = vunpack.c.l.b16 %v2465
    %v2559 = vunpack.c.h.b16 %v2465
    %v2560 = vunpack.c.l.b16 %v2466
    %v2561 = vunpack.c.h.b16 %v2466
    %v2562 = vunpack.c.l.b16 %v2467
    %v2563 = vunpack.c.h.b16 %v2467
    %v2564 = vunpack.c.l.b16 %v2468
    %v2565 = vunpack.c.h.b16 %v2468
    %v2566 = vunpack.c.l.b16 %v2469
    %v2567 = vunpack.c.h.b16 %v2469
    %v2568 = vunpack.c.l.b16 %v2470
    %v2569 = vunpack.c.h.b16 %v2470
    %v2570 = vunpack.c.l.b16 %v2471
    %v2571 = vunpack.c.h.b16 %v2471
    %v2572 = vunpack.c.l.b16 %v2472
    %v2573 = vunpack.c.h.b16 %v2472
    %v2574 = vunpack.c.l.b16 %v2473
    %v2575 = vunpack.c.h.b16 %v2473
    %v2576 = vunpack.c.l.b16 %v2474
    %v2577 = vunpack.c.h.b16 %v2474
    %v2578 = vunpack.c.l.b16 %v2475
    %v2579 = vunpack.c.h.b16 %v2475
    %v2580 = vunpack.c.l.b16 %v2476
    %v2581 = vunpack.c.h.b16 %v2476
    %v2582 = vunpack.c.l.b16 %v2477
    %v2583 = vunpack.c.h.b16 %v2477
    %v2584 = vunpack.c.l.b16 %v2478
    %v2585 = vunpack.c.h.b16 %v2478
    %v2586 = vunpack.c.l.b16 %v2479
    %v2587 = vunpack.c.h.b16 %v2479
    %v2588 = vunpack.c.l.b16 %v2480
    %v2589 = vunpack.c.h.b16 %v2480
    %v2590 = vpack.c.b16 %v2528, %v2526
    %v2591 = vpack.c.b16 %v2529, %v2527
    %v2592 = vpack.c.b16 %v2532, %v2530
    %v2593 = vpack.c.b16 %v2533, %v2531
    %v2594 = vpack.c.b16 %v2536, %v2534
    %v2595 = vpack.c.b16 %v2537, %v2535
    %v2596 = vpack.c.b16 %v2540, %v2538
    %v2597 = vpack.c.b16 %v2541, %v2539
    %v2598 = vpack.c.b16 %v2544, %v2542
    %v2599 = vpack.c.b16 %v2545, %v2543
    %v2600 = vpack.c.b16 %v2548, %v2546
    %v2601 = vpack.c.b16 %v2549, %v2547
    %v2602 = vpack.c.b16 %v2552, %v2550
    %v2603 = vpack.c.b16 %v2553, %v2551
    %v2604 = vpack.c.b16 %v2556, %v2554
    %v2605 = vpack.c.b16 %v2557, %v2555
    %v2606 = vpack.c.b16 %v2560, %v2558
    %v2607 = vpack.c.b16 %v2561, %v2559
    %v2608 = vpack.c.b16 %v2564, %v2562
    %v2609 = vpack.c.b16 %v2565, %v2563
    %v2610 = vpack.c.b16 %v2568, %v2566
    %v2611 = vpack.c.b16 %v2569, %v2567
    %v2612 = vpack.c.b16 %v2572, %v2570
    %v2613 = vpack.c.b16 %v2573, %v2571
    %v2614 = vpack.c.b16 %v2576, %v2574
    %v2615 = vpack.c.b16 %v2577, %v2575
    %v2616 = vpack.c.b16 %v2580, %v2578
    %v2617 = vpack.c.b16 %v2581, %v2579
    %v2618 = vpack.c.b16 %v2584, %v2582
    %v2619 = vpack.c.b16 %v2585, %v2583
    %v2620 = vpack.c.b16 %v2588, %v2586
    %v2621 = vpack.c.b16 %v2589, %v2587
    %2654 = vmatprep.subr.bf16.mxu0 %v2591
    %2655 = vmatpush1.bf16.msra.mxu0 %v2590
    %2656 = vmatprep.subr.bf16.mxu0 %v2593
    %2657 = vmatpush1.bf16.msra.mxu0 %v2592
    %2658 = vmatprep.subr.bf16.mxu0 %v2595
    %2659 = vmatpush1.bf16.msra.mxu0 %v2594
    %2660 = vmatprep.subr.bf16.mxu0 %v2597
    %2661 = vmatpush1.bf16.msra.mxu0 %v2596
    %2662 = vmatprep.subr.bf16.mxu0 %v2599
    %2663 = vmatpush1.bf16.msra.mxu0 %v2598
    %2664 = vmatprep.subr.bf16.mxu0 %v2601
    %2665 = vmatpush1.bf16.msra.mxu0 %v2600
    %2666 = vmatprep.subr.bf16.mxu0 %v2603
    %2667 = vmatpush1.bf16.msra.mxu0 %v2602
    %2668 = vmatprep.subr.bf16.mxu0 %v2605
    %2669 = vmatpush1.bf16.msra.mxu0 %v2604
    %2670 = vmatprep.subr.bf16.mxu0 %v2607
    %2671 = vmatpush1.bf16.msra.mxu0 %v2606
    %2672 = vmatprep.subr.bf16.mxu0 %v2609
    %2673 = vmatpush1.bf16.msra.mxu0 %v2608
    %2674 = vmatprep.subr.bf16.mxu0 %v2611
    %2675 = vmatpush1.bf16.msra.mxu0 %v2610
    %2676 = vmatprep.subr.bf16.mxu0 %v2613
    %2677 = vmatpush1.bf16.msra.mxu0 %v2612
    %2678 = vmatprep.subr.bf16.mxu0 %v2615
    %2679 = vmatpush1.bf16.msra.mxu0 %v2614
    %2680 = vmatprep.subr.bf16.mxu0 %v2617
    %2681 = vmatpush1.bf16.msra.mxu0 %v2616
    %2682 = vmatprep.subr.bf16.mxu0 %v2619
    %2683 = vmatpush1.bf16.msra.mxu0 %v2618
    %2684 = vmatprep.subr.bf16.mxu0 %v2621
    %2685 = vmatpush1.bf16.msra.mxu0 %v2620
    %2686 = vmatprep.mubr.bf16.mxu0 %v2447
    %2687 = vmatmul.mubr.bf16.gmra.mrb[0].mxu0 %v2446
    %v2688 = vpop.f32.mrb[0].mxu0
    %v2689 = vadd.f32 %v2487, %v2688
    %v2690 = vpop.f32.mrb[0].mxu0
    %v2691 = vadd.f32 %v2491, %v2690
    %v2692 = vpop.f32.mrb[0].mxu0
    %v2693 = vpop.f32.mrb[0].mxu0
    %2694 = vdwg.mxu0
    %v2695 = vadd.f32 %v2689, %v2193
    %v2696 = vadd.f32 %v2691, %v2194
    %v2697 = vmax.f32 %v2695, 0.0
    %v2698 = vmax.f32 %v2696, 0.0
    %v2699 = vpack.c.bf16 %v2697, %v2697
    %v2700 = vpack.c.bf16 %v2698, %v2698
    %v2701 = vld [vmem:[#allocation8] sm:$0xf]
    %v2702 = vld [vmem:[#allocation8 + $0x4] sm:$0xf]
    %v2703 = vld [vmem:[#allocation8 + $0x8] sm:$0xf]
    %v2704 = vld [vmem:[#allocation8 + $0xc] sm:$0xf]
    %v2705 = vld [vmem:[#allocation8 + $0x10] sm:$0xf]
    %v2706 = vld [vmem:[#allocation8 + $0x14] sm:$0xf]
    %v2707 = vld [vmem:[#allocation8 + $0x18] sm:$0xf]
    %v2708 = vld [vmem:[#allocation8 + $0x1c] sm:$0xf]
    %v2709 = vld [vmem:[#allocation8 + $0x20] sm:$0xf]
    %v2710 = vld [vmem:[#allocation8 + $0x24] sm:$0xf]
    %v2711 = vld [vmem:[#allocation8 + $0x28] sm:$0xf]
    %v2712 = vld [vmem:[#allocation8 + $0x2c] sm:$0xf]
    %v2713 = vld [vmem:[#allocation8 + $0x30] sm:$0xf]
    %v2714 = vld [vmem:[#allocation8 + $0x34] sm:$0xf]
    %v2715 = vld [vmem:[#allocation8 + $0x38] sm:$0xf]
    %v2716 = vld [vmem:[#allocation8 + $0x3c] sm:$0xf]
    %v2717 = vld [vmem:[#allocation8 + $0x40] sm:$0xf]
    %v2718 = vld [vmem:[#allocation8 + $0x44] sm:$0xf]
    %v2719 = vld [vmem:[#allocation8 + $0x48] sm:$0xf]
    %v2720 = vld [vmem:[#allocation8 + $0x4c] sm:$0xf]
    %v2721 = vld [vmem:[#allocation8 + $0x50] sm:$0xf]
    %v2722 = vld [vmem:[#allocation8 + $0x54] sm:$0xf]
    %v2723 = vld [vmem:[#allocation8 + $0x58] sm:$0xf]
    %v2724 = vld [vmem:[#allocation8 + $0x5c] sm:$0xf]
    %v2725 = vld [vmem:[#allocation8 + $0x60] sm:$0xf]
    %v2726 = vld [vmem:[#allocation8 + $0x64] sm:$0xf]
    %v2727 = vld [vmem:[#allocation8 + $0x68] sm:$0xf]
    %v2728 = vld [vmem:[#allocation8 + $0x6c] sm:$0xf]
    %v2729 = vld [vmem:[#allocation8 + $0x70] sm:$0xf]
    %v2730 = vld [vmem:[#allocation8 + $0x74] sm:$0xf]
    %v2731 = vld [vmem:[#allocation8 + $0x78] sm:$0xf]
    %v2732 = vld [vmem:[#allocation8 + $0x7c] sm:$0xf]
    %v2733 = vld [vmem:[%s8] sm:$0x1]
    %v2735 = vlaneseq
    %v2736 = vshrl.u32 %v2735, 7
    %v2737 = vsub.s32 0, %v2736
    %v2738 = vrot.slane %v2733, %v2737
    %v2772 = vunpack.c.l.b16 %v2701
    %v2773 = vunpack.c.l.b16 %v2702
    %v2774 = vunpack.c.l.b16 %v2703
    %v2775 = vunpack.c.l.b16 %v2704
    %v2776 = vunpack.c.l.b16 %v2705
    %v2777 = vunpack.c.l.b16 %v2706
    %v2778 = vunpack.c.l.b16 %v2707
    %v2779 = vunpack.c.l.b16 %v2708
    %v2780 = vunpack.c.l.b16 %v2709
    %v2781 = vunpack.c.l.b16 %v2710
    %v2782 = vunpack.c.l.b16 %v2711
    %v2783 = vunpack.c.l.b16 %v2712
    %v2784 = vunpack.c.l.b16 %v2713
    %v2785 = vunpack.c.l.b16 %v2714
    %v2786 = vunpack.c.l.b16 %v2715
    %v2787 = vunpack.c.l.b16 %v2716
    %v2788 = vunpack.c.l.b16 %v2717
    %v2789 = vunpack.c.l.b16 %v2718
    %v2790 = vunpack.c.l.b16 %v2719
    %v2791 = vunpack.c.l.b16 %v2720
    %v2792 = vunpack.c.l.b16 %v2721
    %v2793 = vunpack.c.l.b16 %v2722
    %v2794 = vunpack.c.l.b16 %v2723
    %v2795 = vunpack.c.l.b16 %v2724
    %v2796 = vunpack.c.l.b16 %v2725
    %v2797 = vunpack.c.l.b16 %v2726
    %v2798 = vunpack.c.l.b16 %v2727
    %v2799 = vunpack.c.l.b16 %v2728
    %v2800 = vunpack.c.l.b16 %v2729
    %v2801 = vunpack.c.l.b16 %v2730
    %v2802 = vunpack.c.l.b16 %v2731
    %v2803 = vunpack.c.l.b16 %v2732
    %v2804 = vpack.c.b16 %v2773, %v2772
    %v2805 = vpack.c.b16 %v2775, %v2774
    %v2806 = vpack.c.b16 %v2777, %v2776
    %v2807 = vpack.c.b16 %v2779, %v2778
    %v2808 = vpack.c.b16 %v2781, %v2780
    %v2809 = vpack.c.b16 %v2783, %v2782
    %v2810 = vpack.c.b16 %v2785, %v2784
    %v2811 = vpack.c.b16 %v2787, %v2786
    %v2812 = vpack.c.b16 %v2789, %v2788
    %v2813 = vpack.c.b16 %v2791, %v2790
    %v2814 = vpack.c.b16 %v2793, %v2792
    %v2815 = vpack.c.b16 %v2795, %v2794
    %v2816 = vpack.c.b16 %v2797, %v2796
    %v2817 = vpack.c.b16 %v2799, %v2798
    %v2818 = vpack.c.b16 %v2801, %v2800
    %v2819 = vpack.c.b16 %v2803, %v2802
    %2836 = vmatprep.subr.bf16.mxu0 0
    %2837 = vmatpush1.bf16.msra.mxu0 %v2804
    %2838 = vmatprep.subr.bf16.mxu0 0
    %2839 = vmatpush1.bf16.msra.mxu0 %v2805
    %2840 = vmatprep.subr.bf16.mxu0 0
    %2841 = vmatpush1.bf16.msra.mxu0 %v2806
    %2842 = vmatprep.subr.bf16.mxu0 0
    %2843 = vmatpush1.bf16.msra.mxu0 %v2807
    %2844 = vmatprep.subr.bf16.mxu0 0
    %2845 = vmatpush1.bf16.msra.mxu0 %v2808
    %2846 = vmatprep.subr.bf16.mxu0 0
    %2847 = vmatpush1.bf16.msra.mxu0 %v2809
    %2848 = vmatprep.subr.bf16.mxu0 0
    %2849 = vmatpush1.bf16.msra.mxu0 %v2810
    %2850 = vmatprep.subr.bf16.mxu0 0
    %2851 = vmatpush1.bf16.msra.mxu0 %v2811
    %2852 = vmatprep.subr.bf16.mxu0 0
    %2853 = vmatpush1.bf16.msra.mxu0 %v2812
    %2854 = vmatprep.subr.bf16.mxu0 0
    %2855 = vmatpush1.bf16.msra.mxu0 %v2813
    %2856 = vmatprep.subr.bf16.mxu0 0
    %2857 = vmatpush1.bf16.msra.mxu0 %v2814
    %2858 = vmatprep.subr.bf16.mxu0 0
    %2859 = vmatpush1.bf16.msra.mxu0 %v2815
    %2860 = vmatprep.subr.bf16.mxu0 0
    %2861 = vmatpush1.bf16.msra.mxu0 %v2816
    %2862 = vmatprep.subr.bf16.mxu0 0
    %2863 = vmatpush1.bf16.msra.mxu0 %v2817
    %2864 = vmatprep.subr.bf16.mxu0 0
    %2865 = vmatpush1.bf16.msra.mxu0 %v2818
    %2866 = vmatprep.subr.bf16.mxu0 0
    %2867 = vmatpush1.bf16.msra.mxu0 %v2819
    %2868 = vmatprep.mubr.bf16.mxu0 %v2700
    %2869 = vmatmul.mubr.bf16.gmra.mrb[0].mxu0 %v2699
    %v2870 = vpop.f32.mrb[0].mxu0
    %v2871 = vadd.f32 %v2738, %v2870
    %v2872 = vpop.f32.mrb[0].mxu0
    %v2873 = vpop.f32.mrb[0].mxu0
    %v2874 = vpop.f32.mrb[0].mxu0
    %2875 = vdwg.mxu0
    %2876 = vst [vmem:[#allocation10] sm:$0xff] %v2871
    // Predicated region
    $region54: #{tpu_custom_call.1} parent=1 // pred_check
      _
    $region55: #{tpu_custom_call.1} parent=1 // pred_check_branch
      %2878 = sbr.rel (0) target = $region57
    $region56: #{tpu_custom_call.1} parent=1 // pred_region
      %s2880 = ssub.s32 128, 128
      %2881 = vsyncadd [#allocation4], %s2880
      %s2883 = sshll.u32 [#allocation10], 4
      %s2884 = int_to_ptr.vmem [resolvable:$true] %s2883
      %2886 = dma.vmem_to_hbm [thread:$0]  %s2884, 128, %s9, [#allocation4]
    $region57: #{tpu_custom_call.1} parent=1 // pred_fallthru
      _
    // Predicated region
    $region58: #{tpu_custom_call.1} parent=1 // pred_check
      _
    $region59: #{tpu_custom_call.1} parent=1 // pred_check_branch
      %2888 = sbr.rel (0) target = $region61
    $region60: #{tpu_custom_call.1} parent=1 // pred_region
      %2889 = dma.done [#allocation4], 128
    $region61: #{tpu_custom_call.1} parent=1 // pred_fallthru
      _
    %2890 = vsyncpa [#allocation3], 1
    %2891 = vsyncpa [#allocation6], 1
    %2892 = vsyncpa [#allocation9], 1
    %2893 = vsyncpa [#allocation4], 1

</llo_original>
